<compile_context>
chip_gen: v7x
topology: tpu7x:2x2x1
jax: 0.10.0
libtpu: 0.0.40
codegen_flags: <defaults>
</compile_context>

<pallas_src>
import functools

import jax
import jax.numpy as jnp
from jax import lax
from jax.experimental import pallas as pl
from jax.experimental.pallas import tpu as pltpu

K = 5          # Conv1d kernel_size=5, stride=1, padding=2 (SAME)
PAD = K // 2


# -----------------------------------------------------------------------------
# Fused kernel: conv1+relu+pool1 -> conv2+relu+pool2 -> LSTM(last h) -> fc
# -----------------------------------------------------------------------------
def hr_encoder_kernel(cols1_ref, w1_ref, b1_ref, w2_ref, b2_ref,
                      wih_ref, whh_ref, bl_ref, wfc_ref, bfc_ref,
                      o_ref, xproj_scr, *, use_bf16_mxu):
    """
    cols1_ref: (L, bt, K*Cin)   time-major conv1 im2col (built in the wrapper)
    w1_ref   : (K*Cin, C)       conv1 weight, row = k*Cin + ci
    b1_ref   : (1, C)
    w2_ref   : (K*C, C)         conv2 weight, row = k*C + cin
    b2_ref   : (1, C)
    wih_ref  : (C, 4H)          LSTM W_ih^T, gates packed (i, f, o, g)
    whh_ref  : (H, 4H)          LSTM W_hh^T, same packing
    bl_ref   : (1, 4H)          bias_ih + bias_hh, same packing
    wfc_ref  : (H, F)           fc weight^T
    bfc_ref  : (1, F)
    o_ref    : (bt, F)
    xproj_scr: (T, bt, 4H)      precomputed LSTM input projection (VMEM scratch)
    """
    L, bt, KCin = cols1_ref.shape
    C = w1_ref.shape[1]
    H = whh_ref.shape[0]
    T = xproj_scr.shape[0]
    L1 = L // 2                       # length after pool1 (floor, like MaxPool1d)
    f32 = jnp.float32
    mxu = jnp.bfloat16 if use_bf16_mxu else jnp.float32

    # ---- stage 1: Conv1d(Cin->C, k=5, SAME) as ONE MXU matmul + bias + ReLU ----
    c1 = cols1_ref[...].reshape(L * bt, KCin).astype(mxu)
    y1 = jnp.dot(c1, w1_ref[...].astype(mxu), preferred_element_type=f32)
    y1 = jnp.maximum(y1 + b1_ref[...], 0.0)                       # (L*bt, C)

    # MaxPool1d(2,2) over the leading time axis (major-dim slices, no rotates).
    y1 = y1.reshape(L, bt, C)[:2 * L1].reshape(L1, 2, bt, C)
    p1 = jnp.maximum(y1[:, 0], y1[:, 1])                          # (L1, bt, C)

    # ---- stage 2: Conv1d(C->C, k=5, SAME): in-register im2col + one MXU matmul -
    # Only the 2*PAD boundary rows are zero-materialized; taps are major-dim slices.
    zrow = jnp.zeros((PAD, bt, C), f32)
    p1p = jnp.concatenate([zrow, p1, zrow], axis=0)               # (L1+2*PAD, bt, C)
    cols2 = jnp.concatenate([p1p[k:k + L1] for k in range(K)], axis=-1)  # (L1, bt, K*C)
    y2 = jnp.dot(cols2.reshape(L1 * bt, K * C).astype(mxu),
                 w2_ref[...].astype(mxu), preferred_element_type=f32)
    y2 = jnp.maximum(y2 + b2_ref[...], 0.0)                       # (L1*bt, C)

    y2 = y2.reshape(L1, bt, C)[:2 * T].reshape(T, 2, bt, C)       # floors odd L1
    p2 = jnp.maximum(y2[:, 0], y2[:, 1])                          # (T, bt, C)

    # ---- stage 3: LSTM (batch_first, last hidden state) + Linear ---------------
    # Input projection (+ summed bias) for ALL timesteps in one matmul, off the
    # recurrent critical path.  Gates lane-packed (i, f, o | g) -> 4H = 256 lanes.
    xproj = jnp.dot(p2.reshape(T * bt, C).astype(mxu),
                    wih_ref[...].astype(mxu), preferred_element_type=f32)
    xproj_scr[...] = (xproj + bl_ref[...]).reshape(T, bt, 4 * H)

    whh = whh_ref[...].astype(mxu)    # hoisted: loaded & cast once for all steps

    def step(t, carry):
        h, c = carry
        gates = xproj_scr[t] + jnp.dot(h.astype(mxu), whh,
                                       preferred_element_type=f32)   # (bt, 4H)
        sig = jax.nn.sigmoid(gates)           # full 4H slab on the EUP (free slack)
        tnh = jnp.tanh(gates[:, 2 * H:])      # last 128-lane-aligned vreg
        i_g = sig[:, :H]
        f_g = sig[:, H:2 * H]
        o_g = sig[:, 2 * H:3 * H]
        g_g = tnh[:, H:]
        c = f_g * c + i_g * g_g
        h = o_g * jnp.tanh(c)
        return h, c

    h, _ = lax.fori_loop(0, T, step,
                         (jnp.zeros((bt, H), f32), jnp.zeros((bt, H), f32)),
                         unroll=True)

    o_ref[...] = (jnp.dot(h.astype(mxu), wfc_ref[...].astype(mxu),
                          preferred_element_type=f32)
                  + bfc_ref[...]).astype(o_ref.dtype)


# -----------------------------------------------------------------------------
# Wrapper
# -----------------------------------------------------------------------------
def _full_block(arr):
    # Whole array as one block (same block index every grid step -> stays resident).
    return pl.BlockSpec(arr.shape, lambda b: (0,) * arr.ndim)


def hr_encoder_forward(x, p, *, use_bf16_mxu=True, batch_tile=None):
    B, L, Cin = x.shape
    C = p["conv1_b"].shape[1]
    H = p["whh"].shape[0]
    F = p["fc_w"].shape[1]
    L1 = L // 2
    T = L1 // 2
    # Batch tile: for large B pick a multiple of 8 (>=128 rows ideally) so MXU LHS
    # tiles are full-height; default = whole batch at these tiny test shapes.
    bt = B if batch_tile is None else batch_tile
    assert B % bt == 0, (B, bt)

    # Wrapper-side im2col for conv1 (pure layout plumbing, ~B*L*K*Cin floats):
    # time-major (L, B, K*Cin), column index = k*Cin + ci.
    xt = jnp.transpose(x, (1, 0, 2))                              # (L, B, Cin)
    xp = jnp.pad(xt, ((PAD, PAD), (0, 0), (0, 0)))
    cols1 = jnp.concatenate([xp[k:k + L] for k in range(K)], axis=-1)

    kernel = functools.partial(hr_encoder_kernel, use_bf16_mxu=use_bf16_mxu)
    return pl.pallas_call(
        kernel,
        out_shape=jax.ShapeDtypeStruct((B, F), jnp.float32),
        grid=(B // bt,),
        in_specs=[
            pl.BlockSpec((L, bt, K * Cin), lambda b: (0, b, 0)),
            _full_block(p["conv1_w"]), _full_block(p["conv1_b"]),
            _full_block(p["conv2_w"]), _full_block(p["conv2_b"]),
            _full_block(p["wih"]), _full_block(p["whh"]), _full_block(p["b"]),
            _full_block(p["fc_w"]), _full_block(p["fc_b"]),
        ],
        out_specs=pl.BlockSpec((bt, F), lambda b: (b, 0)),
        scratch_shapes=[pltpu.VMEM((T, bt, 4 * H), jnp.float32)],
        compiler_params=pltpu.CompilerParams(
            dimension_semantics=("parallel",)),   # shards batch across TCs on v7x
    )(cols1, p["conv1_w"], p["conv1_b"], p["conv2_w"], p["conv2_b"],
      p["wih"], p["whh"], p["b"], p["fc_w"], p["fc_b"])


# -----------------------------------------------------------------------------
# Parameters (stored directly in the kernel's packed layouts)
# -----------------------------------------------------------------------------
def init_params(key, input_dim=2, cnn_channels=64, lstm_hidden=64, fc_out=64):
    ks = jax.random.split(key, 9)
    s = 0.1
    f32 = jnp.float32
    C, H = cnn_channels, lstm_hidden
    return {
        # conv weights flat in im2col row order: row = k*Cin + ci / k*C + cin
        "conv1_w": s * jax.random.normal(ks[0], (K * input_dim, C), f32),
        "conv1_b": s * jax.random.normal(ks[1], (1, C), f32),
        "conv2_w": s * jax.random.normal(ks[2], (K * C, C), f32),
        "conv2_b": s * jax.random.normal(ks[3], (1, C), f32),
        # LSTM gates packed (i, f, o, g).  NOTE: PyTorch packs (i, f, g, o) --
        # permute the gate blocks of wih/whh/b when importing real nn.LSTM weights.
        "wih":  s * jax.random.normal(ks[4], (C, 4 * H), f32),
        "whh":  s * jax.random.normal(ks[5], (H, 4 * H), f32),
        "b":    s * jax.random.normal(ks[6], (1, 4 * H), f32),
        "fc_w": s * jax.random.normal(ks[7], (H, fc_out), f32),
        "fc_b": s * jax.random.normal(ks[8], (1, fc_out), f32),
    }


# -----------------------------------------------------------------------------
# Pure-JAX reference (independent path: lax.conv + explicit LSTM)
# -----------------------------------------------------------------------------
def reference_forward(x, p):
    def pool(y):
        b, l, c = y.shape
        lp = l // 2
        return jnp.max(y[:, :2 * lp, :].reshape(b, lp, 2, c), axis=2)

    Cin = x.shape[2]
    C = p["conv1_b"].shape[1]
    H = p["whh"].shape[0]
    w1 = p["conv1_w"].reshape(K, Cin, C)                 # WIO
    w2 = p["conv2_w"].reshape(K, C, C)                   # WIO
    y = lax.conv_general_dilated(x, w1, (1,), "SAME",
                                 dimension_numbers=("NWC", "WIO", "NWC"))
    y = pool(jax.nn.relu(y + p["conv1_b"]))
    y = lax.conv_general_dilated(y, w2, (1,), "SAME",
                                 dimension_numbers=("NWC", "WIO", "NWC"))
    y = pool(jax.nn.relu(y + p["conv2_b"]))

    B, T, _ = y.shape
    h = jnp.zeros((B, H), jnp.float32)
    c = jnp.zeros((B, H), jnp.float32)
    for t in range(T):
        g = y[:, t, :] @ p["wih"] + h @ p["whh"] + p["b"]
        i_g = jax.nn.sigmoid(g[:, :H])
        f_g = jax.nn.sigmoid(g[:, H:2 * H])
        o_g = jax.nn.sigmoid(g[:, 2 * H:3 * H])
        g_g = jnp.tanh(g[:, 3 * H:])
        c = f_g * c + i_g * g_g
        h = o_g * jnp.tanh(c)
    return h @ p["fc_w"] + p["fc_b"]


if __name__ == "__main__":
    key = jax.random.PRNGKey(0)
    kx, kp = jax.random.split(key)

    B, L, D = 2, 50, 2      # HR window from the module docstring: (B, 50, 2)
    x = jax.random.normal(kx, (B, L, D), jnp.float32)
    params = init_params(kp)

    # Optimized path (bf16 MXU operands, f32 accumulation).
    fwd = jax.jit(lambda xx, pp: hr_encoder_forward(xx, pp, use_bf16_mxu=True))
    out = jax.block_until_ready(fwd(x, params))
    assert out.shape == (B, 64), out.shape

    ref = reference_forward(x, params)

    # Tolerance deliberately loosened for bf16 MXU operands (f32 accumulate).
    err = float(jnp.max(jnp.abs(out - ref)))
    if not err < 3e-2:
        raise AssertionError(f"bf16-MXU path mismatch vs reference: max abs err = {err}")

    # Exact-f32 MXU path: verifies wiring / semantics at a tight tolerance.
    fwd32 = jax.jit(lambda xx, pp: hr_encoder_forward(xx, pp, use_bf16_mxu=False))
    out32 = jax.block_until_ready(fwd32(x, params))
    err32 = float(jnp.max(jnp.abs(out32 - ref)))
    if not err32 < 1e-3:
        raise AssertionError(f"f32 path mismatch vs reference: max abs err = {err32}")

    print("KERNEL_OK")
</pallas_src>

<mosaic_0001>
module attributes {stable_mosaic.version = 11 : i64} {
  func.func @hr_encoder_kernel(%arg0: i32, %arg1: memref<50x2x10xf32, #tpu.memory_space<vmem>>, %arg2: memref<10x64xf32, #tpu.memory_space<vmem>>, %arg3: memref<1x64xf32, #tpu.memory_space<vmem>>, %arg4: memref<320x64xf32, #tpu.memory_space<vmem>>, %arg5: memref<1x64xf32, #tpu.memory_space<vmem>>, %arg6: memref<64x256xf32, #tpu.memory_space<vmem>>, %arg7: memref<64x256xf32, #tpu.memory_space<vmem>>, %arg8: memref<1x256xf32, #tpu.memory_space<vmem>>, %arg9: memref<64x64xf32, #tpu.memory_space<vmem>>, %arg10: memref<1x64xf32, #tpu.memory_space<vmem>>, %arg11: memref<2x64xf32, #tpu.memory_space<vmem>>, %arg12: memref<12x2x256xf32, #tpu.memory_space<vmem>>) attributes {dimension_semantics = [#tpu.dimension_semantics<parallel>], iteration_bounds = array<i64: 1>, scalar_prefetch = 0 : i64, scratch_operands = 1 : i64, tpu.core_type = #tpu.core_type<tc>, window_params = [{transform_indices = @transform_0, window_bounds = array<i64: 50, 2, 10>}, {pipeline_mode = #tpu.pipeline_mode<synchronous>, transform_indices = @transform_1, window_bounds = array<i64: 10, 64>}, {pipeline_mode = #tpu.pipeline_mode<synchronous>, transform_indices = @transform_2, window_bounds = array<i64: 1, 64>}, {pipeline_mode = #tpu.pipeline_mode<synchronous>, transform_indices = @transform_3, window_bounds = array<i64: 320, 64>}, {pipeline_mode = #tpu.pipeline_mode<synchronous>, transform_indices = @transform_4, window_bounds = array<i64: 1, 64>}, {pipeline_mode = #tpu.pipeline_mode<synchronous>, transform_indices = @transform_5, window_bounds = array<i64: 64, 256>}, {pipeline_mode = #tpu.pipeline_mode<synchronous>, transform_indices = @transform_6, window_bounds = array<i64: 64, 256>}, {pipeline_mode = #tpu.pipeline_mode<synchronous>, transform_indices = @transform_7, window_bounds = array<i64: 1, 256>}, {pipeline_mode = #tpu.pipeline_mode<synchronous>, transform_indices = @transform_8, window_bounds = array<i64: 64, 64>}, {pipeline_mode = #tpu.pipeline_mode<synchronous>, transform_indices = @transform_9, window_bounds = array<i64: 1, 64>}, {transform_indices = @transform_10, window_bounds = array<i64: 2, 64>}]} {
    %c0 = arith.constant 0 : index
    %c0_0 = arith.constant 0 : index
    %c0_1 = arith.constant 0 : index
    %0 = vector.load %arg1[%c0, %c0_0, %c0_1] : memref<50x2x10xf32, #tpu.memory_space<vmem>>, vector<50x2x10xf32>
    %1 = vector.shape_cast %0 : vector<50x2x10xf32> to vector<100x10xf32>
    %2 = arith.truncf %1 : vector<100x10xf32> to vector<100x10xbf16>
    %c0_2 = arith.constant 0 : index
    %c0_3 = arith.constant 0 : index
    %3 = vector.load %arg2[%c0_2, %c0_3] : memref<10x64xf32, #tpu.memory_space<vmem>>, vector<10x64xf32>
    %4 = arith.truncf %3 : vector<10x64xf32> to vector<10x64xbf16>
    %cst = arith.constant dense<0.000000e+00> : vector<100x64xf32>
    %5 = tpu.matmul %2, %4, %cst {dimension_numbers = #tpu.dot_dimension_numbers<[1], [0], [0], [1], [0, 0, 1, 1], [], []>} : vector<100x10xbf16>, vector<10x64xbf16>, vector<100x64xf32> -> vector<100x64xf32>
    %c0_4 = arith.constant 0 : index
    %c0_5 = arith.constant 0 : index
    %6 = vector.load %arg3[%c0_4, %c0_5] : memref<1x64xf32, #tpu.memory_space<vmem>>, vector<1x64xf32>
    %7 = vector.broadcast %6 : vector<1x64xf32> to vector<100x64xf32>
    %8 = arith.addf %5, %7 : vector<100x64xf32>
    %cst_6 = arith.constant 0.000000e+00 : f32
    %9 = vector.broadcast %cst_6 : f32 to vector<100x64xf32>
    %10 = arith.maximumf %8, %9 : vector<100x64xf32>
    %11 = vector.shape_cast %10 : vector<100x64xf32> to vector<50x2x64xf32>
    %12 = vector.shape_cast %11 : vector<50x2x64xf32> to vector<25x2x2x64xf32>
    %13 = vector.extract_strided_slice %12 {offsets = [0, 0, 0, 0], sizes = [25, 1, 2, 64], strides = [1, 1, 1, 1]} : vector<25x2x2x64xf32> to vector<25x1x2x64xf32>
    %14 = vector.shape_cast %13 : vector<25x1x2x64xf32> to vector<25x2x64xf32>
    %15 = vector.extract_strided_slice %12 {offsets = [0, 1, 0, 0], sizes = [25, 1, 2, 64], strides = [1, 1, 1, 1]} : vector<25x2x2x64xf32> to vector<25x1x2x64xf32>
    %16 = vector.shape_cast %15 : vector<25x1x2x64xf32> to vector<25x2x64xf32>
    %17 = arith.maximumf %14, %16 : vector<25x2x64xf32>
    %cst_7 = arith.constant 0.000000e+00 : f32
    %18 = vector.broadcast %cst_7 : f32 to vector<2x2x64xf32>
    %19 = tpu.concatenate %18, %17, %18 in 0 : vector<2x2x64xf32>, vector<25x2x64xf32>, vector<2x2x64xf32> -> vector<29x2x64xf32>
    %20 = vector.extract_strided_slice %19 {offsets = [0, 0, 0], sizes = [25, 2, 64], strides = [1, 1, 1]} : vector<29x2x64xf32> to vector<25x2x64xf32>
    %21 = vector.extract_strided_slice %19 {offsets = [1, 0, 0], sizes = [25, 2, 64], strides = [1, 1, 1]} : vector<29x2x64xf32> to vector<25x2x64xf32>
    %22 = vector.extract_strided_slice %19 {offsets = [2, 0, 0], sizes = [25, 2, 64], strides = [1, 1, 1]} : vector<29x2x64xf32> to vector<25x2x64xf32>
    %23 = vector.extract_strided_slice %19 {offsets = [3, 0, 0], sizes = [25, 2, 64], strides = [1, 1, 1]} : vector<29x2x64xf32> to vector<25x2x64xf32>
    %24 = vector.extract_strided_slice %19 {offsets = [4, 0, 0], sizes = [25, 2, 64], strides = [1, 1, 1]} : vector<29x2x64xf32> to vector<25x2x64xf32>
    %25 = tpu.concatenate %20, %21, %22, %23, %24 in 2 : vector<25x2x64xf32>, vector<25x2x64xf32>, vector<25x2x64xf32>, vector<25x2x64xf32>, vector<25x2x64xf32> -> vector<25x2x320xf32>
    %26 = vector.shape_cast %25 : vector<25x2x320xf32> to vector<50x320xf32>
    %27 = arith.truncf %26 : vector<50x320xf32> to vector<50x320xbf16>
    %c0_8 = arith.constant 0 : index
    %c0_9 = arith.constant 0 : index
    %28 = vector.load %arg4[%c0_8, %c0_9] : memref<320x64xf32, #tpu.memory_space<vmem>>, vector<320x64xf32>
    %29 = arith.truncf %28 : vector<320x64xf32> to vector<320x64xbf16>
    %cst_10 = arith.constant dense<0.000000e+00> : vector<50x64xf32>
    %30 = tpu.matmul %27, %29, %cst_10 {dimension_numbers = #tpu.dot_dimension_numbers<[1], [0], [0], [1], [0, 0, 1, 1], [], []>} : vector<50x320xbf16>, vector<320x64xbf16>, vector<50x64xf32> -> vector<50x64xf32>
    %c0_11 = arith.constant 0 : index
    %c0_12 = arith.constant 0 : index
    %31 = vector.load %arg5[%c0_11, %c0_12] : memref<1x64xf32, #tpu.memory_space<vmem>>, vector<1x64xf32>
    %32 = vector.broadcast %31 : vector<1x64xf32> to vector<50x64xf32>
    %33 = arith.addf %30, %32 : vector<50x64xf32>
    %cst_13 = arith.constant 0.000000e+00 : f32
    %34 = vector.broadcast %cst_13 : f32 to vector<50x64xf32>
    %35 = arith.maximumf %33, %34 : vector<50x64xf32>
    %36 = vector.shape_cast %35 : vector<50x64xf32> to vector<25x2x64xf32>
    %37 = vector.extract_strided_slice %36 {offsets = [0, 0, 0], sizes = [24, 2, 64], strides = [1, 1, 1]} : vector<25x2x64xf32> to vector<24x2x64xf32>
    %38 = vector.shape_cast %37 : vector<24x2x64xf32> to vector<12x2x2x64xf32>
    %39 = vector.extract_strided_slice %38 {offsets = [0, 0, 0, 0], sizes = [12, 1, 2, 64], strides = [1, 1, 1, 1]} : vector<12x2x2x64xf32> to vector<12x1x2x64xf32>
    %40 = vector.shape_cast %39 : vector<12x1x2x64xf32> to vector<12x2x64xf32>
    %41 = vector.extract_strided_slice %38 {offsets = [0, 1, 0, 0], sizes = [12, 1, 2, 64], strides = [1, 1, 1, 1]} : vector<12x2x2x64xf32> to vector<12x1x2x64xf32>
    %42 = vector.shape_cast %41 : vector<12x1x2x64xf32> to vector<12x2x64xf32>
    %43 = arith.maximumf %40, %42 : vector<12x2x64xf32>
    %44 = vector.shape_cast %43 : vector<12x2x64xf32> to vector<24x64xf32>
    %45 = arith.truncf %44 : vector<24x64xf32> to vector<24x64xbf16>
    %c0_14 = arith.constant 0 : index
    %c0_15 = arith.constant 0 : index
    %46 = vector.load %arg6[%c0_14, %c0_15] : memref<64x256xf32, #tpu.memory_space<vmem>>, vector<64x256xf32>
    %47 = arith.truncf %46 : vector<64x256xf32> to vector<64x256xbf16>
    %cst_16 = arith.constant dense<0.000000e+00> : vector<24x256xf32>
    %48 = tpu.matmul %45, %47, %cst_16 {dimension_numbers = #tpu.dot_dimension_numbers<[1], [0], [0], [1], [0, 0, 1, 1], [], []>} : vector<24x64xbf16>, vector<64x256xbf16>, vector<24x256xf32> -> vector<24x256xf32>
    %c0_17 = arith.constant 0 : index
    %c0_18 = arith.constant 0 : index
    %49 = vector.load %arg8[%c0_17, %c0_18] : memref<1x256xf32, #tpu.memory_space<vmem>>, vector<1x256xf32>
    %50 = vector.broadcast %49 : vector<1x256xf32> to vector<24x256xf32>
    %51 = arith.addf %48, %50 : vector<24x256xf32>
    %52 = vector.shape_cast %51 : vector<24x256xf32> to vector<12x2x256xf32>
    %c0_19 = arith.constant 0 : index
    %c0_20 = arith.constant 0 : index
    %c0_21 = arith.constant 0 : index
    %53 = vector.load %arg12[%c0_19, %c0_20, %c0_21] : memref<12x2x256xf32, #tpu.memory_space<vmem>>, vector<12x2x256xf32>
    tpu.vector_store %arg12[%c0_19, %c0_20, %c0_21], %52 {strides = array<i32>} : memref<12x2x256xf32, #tpu.memory_space<vmem>>, vector<12x2x256xf32>,
    %c0_22 = arith.constant 0 : index
    %c0_23 = arith.constant 0 : index
    %54 = vector.load %arg7[%c0_22, %c0_23] : memref<64x256xf32, #tpu.memory_space<vmem>>, vector<64x256xf32>
    %55 = arith.truncf %54 : vector<64x256xf32> to vector<64x256xbf16>
    %cst_24 = arith.constant 0.000000e+00 : f32
    %56 = vector.broadcast %cst_24 : f32 to vector<2x64xf32>
    %cst_25 = arith.constant 0.000000e+00 : f32
    %57 = vector.broadcast %cst_25 : f32 to vector<2x64xf32>
    %c0_i32 = arith.constant 0 : i32
    %58 = arith.index_cast %c0_i32 : i32 to index
    %c0_26 = arith.constant 0 : index
    %c0_27 = arith.constant 0 : index
    %59 = vector.load %arg12[%58, %c0_26, %c0_27] : memref<12x2x256xf32, #tpu.memory_space<vmem>>, vector<1x2x256xf32>
    %60 = vector.shape_cast %59 : vector<1x2x256xf32> to vector<2x256xf32>
    %61 = arith.truncf %56 : vector<2x64xf32> to vector<2x64xbf16>
    %cst_28 = arith.constant dense<0.000000e+00> : vector<2x256xf32>
    %62 = tpu.matmul %61, %55, %cst_28 {dimension_numbers = #tpu.dot_dimension_numbers<[1], [0], [0], [1], [0, 0, 1, 1], [], []>} : vector<2x64xbf16>, vector<64x256xbf16>, vector<2x256xf32> -> vector<2x256xf32>
    %63 = arith.addf %60, %62 : vector<2x256xf32>
    %64 = arith.negf %63 : vector<2x256xf32>
    %65 = math.exp %64 : vector<2x256xf32>
    %cst_29 = arith.constant 1.000000e+00 : f32
    %66 = vector.broadcast %cst_29 : f32 to vector<2x256xf32>
    %67 = arith.addf %66, %65 : vector<2x256xf32>
    %68 = arith.divf %66, %67 : vector<2x256xf32>
    %69 = vector.extract_strided_slice %63 {offsets = [0, 128], sizes = [2, 128], strides = [1, 1]} : vector<2x256xf32> to vector<2x128xf32>
    %70 = math.tanh %69 : vector<2x128xf32>
    %71 = vector.extract_strided_slice %68 {offsets = [0, 0], sizes = [2, 64], strides = [1, 1]} : vector<2x256xf32> to vector<2x64xf32>
    %72 = vector.extract_strided_slice %68 {offsets = [0, 64], sizes = [2, 64], strides = [1, 1]} : vector<2x256xf32> to vector<2x64xf32>
    %73 = vector.extract_strided_slice %68 {offsets = [0, 128], sizes = [2, 64], strides = [1, 1]} : vector<2x256xf32> to vector<2x64xf32>
    %74 = vector.extract_strided_slice %70 {offsets = [0, 64], sizes = [2, 64], strides = [1, 1]} : vector<2x128xf32> to vector<2x64xf32>
    %75 = arith.mulf %72, %57 : vector<2x64xf32>
    %76 = arith.mulf %71, %74 : vector<2x64xf32>
    %77 = arith.addf %75, %76 : vector<2x64xf32>
    %78 = math.tanh %77 : vector<2x64xf32>
    %79 = arith.mulf %73, %78 : vector<2x64xf32>
    %c1_i32 = arith.constant 1 : i32
    %80 = arith.index_cast %c1_i32 : i32 to index
    %c0_30 = arith.constant 0 : index
    %c0_31 = arith.constant 0 : index
    %81 = vector.load %arg12[%80, %c0_30, %c0_31] : memref<12x2x256xf32, #tpu.memory_space<vmem>>, vector<1x2x256xf32>
    %82 = vector.shape_cast %81 : vector<1x2x256xf32> to vector<2x256xf32>
    %83 = arith.truncf %79 : vector<2x64xf32> to vector<2x64xbf16>
    %cst_32 = arith.constant dense<0.000000e+00> : vector<2x256xf32>
    %84 = tpu.matmul %83, %55, %cst_32 {dimension_numbers = #tpu.dot_dimension_numbers<[1], [0], [0], [1], [0, 0, 1, 1], [], []>} : vector<2x64xbf16>, vector<64x256xbf16>, vector<2x256xf32> -> vector<2x256xf32>
    %85 = arith.addf %82, %84 : vector<2x256xf32>
    %86 = arith.negf %85 : vector<2x256xf32>
    %87 = math.exp %86 : vector<2x256xf32>
    %cst_33 = arith.constant 1.000000e+00 : f32
    %88 = vector.broadcast %cst_33 : f32 to vector<2x256xf32>
    %89 = arith.addf %88, %87 : vector<2x256xf32>
    %90 = arith.divf %88, %89 : vector<2x256xf32>
    %91 = vector.extract_strided_slice %85 {offsets = [0, 128], sizes = [2, 128], strides = [1, 1]} : vector<2x256xf32> to vector<2x128xf32>
    %92 = math.tanh %91 : vector<2x128xf32>
    %93 = vector.extract_strided_slice %90 {offsets = [0, 0], sizes = [2, 64], strides = [1, 1]} : vector<2x256xf32> to vector<2x64xf32>
    %94 = vector.extract_strided_slice %90 {offsets = [0, 64], sizes = [2, 64], strides = [1, 1]} : vector<2x256xf32> to vector<2x64xf32>
    %95 = vector.extract_strided_slice %90 {offsets = [0, 128], sizes = [2, 64], strides = [1, 1]} : vector<2x256xf32> to vector<2x64xf32>
    %96 = vector.extract_strided_slice %92 {offsets = [0, 64], sizes = [2, 64], strides = [1, 1]} : vector<2x128xf32> to vector<2x64xf32>
    %97 = arith.mulf %94, %77 : vector<2x64xf32>
    %98 = arith.mulf %93, %96 : vector<2x64xf32>
    %99 = arith.addf %97, %98 : vector<2x64xf32>
    %100 = math.tanh %99 : vector<2x64xf32>
    %101 = arith.mulf %95, %100 : vector<2x64xf32>
    %c2_i32 = arith.constant 2 : i32
    %102 = arith.index_cast %c2_i32 : i32 to index
    %c0_34 = arith.constant 0 : index
    %c0_35 = arith.constant 0 : index
    %103 = vector.load %arg12[%102, %c0_34, %c0_35] : memref<12x2x256xf32, #tpu.memory_space<vmem>>, vector<1x2x256xf32>
    %104 = vector.shape_cast %103 : vector<1x2x256xf32> to vector<2x256xf32>
    %105 = arith.truncf %101 : vector<2x64xf32> to vector<2x64xbf16>
    %cst_36 = arith.constant dense<0.000000e+00> : vector<2x256xf32>
    %106 = tpu.matmul %105, %55, %cst_36 {dimension_numbers = #tpu.dot_dimension_numbers<[1], [0], [0], [1], [0, 0, 1, 1], [], []>} : vector<2x64xbf16>, vector<64x256xbf16>, vector<2x256xf32> -> vector<2x256xf32>
    %107 = arith.addf %104, %106 : vector<2x256xf32>
    %108 = arith.negf %107 : vector<2x256xf32>
    %109 = math.exp %108 : vector<2x256xf32>
    %cst_37 = arith.constant 1.000000e+00 : f32
    %110 = vector.broadcast %cst_37 : f32 to vector<2x256xf32>
    %111 = arith.addf %110, %109 : vector<2x256xf32>
    %112 = arith.divf %110, %111 : vector<2x256xf32>
    %113 = vector.extract_strided_slice %107 {offsets = [0, 128], sizes = [2, 128], strides = [1, 1]} : vector<2x256xf32> to vector<2x128xf32>
    %114 = math.tanh %113 : vector<2x128xf32>
    %115 = vector.extract_strided_slice %112 {offsets = [0, 0], sizes = [2, 64], strides = [1, 1]} : vector<2x256xf32> to vector<2x64xf32>
    %116 = vector.extract_strided_slice %112 {offsets = [0, 64], sizes = [2, 64], strides = [1, 1]} : vector<2x256xf32> to vector<2x64xf32>
    %117 = vector.extract_strided_slice %112 {offsets = [0, 128], sizes = [2, 64], strides = [1, 1]} : vector<2x256xf32> to vector<2x64xf32>
    %118 = vector.extract_strided_slice %114 {offsets = [0, 64], sizes = [2, 64], strides = [1, 1]} : vector<2x128xf32> to vector<2x64xf32>
    %119 = arith.mulf %116, %99 : vector<2x64xf32>
    %120 = arith.mulf %115, %118 : vector<2x64xf32>
    %121 = arith.addf %119, %120 : vector<2x64xf32>
    %122 = math.tanh %121 : vector<2x64xf32>
    %123 = arith.mulf %117, %122 : vector<2x64xf32>
    %c3_i32 = arith.constant 3 : i32
    %124 = arith.index_cast %c3_i32 : i32 to index
    %c0_38 = arith.constant 0 : index
    %c0_39 = arith.constant 0 : index
    %125 = vector.load %arg12[%124, %c0_38, %c0_39] : memref<12x2x256xf32, #tpu.memory_space<vmem>>, vector<1x2x256xf32>
    %126 = vector.shape_cast %125 : vector<1x2x256xf32> to vector<2x256xf32>
    %127 = arith.truncf %123 : vector<2x64xf32> to vector<2x64xbf16>
    %cst_40 = arith.constant dense<0.000000e+00> : vector<2x256xf32>
    %128 = tpu.matmul %127, %55, %cst_40 {dimension_numbers = #tpu.dot_dimension_numbers<[1], [0], [0], [1], [0, 0, 1, 1], [], []>} : vector<2x64xbf16>, vector<64x256xbf16>, vector<2x256xf32> -> vector<2x256xf32>
    %129 = arith.addf %126, %128 : vector<2x256xf32>
    %130 = arith.negf %129 : vector<2x256xf32>
    %131 = math.exp %130 : vector<2x256xf32>
    %cst_41 = arith.constant 1.000000e+00 : f32
    %132 = vector.broadcast %cst_41 : f32 to vector<2x256xf32>
    %133 = arith.addf %132, %131 : vector<2x256xf32>
    %134 = arith.divf %132, %133 : vector<2x256xf32>
    %135 = vector.extract_strided_slice %129 {offsets = [0, 128], sizes = [2, 128], strides = [1, 1]} : vector<2x256xf32> to vector<2x128xf32>
    %136 = math.tanh %135 : vector<2x128xf32>
    %137 = vector.extract_strided_slice %134 {offsets = [0, 0], sizes = [2, 64], strides = [1, 1]} : vector<2x256xf32> to vector<2x64xf32>
    %138 = vector.extract_strided_slice %134 {offsets = [0, 64], sizes = [2, 64], strides = [1, 1]} : vector<2x256xf32> to vector<2x64xf32>
    %139 = vector.extract_strided_slice %134 {offsets = [0, 128], sizes = [2, 64], strides = [1, 1]} : vector<2x256xf32> to vector<2x64xf32>
    %140 = vector.extract_strided_slice %136 {offsets = [0, 64], sizes = [2, 64], strides = [1, 1]} : vector<2x128xf32> to vector<2x64xf32>
    %141 = arith.mulf %138, %121 : vector<2x64xf32>
    %142 = arith.mulf %137, %140 : vector<2x64xf32>
    %143 = arith.addf %141, %142 : vector<2x64xf32>
    %144 = math.tanh %143 : vector<2x64xf32>
    %145 = arith.mulf %139, %144 : vector<2x64xf32>
    %c4_i32 = arith.constant 4 : i32
    %146 = arith.index_cast %c4_i32 : i32 to index
    %c0_42 = arith.constant 0 : index
    %c0_43 = arith.constant 0 : index
    %147 = vector.load %arg12[%146, %c0_42, %c0_43] : memref<12x2x256xf32, #tpu.memory_space<vmem>>, vector<1x2x256xf32>
    %148 = vector.shape_cast %147 : vector<1x2x256xf32> to vector<2x256xf32>
    %149 = arith.truncf %145 : vector<2x64xf32> to vector<2x64xbf16>
    %cst_44 = arith.constant dense<0.000000e+00> : vector<2x256xf32>
    %150 = tpu.matmul %149, %55, %cst_44 {dimension_numbers = #tpu.dot_dimension_numbers<[1], [0], [0], [1], [0, 0, 1, 1], [], []>} : vector<2x64xbf16>, vector<64x256xbf16>, vector<2x256xf32> -> vector<2x256xf32>
    %151 = arith.addf %148, %150 : vector<2x256xf32>
    %152 = arith.negf %151 : vector<2x256xf32>
    %153 = math.exp %152 : vector<2x256xf32>
    %cst_45 = arith.constant 1.000000e+00 : f32
    %154 = vector.broadcast %cst_45 : f32 to vector<2x256xf32>
    %155 = arith.addf %154, %153 : vector<2x256xf32>
    %156 = arith.divf %154, %155 : vector<2x256xf32>
    %157 = vector.extract_strided_slice %151 {offsets = [0, 128], sizes = [2, 128], strides = [1, 1]} : vector<2x256xf32> to vector<2x128xf32>
    %158 = math.tanh %157 : vector<2x128xf32>
    %159 = vector.extract_strided_slice %156 {offsets = [0, 0], sizes = [2, 64], strides = [1, 1]} : vector<2x256xf32> to vector<2x64xf32>
    %160 = vector.extract_strided_slice %156 {offsets = [0, 64], sizes = [2, 64], strides = [1, 1]} : vector<2x256xf32> to vector<2x64xf32>
    %161 = vector.extract_strided_slice %156 {offsets = [0, 128], sizes = [2, 64], strides = [1, 1]} : vector<2x256xf32> to vector<2x64xf32>
    %162 = vector.extract_strided_slice %158 {offsets = [0, 64], sizes = [2, 64], strides = [1, 1]} : vector<2x128xf32> to vector<2x64xf32>
    %163 = arith.mulf %160, %143 : vector<2x64xf32>
    %164 = arith.mulf %159, %162 : vector<2x64xf32>
    %165 = arith.addf %163, %164 : vector<2x64xf32>
    %166 = math.tanh %165 : vector<2x64xf32>
    %167 = arith.mulf %161, %166 : vector<2x64xf32>
    %c5_i32 = arith.constant 5 : i32
    %168 = arith.index_cast %c5_i32 : i32 to index
    %c0_46 = arith.constant 0 : index
    %c0_47 = arith.constant 0 : index
    %169 = vector.load %arg12[%168, %c0_46, %c0_47] : memref<12x2x256xf32, #tpu.memory_space<vmem>>, vector<1x2x256xf32>
    %170 = vector.shape_cast %169 : vector<1x2x256xf32> to vector<2x256xf32>
    %171 = arith.truncf %167 : vector<2x64xf32> to vector<2x64xbf16>
    %cst_48 = arith.constant dense<0.000000e+00> : vector<2x256xf32>
    %172 = tpu.matmul %171, %55, %cst_48 {dimension_numbers = #tpu.dot_dimension_numbers<[1], [0], [0], [1], [0, 0, 1, 1], [], []>} : vector<2x64xbf16>, vector<64x256xbf16>, vector<2x256xf32> -> vector<2x256xf32>
    %173 = arith.addf %170, %172 : vector<2x256xf32>
    %174 = arith.negf %173 : vector<2x256xf32>
    %175 = math.exp %174 : vector<2x256xf32>
    %cst_49 = arith.constant 1.000000e+00 : f32
    %176 = vector.broadcast %cst_49 : f32 to vector<2x256xf32>
    %177 = arith.addf %176, %175 : vector<2x256xf32>
    %178 = arith.divf %176, %177 : vector<2x256xf32>
    %179 = vector.extract_strided_slice %173 {offsets = [0, 128], sizes = [2, 128], strides = [1, 1]} : vector<2x256xf32> to vector<2x128xf32>
    %180 = math.tanh %179 : vector<2x128xf32>
    %181 = vector.extract_strided_slice %178 {offsets = [0, 0], sizes = [2, 64], strides = [1, 1]} : vector<2x256xf32> to vector<2x64xf32>
    %182 = vector.extract_strided_slice %178 {offsets = [0, 64], sizes = [2, 64], strides = [1, 1]} : vector<2x256xf32> to vector<2x64xf32>
    %183 = vector.extract_strided_slice %178 {offsets = [0, 128], sizes = [2, 64], strides = [1, 1]} : vector<2x256xf32> to vector<2x64xf32>
    %184 = vector.extract_strided_slice %180 {offsets = [0, 64], sizes = [2, 64], strides = [1, 1]} : vector<2x128xf32> to vector<2x64xf32>
    %185 = arith.mulf %182, %165 : vector<2x64xf32>
    %186 = arith.mulf %181, %184 : vector<2x64xf32>
    %187 = arith.addf %185, %186 : vector<2x64xf32>
    %188 = math.tanh %187 : vector<2x64xf32>
    %189 = arith.mulf %183, %188 : vector<2x64xf32>
    %c6_i32 = arith.constant 6 : i32
    %190 = arith.index_cast %c6_i32 : i32 to index
    %c0_50 = arith.constant 0 : index
    %c0_51 = arith.constant 0 : index
    %191 = vector.load %arg12[%190, %c0_50, %c0_51] : memref<12x2x256xf32, #tpu.memory_space<vmem>>, vector<1x2x256xf32>
    %192 = vector.shape_cast %191 : vector<1x2x256xf32> to vector<2x256xf32>
    %193 = arith.truncf %189 : vector<2x64xf32> to vector<2x64xbf16>
    %cst_52 = arith.constant dense<0.000000e+00> : vector<2x256xf32>
    %194 = tpu.matmul %193, %55, %cst_52 {dimension_numbers = #tpu.dot_dimension_numbers<[1], [0], [0], [1], [0, 0, 1, 1], [], []>} : vector<2x64xbf16>, vector<64x256xbf16>, vector<2x256xf32> -> vector<2x256xf32>
    %195 = arith.addf %192, %194 : vector<2x256xf32>
    %196 = arith.negf %195 : vector<2x256xf32>
    %197 = math.exp %196 : vector<2x256xf32>
    %cst_53 = arith.constant 1.000000e+00 : f32
    %198 = vector.broadcast %cst_53 : f32 to vector<2x256xf32>
    %199 = arith.addf %198, %197 : vector<2x256xf32>
    %200 = arith.divf %198, %199 : vector<2x256xf32>
    %201 = vector.extract_strided_slice %195 {offsets = [0, 128], sizes = [2, 128], strides = [1, 1]} : vector<2x256xf32> to vector<2x128xf32>
    %202 = math.tanh %201 : vector<2x128xf32>
    %203 = vector.extract_strided_slice %200 {offsets = [0, 0], sizes = [2, 64], strides = [1, 1]} : vector<2x256xf32> to vector<2x64xf32>
    %204 = vector.extract_strided_slice %200 {offsets = [0, 64], sizes = [2, 64], strides = [1, 1]} : vector<2x256xf32> to vector<2x64xf32>
    %205 = vector.extract_strided_slice %200 {offsets = [0, 128], sizes = [2, 64], strides = [1, 1]} : vector<2x256xf32> to vector<2x64xf32>
    %206 = vector.extract_strided_slice %202 {offsets = [0, 64], sizes = [2, 64], strides = [1, 1]} : vector<2x128xf32> to vector<2x64xf32>
    %207 = arith.mulf %204, %187 : vector<2x64xf32>
    %208 = arith.mulf %203, %206 : vector<2x64xf32>
    %209 = arith.addf %207, %208 : vector<2x64xf32>
    %210 = math.tanh %209 : vector<2x64xf32>
    %211 = arith.mulf %205, %210 : vector<2x64xf32>
    %c7_i32 = arith.constant 7 : i32
    %212 = arith.index_cast %c7_i32 : i32 to index
    %c0_54 = arith.constant 0 : index
    %c0_55 = arith.constant 0 : index
    %213 = vector.load %arg12[%212, %c0_54, %c0_55] : memref<12x2x256xf32, #tpu.memory_space<vmem>>, vector<1x2x256xf32>
    %214 = vector.shape_cast %213 : vector<1x2x256xf32> to vector<2x256xf32>
    %215 = arith.truncf %211 : vector<2x64xf32> to vector<2x64xbf16>
    %cst_56 = arith.constant dense<0.000000e+00> : vector<2x256xf32>
    %216 = tpu.matmul %215, %55, %cst_56 {dimension_numbers = #tpu.dot_dimension_numbers<[1], [0], [0], [1], [0, 0, 1, 1], [], []>} : vector<2x64xbf16>, vector<64x256xbf16>, vector<2x256xf32> -> vector<2x256xf32>
    %217 = arith.addf %214, %216 : vector<2x256xf32>
    %218 = arith.negf %217 : vector<2x256xf32>
    %219 = math.exp %218 : vector<2x256xf32>
    %cst_57 = arith.constant 1.000000e+00 : f32
    %220 = vector.broadcast %cst_57 : f32 to vector<2x256xf32>
    %221 = arith.addf %220, %219 : vector<2x256xf32>
    %222 = arith.divf %220, %221 : vector<2x256xf32>
    %223 = vector.extract_strided_slice %217 {offsets = [0, 128], sizes = [2, 128], strides = [1, 1]} : vector<2x256xf32> to vector<2x128xf32>
    %224 = math.tanh %223 : vector<2x128xf32>
    %225 = vector.extract_strided_slice %222 {offsets = [0, 0], sizes = [2, 64], strides = [1, 1]} : vector<2x256xf32> to vector<2x64xf32>
    %226 = vector.extract_strided_slice %222 {offsets = [0, 64], sizes = [2, 64], strides = [1, 1]} : vector<2x256xf32> to vector<2x64xf32>
    %227 = vector.extract_strided_slice %222 {offsets = [0, 128], sizes = [2, 64], strides = [1, 1]} : vector<2x256xf32> to vector<2x64xf32>
    %228 = vector.extract_strided_slice %224 {offsets = [0, 64], sizes = [2, 64], strides = [1, 1]} : vector<2x128xf32> to vector<2x64xf32>
    %229 = arith.mulf %226, %209 : vector<2x64xf32>
    %230 = arith.mulf %225, %228 : vector<2x64xf32>
    %231 = arith.addf %229, %230 : vector<2x64xf32>
    %232 = math.tanh %231 : vector<2x64xf32>
    %233 = arith.mulf %227, %232 : vector<2x64xf32>
    %c8_i32 = arith.constant 8 : i32
    %234 = arith.index_cast %c8_i32 : i32 to index
    %c0_58 = arith.constant 0 : index
    %c0_59 = arith.constant 0 : index
    %235 = vector.load %arg12[%234, %c0_58, %c0_59] : memref<12x2x256xf32, #tpu.memory_space<vmem>>, vector<1x2x256xf32>
    %236 = vector.shape_cast %235 : vector<1x2x256xf32> to vector<2x256xf32>
    %237 = arith.truncf %233 : vector<2x64xf32> to vector<2x64xbf16>
    %cst_60 = arith.constant dense<0.000000e+00> : vector<2x256xf32>
    %238 = tpu.matmul %237, %55, %cst_60 {dimension_numbers = #tpu.dot_dimension_numbers<[1], [0], [0], [1], [0, 0, 1, 1], [], []>} : vector<2x64xbf16>, vector<64x256xbf16>, vector<2x256xf32> -> vector<2x256xf32>
    %239 = arith.addf %236, %238 : vector<2x256xf32>
    %240 = arith.negf %239 : vector<2x256xf32>
    %241 = math.exp %240 : vector<2x256xf32>
    %cst_61 = arith.constant 1.000000e+00 : f32
    %242 = vector.broadcast %cst_61 : f32 to vector<2x256xf32>
    %243 = arith.addf %242, %241 : vector<2x256xf32>
    %244 = arith.divf %242, %243 : vector<2x256xf32>
    %245 = vector.extract_strided_slice %239 {offsets = [0, 128], sizes = [2, 128], strides = [1, 1]} : vector<2x256xf32> to vector<2x128xf32>
    %246 = math.tanh %245 : vector<2x128xf32>
    %247 = vector.extract_strided_slice %244 {offsets = [0, 0], sizes = [2, 64], strides = [1, 1]} : vector<2x256xf32> to vector<2x64xf32>
    %248 = vector.extract_strided_slice %244 {offsets = [0, 64], sizes = [2, 64], strides = [1, 1]} : vector<2x256xf32> to vector<2x64xf32>
    %249 = vector.extract_strided_slice %244 {offsets = [0, 128], sizes = [2, 64], strides = [1, 1]} : vector<2x256xf32> to vector<2x64xf32>
    %250 = vector.extract_strided_slice %246 {offsets = [0, 64], sizes = [2, 64], strides = [1, 1]} : vector<2x128xf32> to vector<2x64xf32>
    %251 = arith.mulf %248, %231 : vector<2x64xf32>
    %252 = arith.mulf %247, %250 : vector<2x64xf32>
    %253 = arith.addf %251, %252 : vector<2x64xf32>
    %254 = math.tanh %253 : vector<2x64xf32>
    %255 = arith.mulf %249, %254 : vector<2x64xf32>
    %c9_i32 = arith.constant 9 : i32
    %256 = arith.index_cast %c9_i32 : i32 to index
    %c0_62 = arith.constant 0 : index
    %c0_63 = arith.constant 0 : index
    %257 = vector.load %arg12[%256, %c0_62, %c0_63] : memref<12x2x256xf32, #tpu.memory_space<vmem>>, vector<1x2x256xf32>
    %258 = vector.shape_cast %257 : vector<1x2x256xf32> to vector<2x256xf32>
    %259 = arith.truncf %255 : vector<2x64xf32> to vector<2x64xbf16>
    %cst_64 = arith.constant dense<0.000000e+00> : vector<2x256xf32>
    %260 = tpu.matmul %259, %55, %cst_64 {dimension_numbers = #tpu.dot_dimension_numbers<[1], [0], [0], [1], [0, 0, 1, 1], [], []>} : vector<2x64xbf16>, vector<64x256xbf16>, vector<2x256xf32> -> vector<2x256xf32>
    %261 = arith.addf %258, %260 : vector<2x256xf32>
    %262 = arith.negf %261 : vector<2x256xf32>
    %263 = math.exp %262 : vector<2x256xf32>
    %cst_65 = arith.constant 1.000000e+00 : f32
    %264 = vector.broadcast %cst_65 : f32 to vector<2x256xf32>
    %265 = arith.addf %264, %263 : vector<2x256xf32>
    %266 = arith.divf %264, %265 : vector<2x256xf32>
    %267 = vector.extract_strided_slice %261 {offsets = [0, 128], sizes = [2, 128], strides = [1, 1]} : vector<2x256xf32> to vector<2x128xf32>
    %268 = math.tanh %267 : vector<2x128xf32>
    %269 = vector.extract_strided_slice %266 {offsets = [0, 0], sizes = [2, 64], strides = [1, 1]} : vector<2x256xf32> to vector<2x64xf32>
    %270 = vector.extract_strided_slice %266 {offsets = [0, 64], sizes = [2, 64], strides = [1, 1]} : vector<2x256xf32> to vector<2x64xf32>
    %271 = vector.extract_strided_slice %266 {offsets = [0, 128], sizes = [2, 64], strides = [1, 1]} : vector<2x256xf32> to vector<2x64xf32>
    %272 = vector.extract_strided_slice %268 {offsets = [0, 64], sizes = [2, 64], strides = [1, 1]} : vector<2x128xf32> to vector<2x64xf32>
    %273 = arith.mulf %270, %253 : vector<2x64xf32>
    %274 = arith.mulf %269, %272 : vector<2x64xf32>
    %275 = arith.addf %273, %274 : vector<2x64xf32>
    %276 = math.tanh %275 : vector<2x64xf32>
    %277 = arith.mulf %271, %276 : vector<2x64xf32>
    %c10_i32 = arith.constant 10 : i32
    %278 = arith.index_cast %c10_i32 : i32 to index
    %c0_66 = arith.constant 0 : index
    %c0_67 = arith.constant 0 : index
    %279 = vector.load %arg12[%278, %c0_66, %c0_67] : memref<12x2x256xf32, #tpu.memory_space<vmem>>, vector<1x2x256xf32>
    %280 = vector.shape_cast %279 : vector<1x2x256xf32> to vector<2x256xf32>
    %281 = arith.truncf %277 : vector<2x64xf32> to vector<2x64xbf16>
    %cst_68 = arith.constant dense<0.000000e+00> : vector<2x256xf32>
    %282 = tpu.matmul %281, %55, %cst_68 {dimension_numbers = #tpu.dot_dimension_numbers<[1], [0], [0], [1], [0, 0, 1, 1], [], []>} : vector<2x64xbf16>, vector<64x256xbf16>, vector<2x256xf32> -> vector<2x256xf32>
    %283 = arith.addf %280, %282 : vector<2x256xf32>
    %284 = arith.negf %283 : vector<2x256xf32>
    %285 = math.exp %284 : vector<2x256xf32>
    %cst_69 = arith.constant 1.000000e+00 : f32
    %286 = vector.broadcast %cst_69 : f32 to vector<2x256xf32>
    %287 = arith.addf %286, %285 : vector<2x256xf32>
    %288 = arith.divf %286, %287 : vector<2x256xf32>
    %289 = vector.extract_strided_slice %283 {offsets = [0, 128], sizes = [2, 128], strides = [1, 1]} : vector<2x256xf32> to vector<2x128xf32>
    %290 = math.tanh %289 : vector<2x128xf32>
    %291 = vector.extract_strided_slice %288 {offsets = [0, 0], sizes = [2, 64], strides = [1, 1]} : vector<2x256xf32> to vector<2x64xf32>
    %292 = vector.extract_strided_slice %288 {offsets = [0, 64], sizes = [2, 64], strides = [1, 1]} : vector<2x256xf32> to vector<2x64xf32>
    %293 = vector.extract_strided_slice %288 {offsets = [0, 128], sizes = [2, 64], strides = [1, 1]} : vector<2x256xf32> to vector<2x64xf32>
    %294 = vector.extract_strided_slice %290 {offsets = [0, 64], sizes = [2, 64], strides = [1, 1]} : vector<2x128xf32> to vector<2x64xf32>
    %295 = arith.mulf %292, %275 : vector<2x64xf32>
    %296 = arith.mulf %291, %294 : vector<2x64xf32>
    %297 = arith.addf %295, %296 : vector<2x64xf32>
    %298 = math.tanh %297 : vector<2x64xf32>
    %299 = arith.mulf %293, %298 : vector<2x64xf32>
    %c11_i32 = arith.constant 11 : i32
    %300 = arith.index_cast %c11_i32 : i32 to index
    %c0_70 = arith.constant 0 : index
    %c0_71 = arith.constant 0 : index
    %301 = vector.load %arg12[%300, %c0_70, %c0_71] : memref<12x2x256xf32, #tpu.memory_space<vmem>>, vector<1x2x256xf32>
    %302 = vector.shape_cast %301 : vector<1x2x256xf32> to vector<2x256xf32>
    %303 = arith.truncf %299 : vector<2x64xf32> to vector<2x64xbf16>
    %cst_72 = arith.constant dense<0.000000e+00> : vector<2x256xf32>
    %304 = tpu.matmul %303, %55, %cst_72 {dimension_numbers = #tpu.dot_dimension_numbers<[1], [0], [0], [1], [0, 0, 1, 1], [], []>} : vector<2x64xbf16>, vector<64x256xbf16>, vector<2x256xf32> -> vector<2x256xf32>
    %305 = arith.addf %302, %304 : vector<2x256xf32>
    %306 = arith.negf %305 : vector<2x256xf32>
    %307 = math.exp %306 : vector<2x256xf32>
    %cst_73 = arith.constant 1.000000e+00 : f32
    %308 = vector.broadcast %cst_73 : f32 to vector<2x256xf32>
    %309 = arith.addf %308, %307 : vector<2x256xf32>
    %310 = arith.divf %308, %309 : vector<2x256xf32>
    %311 = vector.extract_strided_slice %305 {offsets = [0, 128], sizes = [2, 128], strides = [1, 1]} : vector<2x256xf32> to vector<2x128xf32>
    %312 = math.tanh %311 : vector<2x128xf32>
    %313 = vector.extract_strided_slice %310 {offsets = [0, 0], sizes = [2, 64], strides = [1, 1]} : vector<2x256xf32> to vector<2x64xf32>
    %314 = vector.extract_strided_slice %310 {offsets = [0, 64], sizes = [2, 64], strides = [1, 1]} : vector<2x256xf32> to vector<2x64xf32>
    %315 = vector.extract_strided_slice %310 {offsets = [0, 128], sizes = [2, 64], strides = [1, 1]} : vector<2x256xf32> to vector<2x64xf32>
    %316 = vector.extract_strided_slice %312 {offsets = [0, 64], sizes = [2, 64], strides = [1, 1]} : vector<2x128xf32> to vector<2x64xf32>
    %317 = arith.mulf %314, %297 : vector<2x64xf32>
    %318 = arith.mulf %313, %316 : vector<2x64xf32>
    %319 = arith.addf %317, %318 : vector<2x64xf32>
    %320 = math.tanh %319 : vector<2x64xf32>
    %321 = arith.mulf %315, %320 : vector<2x64xf32>
    %c12_i32 = arith.constant 12 : i32
    %322 = arith.truncf %321 : vector<2x64xf32> to vector<2x64xbf16>
    %c0_74 = arith.constant 0 : index
    %c0_75 = arith.constant 0 : index
    %323 = vector.load %arg9[%c0_74, %c0_75] : memref<64x64xf32, #tpu.memory_space<vmem>>, vector<64x64xf32>
    %324 = arith.truncf %323 : vector<64x64xf32> to vector<64x64xbf16>
    %cst_76 = arith.constant dense<0.000000e+00> : vector<2x64xf32>
    %325 = tpu.matmul %322, %324, %cst_76 {dimension_numbers = #tpu.dot_dimension_numbers<[1], [0], [0], [1], [0, 0, 1, 1], [], []>} : vector<2x64xbf16>, vector<64x64xbf16>, vector<2x64xf32> -> vector<2x64xf32>
    %c0_77 = arith.constant 0 : index
    %c0_78 = arith.constant 0 : index
    %326 = vector.load %arg10[%c0_77, %c0_78] : memref<1x64xf32, #tpu.memory_space<vmem>>, vector<1x64xf32>
    %327 = vector.broadcast %326 : vector<1x64xf32> to vector<2x64xf32>
    %328 = arith.addf %325, %327 : vector<2x64xf32>
    %c0_79 = arith.constant 0 : index
    %c0_80 = arith.constant 0 : index
    %329 = vector.load %arg11[%c0_79, %c0_80] : memref<2x64xf32, #tpu.memory_space<vmem>>, vector<2x64xf32>
    tpu.vector_store %arg11[%c0_79, %c0_80], %328 {strides = array<i32>} : memref<2x64xf32, #tpu.memory_space<vmem>>, vector<2x64xf32>,
    return
  }
  func.func @transform_0(%arg0: i32) -> (i32, i32, i32) {
    %c0_i32 = arith.constant 0 : i32
    %c0_i32_0 = arith.constant 0 : i32
    %c0_i32_1 = arith.constant 0 : i32
    return %c0_i32, %arg0, %c0_i32_0 : i32, i32, i32
  }
  func.func @transform_1(%arg0: i32) -> (i32, i32) {
    %c0_i32 = arith.constant 0 : i32
    %c0_i32_0 = arith.constant 0 : i32
    %c0_i32_1 = arith.constant 0 : i32
    return %c0_i32, %c0_i32_0 : i32, i32
  }
  func.func @transform_2(%arg0: i32) -> (i32, i32) {
    %c0_i32 = arith.constant 0 : i32
    %c0_i32_0 = arith.constant 0 : i32
    %c0_i32_1 = arith.constant 0 : i32
    return %c0_i32, %c0_i32_0 : i32, i32
  }
  func.func @transform_3(%arg0: i32) -> (i32, i32) {
    %c0_i32 = arith.constant 0 : i32
    %c0_i32_0 = arith.constant 0 : i32
    %c0_i32_1 = arith.constant 0 : i32
    return %c0_i32, %c0_i32_0 : i32, i32
  }
  func.func @transform_4(%arg0: i32) -> (i32, i32) {
    %c0_i32 = arith.constant 0 : i32
    %c0_i32_0 = arith.constant 0 : i32
    %c0_i32_1 = arith.constant 0 : i32
    return %c0_i32, %c0_i32_0 : i32, i32
  }
  func.func @transform_5(%arg0: i32) -> (i32, i32) {
    %c0_i32 = arith.constant 0 : i32
    %c0_i32_0 = arith.constant 0 : i32
    %c0_i32_1 = arith.constant 0 : i32
    return %c0_i32, %c0_i32_0 : i32, i32
  }
  func.func @transform_6(%arg0: i32) -> (i32, i32) {
    %c0_i32 = arith.constant 0 : i32
    %c0_i32_0 = arith.constant 0 : i32
    %c0_i32_1 = arith.constant 0 : i32
    return %c0_i32, %c0_i32_0 : i32, i32
  }
  func.func @transform_7(%arg0: i32) -> (i32, i32) {
    %c0_i32 = arith.constant 0 : i32
    %c0_i32_0 = arith.constant 0 : i32
    %c0_i32_1 = arith.constant 0 : i32
    return %c0_i32, %c0_i32_0 : i32, i32
  }
  func.func @transform_8(%arg0: i32) -> (i32, i32) {
    %c0_i32 = arith.constant 0 : i32
    %c0_i32_0 = arith.constant 0 : i32
    %c0_i32_1 = arith.constant 0 : i32
    return %c0_i32, %c0_i32_0 : i32, i32
  }
  func.func @transform_9(%arg0: i32) -> (i32, i32) {
    %c0_i32 = arith.constant 0 : i32
    %c0_i32_0 = arith.constant 0 : i32
    %c0_i32_1 = arith.constant 0 : i32
    return %c0_i32, %c0_i32_0 : i32, i32
  }
  func.func @transform_10(%arg0: i32) -> (i32, i32) {
    %c0_i32 = arith.constant 0 : i32
    %c0_i32_0 = arith.constant 0 : i32
    return %arg0, %c0_i32 : i32, i32
  }
}

</mosaic_0001>

<llo_original>
// kernel: _lambda_.1
$region0: #{_lambda_.1}
  #allocation0 [shape = 'u32[]', space=smem, size = 0x4, offset = 0x4, fixed_abs, tag = 'smem constant byte address 0x4 - core index']
  #allocation1 [shape = 'u32[144,128]{1,0:T(1,128)}', space=vmem, size = 0x12000, scoped, tag = 'internal scratch']
  #allocation2 [shape = 'f32[12,2,256]{2,1,0:T(2,128)}', space=vmem, size = 0x6000, scoped, tag = 'scratch operand']
  %s0 = inlined_call_operand.vmem [shape: f32[50,2,10], index: 0, kind: input, shape index: {}]
  %s1 = inlined_call_operand.vmem [shape: f32[10,64], index: 1, kind: input, shape index: {}]
  %s2 = inlined_call_operand.vmem [shape: f32[1,64], index: 2, kind: input, shape index: {}]
  %s3 = inlined_call_operand.vmem [shape: f32[320,64], index: 3, kind: input, shape index: {}]
  %s4 = inlined_call_operand.vmem [shape: f32[1,64], index: 4, kind: input, shape index: {}]
  %s5 = inlined_call_operand.vmem [shape: f32[64,256], index: 5, kind: input, shape index: {}]
  %s6 = inlined_call_operand.vmem [shape: f32[64,256], index: 6, kind: input, shape index: {}]
  %s7 = inlined_call_operand.vmem [shape: f32[1,256], index: 7, kind: input, shape index: {}]
  %s8 = inlined_call_operand.vmem [shape: f32[64,64], index: 8, kind: input, shape index: {}]
  %s9 = inlined_call_operand.vmem [shape: f32[1,64], index: 9, kind: input, shape index: {}]
  %s10 = inlined_call_operand.hbm [shape: f32[2,64], index: 10, kind: output, shape index: {}]
  %s11 = sld [smem:[#allocation0]]
  $region50: #{_lambda_.1} parent=0
    _
  %s13 = ssub.s32 1, %s11
  %s14 = scalar_select 0, %s13, %s11
  $region1: #{_lambda_.1} parent=0
    #allocation3 [shape = 'u8[1024]{0}', space=vmem, size = 0x400, scoped, tag = 'output window, operand 0, single buffered']
    #allocation4 [shape = 's32[1]{0}', space=sflag, size = 0x4, scoped, tag = 'scoped memory for _lambda_.1']
    %15 = vsyncpa [#allocation4], 0
    // Predicated region
    $region2: #{_lambda_.1} parent=1 // pred_check
      _
    $region3: #{_lambda_.1} parent=1 // pred_check_branch
      %17 = sbr.rel (0) target = $region5
    $region4: #{_lambda_.1} parent=1 // pred_region
      _
    $region5: #{_lambda_.1} parent=1 // pred_fallthru
      _
    // Predicated region
    $region6: #{_lambda_.1} parent=1 // pred_check
      _
    $region7: #{_lambda_.1} parent=1 // pred_check_branch
      %19 = sbr.rel (0) target = $region9
    $region8: #{_lambda_.1} parent=1 // pred_region
      _
    $region9: #{_lambda_.1} parent=1 // pred_fallthru
      _
    // Predicated region
    $region10: #{_lambda_.1} parent=1 // pred_check
      _
    $region11: #{_lambda_.1} parent=1 // pred_check_branch
      %21 = sbr.rel (0) target = $region13
    $region12: #{_lambda_.1} parent=1 // pred_region
      _
    $region13: #{_lambda_.1} parent=1 // pred_fallthru
      _
    // Predicated region
    $region14: #{_lambda_.1} parent=1 // pred_check
      _
    $region15: #{_lambda_.1} parent=1 // pred_check_branch
      %23 = sbr.rel (0) target = $region17
    $region16: #{_lambda_.1} parent=1 // pred_region
      _
    $region17: #{_lambda_.1} parent=1 // pred_fallthru
      _
    // Predicated region
    $region18: #{_lambda_.1} parent=1 // pred_check
      _
    $region19: #{_lambda_.1} parent=1 // pred_check_branch
      %25 = sbr.rel (0) target = $region21
    $region20: #{_lambda_.1} parent=1 // pred_region
      _
    $region21: #{_lambda_.1} parent=1 // pred_fallthru
      _
    // Predicated region
    $region22: #{_lambda_.1} parent=1 // pred_check
      _
    $region23: #{_lambda_.1} parent=1 // pred_check_branch
      %27 = sbr.rel (0) target = $region25
    $region24: #{_lambda_.1} parent=1 // pred_region
      _
    $region25: #{_lambda_.1} parent=1 // pred_fallthru
      _
    // Predicated region
    $region26: #{_lambda_.1} parent=1 // pred_check
      _
    $region27: #{_lambda_.1} parent=1 // pred_check_branch
      %29 = sbr.rel (0) target = $region29
    $region28: #{_lambda_.1} parent=1 // pred_region
      _
    $region29: #{_lambda_.1} parent=1 // pred_fallthru
      _
    // Predicated region
    $region30: #{_lambda_.1} parent=1 // pred_check
      _
    $region31: #{_lambda_.1} parent=1 // pred_check_branch
      %31 = sbr.rel (0) target = $region33
    $region32: #{_lambda_.1} parent=1 // pred_region
      _
    $region33: #{_lambda_.1} parent=1 // pred_fallthru
      _
    // Predicated region
    $region34: #{_lambda_.1} parent=1 // pred_check
      _
    $region35: #{_lambda_.1} parent=1 // pred_check_branch
      %33 = sbr.rel (0) target = $region37
    $region36: #{_lambda_.1} parent=1 // pred_region
      _
    $region37: #{_lambda_.1} parent=1 // pred_fallthru
      _
    // Predicated region
    $region38: #{_lambda_.1} parent=1 // pred_check
      _
    $region39: #{_lambda_.1} parent=1 // pred_check_branch
      %35 = sbr.rel (0) target = $region41
    $region40: #{_lambda_.1} parent=1 // pred_region
      _
    $region41: #{_lambda_.1} parent=1 // pred_fallthru
      _
    %v37 = vld [vmem:[%s0] sm:$0x3]
    %v38 = vld [vmem:[%s0 + $0x2] sm:$0x3]
    %v39 = vld [vmem:[%s0 + $0x4] sm:$0x3]
    %v40 = vld [vmem:[%s0 + $0x6] sm:$0x3]
    %v41 = vld [vmem:[%s0 + $0x8] sm:$0x3]
    %v42 = vld [vmem:[%s0 + $0xa] sm:$0x3]
    %v43 = vld [vmem:[%s0 + $0xc] sm:$0x3]
    %v44 = vld [vmem:[%s0 + $0xe] sm:$0x3]
    %v45 = vld [vmem:[%s0 + $0x10] sm:$0x3]
    %v46 = vld [vmem:[%s0 + $0x12] sm:$0x3]
    %v47 = vld [vmem:[%s0 + $0x14] sm:$0x3]
    %v48 = vld [vmem:[%s0 + $0x16] sm:$0x3]
    %v49 = vld [vmem:[%s0 + $0x18] sm:$0x3]
    %v50 = vld [vmem:[%s0 + $0x1a] sm:$0x3]
    %v51 = vld [vmem:[%s0 + $0x1c] sm:$0x3]
    %v52 = vld [vmem:[%s0 + $0x1e] sm:$0x3]
    %v53 = vld [vmem:[%s0 + $0x20] sm:$0x3]
    %v54 = vld [vmem:[%s0 + $0x22] sm:$0x3]
    %v55 = vld [vmem:[%s0 + $0x24] sm:$0x3]
    %v56 = vld [vmem:[%s0 + $0x26] sm:$0x3]
    %v57 = vld [vmem:[%s0 + $0x28] sm:$0x3]
    %v58 = vld [vmem:[%s0 + $0x2a] sm:$0x3]
    %v59 = vld [vmem:[%s0 + $0x2c] sm:$0x3]
    %v60 = vld [vmem:[%s0 + $0x2e] sm:$0x3]
    %v61 = vld [vmem:[%s0 + $0x30] sm:$0x3]
    %v62 = vld [vmem:[%s0 + $0x32] sm:$0x3]
    %v63 = vld [vmem:[%s0 + $0x34] sm:$0x3]
    %v64 = vld [vmem:[%s0 + $0x36] sm:$0x3]
    %v65 = vld [vmem:[%s0 + $0x38] sm:$0x3]
    %v66 = vld [vmem:[%s0 + $0x3a] sm:$0x3]
    %v67 = vld [vmem:[%s0 + $0x3c] sm:$0x3]
    %v68 = vld [vmem:[%s0 + $0x3e] sm:$0x3]
    %v69 = vld [vmem:[%s0 + $0x40] sm:$0x3]
    %v70 = vld [vmem:[%s0 + $0x42] sm:$0x3]
    %v71 = vld [vmem:[%s0 + $0x44] sm:$0x3]
    %v72 = vld [vmem:[%s0 + $0x46] sm:$0x3]
    %v73 = vld [vmem:[%s0 + $0x48] sm:$0x3]
    %v74 = vld [vmem:[%s0 + $0x4a] sm:$0x3]
    %v75 = vld [vmem:[%s0 + $0x4c] sm:$0x3]
    %v76 = vld [vmem:[%s0 + $0x4e] sm:$0x3]
    %v77 = vld [vmem:[%s0 + $0x50] sm:$0x3]
    %v78 = vld [vmem:[%s0 + $0x52] sm:$0x3]
    %v79 = vld [vmem:[%s0 + $0x54] sm:$0x3]
    %v80 = vld [vmem:[%s0 + $0x56] sm:$0x3]
    %v81 = vld [vmem:[%s0 + $0x58] sm:$0x3]
    %v82 = vld [vmem:[%s0 + $0x5a] sm:$0x3]
    %v83 = vld [vmem:[%s0 + $0x5c] sm:$0x3]
    %v84 = vld [vmem:[%s0 + $0x5e] sm:$0x3]
    %v85 = vld [vmem:[%s0 + $0x60] sm:$0x3]
    %v86 = vld [vmem:[%s0 + $0x62] sm:$0x3]
    %v137 = vcombine.low %v37, %v38
    %v138 = vcombine.low %v39, %v40
    %v140 = vunpack.c.l.s4 1983009808
    %v141 = vunpack.c.0.s8 %v140
    %v142 = vlaneseq
    %v143 = vshrl.u32 %v142, 7
    %v144 = vsub.s32 %v141, %v143
    %v145 = vrot.slane %v137, %v144
    %v147 = vunpack.c.l.s4 1983009808
    %v148 = vunpack.c.0.s8 %v147
    %v149 = vlaneseq
    %v150 = vshrl.u32 %v149, 7
    %v151 = vsub.s32 %v148, %v150
    %v152 = vrot.slane %v138, %v151
    %v153 = vcombine.low %v145, %v152
    %v154 = vcombine.low %v41, %v42
    %v155 = vcombine.low %v43, %v44
    %v157 = vunpack.c.l.s4 1983009808
    %v158 = vunpack.c.0.s8 %v157
    %v159 = vlaneseq
    %v160 = vshrl.u32 %v159, 7
    %v161 = vsub.s32 %v158, %v160
    %v162 = vrot.slane %v154, %v161
    %v164 = vunpack.c.l.s4 1983009808
    %v165 = vunpack.c.0.s8 %v164
    %v166 = vlaneseq
    %v167 = vshrl.u32 %v166, 7
    %v168 = vsub.s32 %v165, %v167
    %v169 = vrot.slane %v155, %v168
    %v170 = vcombine.low %v162, %v169
    %v171 = vcombine.low %v45, %v46
    %v172 = vcombine.low %v47, %v48
    %v174 = vunpack.c.l.s4 1983009808
    %v175 = vunpack.c.0.s8 %v174
    %v176 = vlaneseq
    %v177 = vshrl.u32 %v176, 7
    %v178 = vsub.s32 %v175, %v177
    %v179 = vrot.slane %v171, %v178
    %v181 = vunpack.c.l.s4 1983009808
    %v182 = vunpack.c.0.s8 %v181
    %v183 = vlaneseq
    %v184 = vshrl.u32 %v183, 7
    %v185 = vsub.s32 %v182, %v184
    %v186 = vrot.slane %v172, %v185
    %v187 = vcombine.low %v179, %v186
    %v188 = vcombine.low %v49, %v50
    %v189 = vcombine.low %v51, %v52
    %v191 = vunpack.c.l.s4 1983009808
    %v192 = vunpack.c.0.s8 %v191
    %v193 = vlaneseq
    %v194 = vshrl.u32 %v193, 7
    %v195 = vsub.s32 %v192, %v194
    %v196 = vrot.slane %v188, %v195
    %v198 = vunpack.c.l.s4 1983009808
    %v199 = vunpack.c.0.s8 %v198
    %v200 = vlaneseq
    %v201 = vshrl.u32 %v200, 7
    %v202 = vsub.s32 %v199, %v201
    %v203 = vrot.slane %v189, %v202
    %v204 = vcombine.low %v196, %v203
    %v205 = vcombine.low %v53, %v54
    %v206 = vcombine.low %v55, %v56
    %v208 = vunpack.c.l.s4 1983009808
    %v209 = vunpack.c.0.s8 %v208
    %v210 = vlaneseq
    %v211 = vshrl.u32 %v210, 7
    %v212 = vsub.s32 %v209, %v211
    %v213 = vrot.slane %v205, %v212
    %v215 = vunpack.c.l.s4 1983009808
    %v216 = vunpack.c.0.s8 %v215
    %v217 = vlaneseq
    %v218 = vshrl.u32 %v217, 7
    %v219 = vsub.s32 %v216, %v218
    %v220 = vrot.slane %v206, %v219
    %v221 = vcombine.low %v213, %v220
    %v222 = vcombine.low %v57, %v58
    %v223 = vcombine.low %v59, %v60
    %v225 = vunpack.c.l.s4 1983009808
    %v226 = vunpack.c.0.s8 %v225
    %v227 = vlaneseq
    %v228 = vshrl.u32 %v227, 7
    %v229 = vsub.s32 %v226, %v228
    %v230 = vrot.slane %v222, %v229
    %v232 = vunpack.c.l.s4 1983009808
    %v233 = vunpack.c.0.s8 %v232
    %v234 = vlaneseq
    %v235 = vshrl.u32 %v234, 7
    %v236 = vsub.s32 %v233, %v235
    %v237 = vrot.slane %v223, %v236
    %v238 = vcombine.low %v230, %v237
    %v239 = vcombine.low %v61, %v62
    %v240 = vcombine.low %v63, %v64
    %v242 = vunpack.c.l.s4 1983009808
    %v243 = vunpack.c.0.s8 %v242
    %v244 = vlaneseq
    %v245 = vshrl.u32 %v244, 7
    %v246 = vsub.s32 %v243, %v245
    %v247 = vrot.slane %v239, %v246
    %v249 = vunpack.c.l.s4 1983009808
    %v250 = vunpack.c.0.s8 %v249
    %v251 = vlaneseq
    %v252 = vshrl.u32 %v251, 7
    %v253 = vsub.s32 %v250, %v252
    %v254 = vrot.slane %v240, %v253
    %v255 = vcombine.low %v247, %v254
    %v256 = vcombine.low %v65, %v66
    %v257 = vcombine.low %v67, %v68
    %v259 = vunpack.c.l.s4 1983009808
    %v260 = vunpack.c.0.s8 %v259
    %v261 = vlaneseq
    %v262 = vshrl.u32 %v261, 7
    %v263 = vsub.s32 %v260, %v262
    %v264 = vrot.slane %v256, %v263
    %v266 = vunpack.c.l.s4 1983009808
    %v267 = vunpack.c.0.s8 %v266
    %v268 = vlaneseq
    %v269 = vshrl.u32 %v268, 7
    %v270 = vsub.s32 %v267, %v269
    %v271 = vrot.slane %v257, %v270
    %v272 = vcombine.low %v264, %v271
    %v273 = vcombine.low %v69, %v70
    %v274 = vcombine.low %v71, %v72
    %v276 = vunpack.c.l.s4 1983009808
    %v277 = vunpack.c.0.s8 %v276
    %v278 = vlaneseq
    %v279 = vshrl.u32 %v278, 7
    %v280 = vsub.s32 %v277, %v279
    %v281 = vrot.slane %v273, %v280
    %v283 = vunpack.c.l.s4 1983009808
    %v284 = vunpack.c.0.s8 %v283
    %v285 = vlaneseq
    %v286 = vshrl.u32 %v285, 7
    %v287 = vsub.s32 %v284, %v286
    %v288 = vrot.slane %v274, %v287
    %v289 = vcombine.low %v281, %v288
    %v290 = vcombine.low %v73, %v74
    %v291 = vcombine.low %v75, %v76
    %v293 = vunpack.c.l.s4 1983009808
    %v294 = vunpack.c.0.s8 %v293
    %v295 = vlaneseq
    %v296 = vshrl.u32 %v295, 7
    %v297 = vsub.s32 %v294, %v296
    %v298 = vrot.slane %v290, %v297
    %v300 = vunpack.c.l.s4 1983009808
    %v301 = vunpack.c.0.s8 %v300
    %v302 = vlaneseq
    %v303 = vshrl.u32 %v302, 7
    %v304 = vsub.s32 %v301, %v303
    %v305 = vrot.slane %v291, %v304
    %v306 = vcombine.low %v298, %v305
    %v307 = vcombine.low %v77, %v78
    %v308 = vcombine.low %v79, %v80
    %v310 = vunpack.c.l.s4 1983009808
    %v311 = vunpack.c.0.s8 %v310
    %v312 = vlaneseq
    %v313 = vshrl.u32 %v312, 7
    %v314 = vsub.s32 %v311, %v313
    %v315 = vrot.slane %v307, %v314
    %v317 = vunpack.c.l.s4 1983009808
    %v318 = vunpack.c.0.s8 %v317
    %v319 = vlaneseq
    %v320 = vshrl.u32 %v319, 7
    %v321 = vsub.s32 %v318, %v320
    %v322 = vrot.slane %v308, %v321
    %v323 = vcombine.low %v315, %v322
    %v324 = vcombine.low %v81, %v82
    %v325 = vcombine.low %v83, %v84
    %v327 = vunpack.c.l.s4 1983009808
    %v328 = vunpack.c.0.s8 %v327
    %v329 = vlaneseq
    %v330 = vshrl.u32 %v329, 7
    %v331 = vsub.s32 %v328, %v330
    %v332 = vrot.slane %v324, %v331
    %v334 = vunpack.c.l.s4 1983009808
    %v335 = vunpack.c.0.s8 %v334
    %v336 = vlaneseq
    %v337 = vshrl.u32 %v336, 7
    %v338 = vsub.s32 %v335, %v337
    %v339 = vrot.slane %v325, %v338
    %v340 = vcombine.low %v332, %v339
    %v341 = vcombine.low %v85, %v86
    %v343 = vunpack.c.l.s4 1983009808
    %v344 = vunpack.c.0.s8 %v343
    %v345 = vlaneseq
    %v346 = vshrl.u32 %v345, 7
    %v347 = vsub.s32 %v344, %v346
    %v348 = vrot.slane %v341, %v347
    %v362 = vpack.c.bf16 %v170, %v153
    %v363 = vpack.c.bf16 %v204, %v187
    %v364 = vpack.c.bf16 %v238, %v221
    %v365 = vpack.c.bf16 %v272, %v255
    %v366 = vpack.c.bf16 %v306, %v289
    %v367 = vpack.c.bf16 %v340, %v323
    %v368 = vpack.c.bf16 %v348, %v348
    %v369 = vld [vmem:[%s1] sm:$0xff]
    %v370 = vld [vmem:[%s1 + $0x8] sm:$0x3]
    %v371 = vpack.c.bf16 %v370, %v369
    %v372 = vld [vmem:[%s2] sm:$0x1]
    %v374 = vlaneseq
    %v375 = vshrl.u32 %v374, 7
    %v376 = vsub.s32 0, %v375
    %v377 = vrot.slane %v372, %v376
    %vm379 = vcmask 80896
    %v381 = vsel %vm379, %v362, 0
    %v384 = vsel %vm379, %v363, 0
    %v387 = vsel %vm379, %v364, 0
    %v390 = vsel %vm379, %v365, 0
    %v393 = vsel %vm379, %v366, 0
    %v396 = vsel %vm379, %v367, 0
    %v399 = vsel %vm379, %v368, 0
    %vm401 = vcmask 1044480
    %v403 = vsel %vm401, %v371, 0
    %405 = vmatprep.subr.bf16.mxu0 0
    %406 = vmatpush1.bf16.msra.mxu0 %v403
    %407 = vmatprep.subr.bf16.mxu0 0
    %408 = vmatpush1.bf16.msra.mxu0 0
    %409 = vmatprep.subr.bf16.mxu0 0
    %410 = vmatpush1.bf16.msra.mxu0 0
    %411 = vmatprep.subr.bf16.mxu0 0
    %412 = vmatpush1.bf16.msra.mxu0 0
    %413 = vmatprep.subr.bf16.mxu0 0
    %414 = vmatpush1.bf16.msra.mxu0 0
    %415 = vmatprep.subr.bf16.mxu0 0
    %416 = vmatpush1.bf16.msra.mxu0 0
    %417 = vmatprep.subr.bf16.mxu0 0
    %418 = vmatpush1.bf16.msra.mxu0 0
    %419 = vmatprep.subr.bf16.mxu0 0
    %420 = vmatpush1.bf16.msra.mxu0 0
    %421 = vmatprep.subr.bf16.mxu0 0
    %422 = vmatpush1.bf16.msra.mxu0 0
    %423 = vmatprep.subr.bf16.mxu0 0
    %424 = vmatpush1.bf16.msra.mxu0 0
    %425 = vmatprep.subr.bf16.mxu0 0
    %426 = vmatpush1.bf16.msra.mxu0 0
    %427 = vmatprep.subr.bf16.mxu0 0
    %428 = vmatpush1.bf16.msra.mxu0 0
    %429 = vmatprep.subr.bf16.mxu0 0
    %430 = vmatpush1.bf16.msra.mxu0 0
    %431 = vmatprep.subr.bf16.mxu0 0
    %432 = vmatpush1.bf16.msra.mxu0 0
    %433 = vmatprep.subr.bf16.mxu0 0
    %434 = vmatpush1.bf16.msra.mxu0 0
    %435 = vmatprep.subr.bf16.mxu0 0
    %436 = vmatpush1.bf16.msra.mxu0 0
    %437 = vmatprep.mubr.bf16.mxu0 0
    %438 = vmatmul.mubr.bf16.gmra.mrb[0].mxu0 %v381
    %v439 = vpop.f32.mrb[0].mxu0
    %v440 = vadd.f32 %v377, %v439
    %v441 = vpop.f32.mrb[0].mxu0
    %v442 = vpop.f32.mrb[0].mxu0
    %v443 = vadd.f32 %v377, %v442
    %v444 = vpop.f32.mrb[0].mxu0
    %445 = vmatprep.mubr.bf16.mxu0 0
    %446 = vmatmul.mubr.bf16.gmra.mrb[0].mxu0 %v384
    %v447 = vpop.f32.mrb[0].mxu0
    %v448 = vadd.f32 %v377, %v447
    %v449 = vpop.f32.mrb[0].mxu0
    %v450 = vpop.f32.mrb[0].mxu0
    %v451 = vadd.f32 %v377, %v450
    %v452 = vpop.f32.mrb[0].mxu0
    %453 = vmatprep.mubr.bf16.mxu0 0
    %454 = vmatmul.mubr.bf16.gmra.mrb[0].mxu0 %v387
    %v455 = vpop.f32.mrb[0].mxu0
    %v456 = vadd.f32 %v377, %v455
    %v457 = vpop.f32.mrb[0].mxu0
    %v458 = vpop.f32.mrb[0].mxu0
    %v459 = vadd.f32 %v377, %v458
    %v460 = vpop.f32.mrb[0].mxu0
    %461 = vmatprep.mubr.bf16.mxu0 0
    %462 = vmatmul.mubr.bf16.gmra.mrb[0].mxu0 %v390
    %v463 = vpop.f32.mrb[0].mxu0
    %v464 = vadd.f32 %v377, %v463
    %v465 = vpop.f32.mrb[0].mxu0
    %v466 = vpop.f32.mrb[0].mxu0
    %v467 = vadd.f32 %v377, %v466
    %v468 = vpop.f32.mrb[0].mxu0
    %469 = vmatprep.mubr.bf16.mxu0 0
    %470 = vmatmul.mubr.bf16.gmra.mrb[0].mxu0 %v393
    %v471 = vpop.f32.mrb[0].mxu0
    %v472 = vadd.f32 %v377, %v471
    %v473 = vpop.f32.mrb[0].mxu0
    %v474 = vpop.f32.mrb[0].mxu0
    %v475 = vadd.f32 %v377, %v474
    %v476 = vpop.f32.mrb[0].mxu0
    %477 = vmatprep.mubr.bf16.mxu0 0
    %478 = vmatmul.mubr.bf16.gmra.mrb[0].mxu0 %v396
    %v479 = vpop.f32.mrb[0].mxu0
    %v480 = vadd.f32 %v377, %v479
    %v481 = vpop.f32.mrb[0].mxu0
    %v482 = vpop.f32.mrb[0].mxu0
    %v483 = vadd.f32 %v377, %v482
    %v484 = vpop.f32.mrb[0].mxu0
    %485 = vmatprep.mubr.bf16.mxu0 0
    %486 = vmatmul.mubr.bf16.gmra.mrb[0].mxu0 %v399
    %v487 = vpop.f32.mrb[0].mxu0
    %v488 = vadd.f32 %v377, %v487
    %v489 = vpop.f32.mrb[0].mxu0
    %v490 = vpop.f32.mrb[0].mxu0
    %v491 = vpop.f32.mrb[0].mxu0
    %492 = vdwg.mxu0
    %v493 = vmax.f32 %v440, 0.0
    %v494 = vmax.f32 %v443, 0.0
    %v495 = vmax.f32 %v448, 0.0
    %v496 = vmax.f32 %v451, 0.0
    %v497 = vmax.f32 %v456, 0.0
    %v498 = vmax.f32 %v459, 0.0
    %v499 = vmax.f32 %v464, 0.0
    %v500 = vmax.f32 %v467, 0.0
    %v501 = vmax.f32 %v472, 0.0
    %v502 = vmax.f32 %v475, 0.0
    %v503 = vmax.f32 %v480, 0.0
    %v504 = vmax.f32 %v483, 0.0
    %v505 = vmax.f32 %v488, 0.0
    %v519 = vcombine.high %v493, %v493
    %v521 = vunpack.c.l.s4 1983009808
    %v522 = vunpack.c.0.s8 %v521
    %v523 = vlaneseq
    %v524 = vshrl.u32 %v523, 7
    %v525 = vsub.s32 %v522, %v524
    %v526 = vrot.slane %v493, %v525
    %v528 = vunpack.c.l.s4 1983009808
    %v529 = vunpack.c.0.s8 %v528
    %v530 = vlaneseq
    %v531 = vshrl.u32 %v530, 7
    %v532 = vsub.s32 %v529, %v531
    %v533 = vrot.slane %v519, %v532
    %v534 = vcombine.high %v526, %v526
    %v535 = vcombine.high %v533, %v533
    %v536 = vcombine.high %v494, %v494
    %v538 = vunpack.c.l.s4 1983009808
    %v539 = vunpack.c.0.s8 %v538
    %v540 = vlaneseq
    %v541 = vshrl.u32 %v540, 7
    %v542 = vsub.s32 %v539, %v541
    %v543 = vrot.slane %v494, %v542
    %v545 = vunpack.c.l.s4 1983009808
    %v546 = vunpack.c.0.s8 %v545
    %v547 = vlaneseq
    %v548 = vshrl.u32 %v547, 7
    %v549 = vsub.s32 %v546, %v548
    %v550 = vrot.slane %v536, %v549
    %v551 = vcombine.high %v543, %v543
    %v552 = vcombine.high %v550, %v550
    %v553 = vcombine.high %v495, %v495
    %v555 = vunpack.c.l.s4 1983009808
    %v556 = vunpack.c.0.s8 %v555
    %v557 = vlaneseq
    %v558 = vshrl.u32 %v557, 7
    %v559 = vsub.s32 %v556, %v558
    %v560 = vrot.slane %v495, %v559
    %v562 = vunpack.c.l.s4 1983009808
    %v563 = vunpack.c.0.s8 %v562
    %v564 = vlaneseq
    %v565 = vshrl.u32 %v564, 7
    %v566 = vsub.s32 %v563, %v565
    %v567 = vrot.slane %v553, %v566
    %v568 = vcombine.high %v560, %v560
    %v569 = vcombine.high %v567, %v567
    %v570 = vcombine.high %v496, %v496
    %v572 = vunpack.c.l.s4 1983009808
    %v573 = vunpack.c.0.s8 %v572
    %v574 = vlaneseq
    %v575 = vshrl.u32 %v574, 7
    %v576 = vsub.s32 %v573, %v575
    %v577 = vrot.slane %v496, %v576
    %v579 = vunpack.c.l.s4 1983009808
    %v580 = vunpack.c.0.s8 %v579
    %v581 = vlaneseq
    %v582 = vshrl.u32 %v581, 7
    %v583 = vsub.s32 %v580, %v582
    %v584 = vrot.slane %v570, %v583
    %v585 = vcombine.high %v577, %v577
    %v586 = vcombine.high %v584, %v584
    %v587 = vcombine.high %v497, %v497
    %v589 = vunpack.c.l.s4 1983009808
    %v590 = vunpack.c.0.s8 %v589
    %v591 = vlaneseq
    %v592 = vshrl.u32 %v591, 7
    %v593 = vsub.s32 %v590, %v592
    %v594 = vrot.slane %v497, %v593
    %v596 = vunpack.c.l.s4 1983009808
    %v597 = vunpack.c.0.s8 %v596
    %v598 = vlaneseq
    %v599 = vshrl.u32 %v598, 7
    %v600 = vsub.s32 %v597, %v599
    %v601 = vrot.slane %v587, %v600
    %v602 = vcombine.high %v594, %v594
    %v603 = vcombine.high %v601, %v601
    %v604 = vcombine.high %v498, %v498
    %v606 = vunpack.c.l.s4 1983009808
    %v607 = vunpack.c.0.s8 %v606
    %v608 = vlaneseq
    %v609 = vshrl.u32 %v608, 7
    %v610 = vsub.s32 %v607, %v609
    %v611 = vrot.slane %v498, %v610
    %v613 = vunpack.c.l.s4 1983009808
    %v614 = vunpack.c.0.s8 %v613
    %v615 = vlaneseq
    %v616 = vshrl.u32 %v615, 7
    %v617 = vsub.s32 %v614, %v616
    %v618 = vrot.slane %v604, %v617
    %v619 = vcombine.high %v611, %v611
    %v620 = vcombine.high %v618, %v618
    %v621 = vcombine.high %v499, %v499
    %v623 = vunpack.c.l.s4 1983009808
    %v624 = vunpack.c.0.s8 %v623
    %v625 = vlaneseq
    %v626 = vshrl.u32 %v625, 7
    %v627 = vsub.s32 %v624, %v626
    %v628 = vrot.slane %v499, %v627
    %v630 = vunpack.c.l.s4 1983009808
    %v631 = vunpack.c.0.s8 %v630
    %v632 = vlaneseq
    %v633 = vshrl.u32 %v632, 7
    %v634 = vsub.s32 %v631, %v633
    %v635 = vrot.slane %v621, %v634
    %v636 = vcombine.high %v628, %v628
    %v637 = vcombine.high %v635, %v635
    %v638 = vcombine.high %v500, %v500
    %v640 = vunpack.c.l.s4 1983009808
    %v641 = vunpack.c.0.s8 %v640
    %v642 = vlaneseq
    %v643 = vshrl.u32 %v642, 7
    %v644 = vsub.s32 %v641, %v643
    %v645 = vrot.slane %v500, %v644
    %v647 = vunpack.c.l.s4 1983009808
    %v648 = vunpack.c.0.s8 %v647
    %v649 = vlaneseq
    %v650 = vshrl.u32 %v649, 7
    %v651 = vsub.s32 %v648, %v650
    %v652 = vrot.slane %v638, %v651
    %v653 = vcombine.high %v645, %v645
    %v654 = vcombine.high %v652, %v652
    %v655 = vcombine.high %v501, %v501
    %v657 = vunpack.c.l.s4 1983009808
    %v658 = vunpack.c.0.s8 %v657
    %v659 = vlaneseq
    %v660 = vshrl.u32 %v659, 7
    %v661 = vsub.s32 %v658, %v660
    %v662 = vrot.slane %v501, %v661
    %v664 = vunpack.c.l.s4 1983009808
    %v665 = vunpack.c.0.s8 %v664
    %v666 = vlaneseq
    %v667 = vshrl.u32 %v666, 7
    %v668 = vsub.s32 %v665, %v667
    %v669 = vrot.slane %v655, %v668
    %v670 = vcombine.high %v662, %v662
    %v671 = vcombine.high %v669, %v669
    %v672 = vcombine.high %v502, %v502
    %v674 = vunpack.c.l.s4 1983009808
    %v675 = vunpack.c.0.s8 %v674
    %v676 = vlaneseq
    %v677 = vshrl.u32 %v676, 7
    %v678 = vsub.s32 %v675, %v677
    %v679 = vrot.slane %v502, %v678
    %v681 = vunpack.c.l.s4 1983009808
    %v682 = vunpack.c.0.s8 %v681
    %v683 = vlaneseq
    %v684 = vshrl.u32 %v683, 7
    %v685 = vsub.s32 %v682, %v684
    %v686 = vrot.slane %v672, %v685
    %v687 = vcombine.high %v679, %v679
    %v688 = vcombine.high %v686, %v686
    %v689 = vcombine.high %v503, %v503
    %v691 = vunpack.c.l.s4 1983009808
    %v692 = vunpack.c.0.s8 %v691
    %v693 = vlaneseq
    %v694 = vshrl.u32 %v693, 7
    %v695 = vsub.s32 %v692, %v694
    %v696 = vrot.slane %v503, %v695
    %v698 = vunpack.c.l.s4 1983009808
    %v699 = vunpack.c.0.s8 %v698
    %v700 = vlaneseq
    %v701 = vshrl.u32 %v700, 7
    %v702 = vsub.s32 %v699, %v701
    %v703 = vrot.slane %v689, %v702
    %v704 = vcombine.high %v696, %v696
    %v705 = vcombine.high %v703, %v703
    %v706 = vcombine.high %v504, %v504
    %v708 = vunpack.c.l.s4 1983009808
    %v709 = vunpack.c.0.s8 %v708
    %v710 = vlaneseq
    %v711 = vshrl.u32 %v710, 7
    %v712 = vsub.s32 %v709, %v711
    %v713 = vrot.slane %v504, %v712
    %v715 = vunpack.c.l.s4 1983009808
    %v716 = vunpack.c.0.s8 %v715
    %v717 = vlaneseq
    %v718 = vshrl.u32 %v717, 7
    %v719 = vsub.s32 %v716, %v718
    %v720 = vrot.slane %v706, %v719
    %v721 = vcombine.high %v713, %v713
    %v722 = vcombine.high %v720, %v720
    %v724 = vunpack.c.l.s4 1983009808
    %v725 = vunpack.c.0.s8 %v724
    %v726 = vlaneseq
    %v727 = vshrl.u32 %v726, 7
    %v728 = vsub.s32 %v725, %v727
    %v729 = vrot.slane %v505, %v728
    %v730 = vcombine.high %v729, %v729
    %v781 = vmax.f32 %v526, %v534
    %v782 = vmax.f32 %v533, %v535
    %v783 = vmax.f32 %v543, %v551
    %v784 = vmax.f32 %v550, %v552
    %v785 = vmax.f32 %v560, %v568
    %v786 = vmax.f32 %v567, %v569
    %v787 = vmax.f32 %v577, %v585
    %v788 = vmax.f32 %v584, %v586
    %v789 = vmax.f32 %v594, %v602
    %v790 = vmax.f32 %v601, %v603
    %v791 = vmax.f32 %v611, %v619
    %v792 = vmax.f32 %v618, %v620
    %v793 = vmax.f32 %v628, %v636
    %v794 = vmax.f32 %v635, %v637
    %v795 = vmax.f32 %v645, %v653
    %v796 = vmax.f32 %v652, %v654
    %v797 = vmax.f32 %v662, %v670
    %v798 = vmax.f32 %v669, %v671
    %v799 = vmax.f32 %v679, %v687
    %v800 = vmax.f32 %v686, %v688
    %v801 = vmax.f32 %v696, %v704
    %v802 = vmax.f32 %v703, %v705
    %v803 = vmax.f32 %v713, %v721
    %v804 = vmax.f32 %v720, %v722
    %v805 = vmax.f32 %v729, %v730
    %831 = vrot.lane.b32.xlu0 0.0, 64
    %v832 = vpop.permute.xlu0 %831
    %833 = vrot.lane.b32.xlu0 %v781, 64
    %v834 = vpop.permute.xlu0 %833
    %835 = vrot.lane.b32.xlu0 %v782, 64
    %v836 = vpop.permute.xlu0 %835
    %837 = vrot.lane.b32.xlu0 %v783, 64
    %v838 = vpop.permute.xlu0 %837
    %839 = vrot.lane.b32.xlu0 %v784, 64
    %v840 = vpop.permute.xlu0 %839
    %841 = vrot.lane.b32.xlu0 %v785, 64
    %v842 = vpop.permute.xlu0 %841
    %843 = vrot.lane.b32.xlu0 %v786, 64
    %v844 = vpop.permute.xlu0 %843
    %845 = vrot.lane.b32.xlu0 %v787, 64
    %v846 = vpop.permute.xlu0 %845
    %847 = vrot.lane.b32.xlu0 %v788, 64
    %v848 = vpop.permute.xlu0 %847
    %849 = vrot.lane.b32.xlu0 %v789, 64
    %v850 = vpop.permute.xlu0 %849
    %851 = vrot.lane.b32.xlu0 %v790, 64
    %v852 = vpop.permute.xlu0 %851
    %853 = vrot.lane.b32.xlu0 %v791, 64
    %v854 = vpop.permute.xlu0 %853
    %855 = vrot.lane.b32.xlu0 %v792, 64
    %v856 = vpop.permute.xlu0 %855
    %857 = vrot.lane.b32.xlu0 %v793, 64
    %v858 = vpop.permute.xlu0 %857
    %859 = vrot.lane.b32.xlu0 %v794, 64
    %v860 = vpop.permute.xlu0 %859
    %861 = vrot.lane.b32.xlu0 %v795, 64
    %v862 = vpop.permute.xlu0 %861
    %863 = vrot.lane.b32.xlu0 %v796, 64
    %v864 = vpop.permute.xlu0 %863
    %865 = vrot.lane.b32.xlu0 %v797, 64
    %v866 = vpop.permute.xlu0 %865
    %867 = vrot.lane.b32.xlu0 %v798, 64
    %v868 = vpop.permute.xlu0 %867
    %869 = vrot.lane.b32.xlu0 %v799, 64
    %v870 = vpop.permute.xlu0 %869
    %871 = vrot.lane.b32.xlu0 %v800, 64
    %v872 = vpop.permute.xlu0 %871
    %873 = vrot.lane.b32.xlu0 %v801, 64
    %v874 = vpop.permute.xlu0 %873
    %875 = vrot.lane.b32.xlu0 %v802, 64
    %v876 = vpop.permute.xlu0 %875
    %877 = vrot.lane.b32.xlu0 %v803, 64
    %v878 = vpop.permute.xlu0 %877
    %879 = vrot.lane.b32.xlu0 %v804, 64
    %v880 = vpop.permute.xlu0 %879
    %907 = vrot.lane.b32.xlu0 %v805, 64
    %v908 = vpop.permute.xlu0 %907
    %vm910 = vcmask 523264
    %v911 = vsel %vm910, 0.0, %v832
    %v912 = vsel %vm910, 0.0, %v834
    %v913 = vsel %vm910, %v781, %v836
    %v914 = vsel %vm910, %v782, %v838
    %v915 = vsel %vm910, %v783, %v840
    %v916 = vsel %vm910, %v784, %v842
    %v917 = vsel %vm910, %v785, %v844
    %v918 = vsel %vm910, %v786, %v846
    %v919 = vsel %vm910, %v787, %v848
    %v920 = vsel %vm910, %v788, %v850
    %v921 = vsel %vm910, %v789, %v852
    %v922 = vsel %vm910, %v790, %v854
    %v923 = vsel %vm910, %v791, %v856
    %v924 = vsel %vm910, %v792, %v858
    %v925 = vsel %vm910, %v793, %v860
    %v926 = vsel %vm910, %v794, %v862
    %v927 = vsel %vm910, %v795, %v864
    %v928 = vsel %vm910, %v796, %v866
    %v929 = vsel %vm910, %v797, %v868
    %v930 = vsel %vm910, %v798, %v870
    %v931 = vsel %vm910, %v799, %v872
    %v932 = vsel %vm910, %v800, %v874
    %v933 = vsel %vm910, %v801, %v876
    %v934 = vsel %vm910, %v802, %v878
    %v935 = vsel %vm910, %v803, %v880
    %v936 = vsel %vm910, %v804, %v908
    %v937 = vsel %vm910, %v805, %v832
    %v965 = vcombine.low %v911, %v913
    %v967 = vunpack.c.l.s4 1983009808
    %v968 = vunpack.c.0.s8 %v967
    %v969 = vlaneseq
    %v970 = vshrl.u32 %v969, 7
    %v971 = vsub.s32 %v968, %v970
    %v972 = vrot.slane %v965, %v971
    %v974 = vunpack.c.l.s4 1983009808
    %v975 = vunpack.c.0.s8 %v974
    %v976 = vlaneseq
    %v977 = vshrl.u32 %v976, 7
    %v978 = vsub.s32 %v975, %v977
    %v979 = vrot.slane %v783, %v978
    %v980 = vcombine.low %v972, %v979
    %v981 = vcombine.low %v912, %v914
    %v983 = vunpack.c.l.s4 1983009808
    %v984 = vunpack.c.0.s8 %v983
    %v985 = vlaneseq
    %v986 = vshrl.u32 %v985, 7
    %v987 = vsub.s32 %v984, %v986
    %v988 = vrot.slane %v981, %v987
    %v990 = vunpack.c.l.s4 1983009808
    %v991 = vunpack.c.0.s8 %v990
    %v992 = vlaneseq
    %v993 = vshrl.u32 %v992, 7
    %v994 = vsub.s32 %v991, %v993
    %v995 = vrot.slane %v784, %v994
    %v996 = vcombine.low %v988, %v995
    %v997 = vcombine.low %v913, %v915
    %v999 = vunpack.c.l.s4 1983009808
    %v1000 = vunpack.c.0.s8 %v999
    %v1001 = vlaneseq
    %v1002 = vshrl.u32 %v1001, 7
    %v1003 = vsub.s32 %v1000, %v1002
    %v1004 = vrot.slane %v997, %v1003
    %v1006 = vunpack.c.l.s4 1983009808
    %v1007 = vunpack.c.0.s8 %v1006
    %v1008 = vlaneseq
    %v1009 = vshrl.u32 %v1008, 7
    %v1010 = vsub.s32 %v1007, %v1009
    %v1011 = vrot.slane %v785, %v1010
    %v1012 = vcombine.low %v1004, %v1011
    %v1013 = vcombine.low %v914, %v916
    %v1015 = vunpack.c.l.s4 1983009808
    %v1016 = vunpack.c.0.s8 %v1015
    %v1017 = vlaneseq
    %v1018 = vshrl.u32 %v1017, 7
    %v1019 = vsub.s32 %v1016, %v1018
    %v1020 = vrot.slane %v1013, %v1019
    %v1022 = vunpack.c.l.s4 1983009808
    %v1023 = vunpack.c.0.s8 %v1022
    %v1024 = vlaneseq
    %v1025 = vshrl.u32 %v1024, 7
    %v1026 = vsub.s32 %v1023, %v1025
    %v1027 = vrot.slane %v786, %v1026
    %v1028 = vcombine.low %v1020, %v1027
    %v1029 = vcombine.low %v915, %v917
    %v1031 = vunpack.c.l.s4 1983009808
    %v1032 = vunpack.c.0.s8 %v1031
    %v1033 = vlaneseq
    %v1034 = vshrl.u32 %v1033, 7
    %v1035 = vsub.s32 %v1032, %v1034
    %v1036 = vrot.slane %v1029, %v1035
    %v1038 = vunpack.c.l.s4 1983009808
    %v1039 = vunpack.c.0.s8 %v1038
    %v1040 = vlaneseq
    %v1041 = vshrl.u32 %v1040, 7
    %v1042 = vsub.s32 %v1039, %v1041
    %v1043 = vrot.slane %v787, %v1042
    %v1044 = vcombine.low %v1036, %v1043
    %v1045 = vcombine.low %v916, %v918
    %v1047 = vunpack.c.l.s4 1983009808
    %v1048 = vunpack.c.0.s8 %v1047
    %v1049 = vlaneseq
    %v1050 = vshrl.u32 %v1049, 7
    %v1051 = vsub.s32 %v1048, %v1050
    %v1052 = vrot.slane %v1045, %v1051
    %v1054 = vunpack.c.l.s4 1983009808
    %v1055 = vunpack.c.0.s8 %v1054
    %v1056 = vlaneseq
    %v1057 = vshrl.u32 %v1056, 7
    %v1058 = vsub.s32 %v1055, %v1057
    %v1059 = vrot.slane %v788, %v1058
    %v1060 = vcombine.low %v1052, %v1059
    %v1061 = vcombine.low %v917, %v919
    %v1063 = vunpack.c.l.s4 1983009808
    %v1064 = vunpack.c.0.s8 %v1063
    %v1065 = vlaneseq
    %v1066 = vshrl.u32 %v1065, 7
    %v1067 = vsub.s32 %v1064, %v1066
    %v1068 = vrot.slane %v1061, %v1067
    %v1070 = vunpack.c.l.s4 1983009808
    %v1071 = vunpack.c.0.s8 %v1070
    %v1072 = vlaneseq
    %v1073 = vshrl.u32 %v1072, 7
    %v1074 = vsub.s32 %v1071, %v1073
    %v1075 = vrot.slane %v789, %v1074
    %v1076 = vcombine.low %v1068, %v1075
    %v1077 = vcombine.low %v918, %v920
    %v1079 = vunpack.c.l.s4 1983009808
    %v1080 = vunpack.c.0.s8 %v1079
    %v1081 = vlaneseq
    %v1082 = vshrl.u32 %v1081, 7
    %v1083 = vsub.s32 %v1080, %v1082
    %v1084 = vrot.slane %v1077, %v1083
    %v1086 = vunpack.c.l.s4 1983009808
    %v1087 = vunpack.c.0.s8 %v1086
    %v1088 = vlaneseq
    %v1089 = vshrl.u32 %v1088, 7
    %v1090 = vsub.s32 %v1087, %v1089
    %v1091 = vrot.slane %v790, %v1090
    %v1092 = vcombine.low %v1084, %v1091
    %v1093 = vcombine.low %v919, %v921
    %v1095 = vunpack.c.l.s4 1983009808
    %v1096 = vunpack.c.0.s8 %v1095
    %v1097 = vlaneseq
    %v1098 = vshrl.u32 %v1097, 7
    %v1099 = vsub.s32 %v1096, %v1098
    %v1100 = vrot.slane %v1093, %v1099
    %v1102 = vunpack.c.l.s4 1983009808
    %v1103 = vunpack.c.0.s8 %v1102
    %v1104 = vlaneseq
    %v1105 = vshrl.u32 %v1104, 7
    %v1106 = vsub.s32 %v1103, %v1105
    %v1107 = vrot.slane %v791, %v1106
    %v1108 = vcombine.low %v1100, %v1107
    %v1109 = vcombine.low %v920, %v922
    %v1111 = vunpack.c.l.s4 1983009808
    %v1112 = vunpack.c.0.s8 %v1111
    %v1113 = vlaneseq
    %v1114 = vshrl.u32 %v1113, 7
    %v1115 = vsub.s32 %v1112, %v1114
    %v1116 = vrot.slane %v1109, %v1115
    %v1118 = vunpack.c.l.s4 1983009808
    %v1119 = vunpack.c.0.s8 %v1118
    %v1120 = vlaneseq
    %v1121 = vshrl.u32 %v1120, 7
    %v1122 = vsub.s32 %v1119, %v1121
    %v1123 = vrot.slane %v792, %v1122
    %v1124 = vcombine.low %v1116, %v1123
    %v1125 = vcombine.low %v921, %v923
    %v1127 = vunpack.c.l.s4 1983009808
    %v1128 = vunpack.c.0.s8 %v1127
    %v1129 = vlaneseq
    %v1130 = vshrl.u32 %v1129, 7
    %v1131 = vsub.s32 %v1128, %v1130
    %v1132 = vrot.slane %v1125, %v1131
    %v1134 = vunpack.c.l.s4 1983009808
    %v1135 = vunpack.c.0.s8 %v1134
    %v1136 = vlaneseq
    %v1137 = vshrl.u32 %v1136, 7
    %v1138 = vsub.s32 %v1135, %v1137
    %v1139 = vrot.slane %v793, %v1138
    %v1140 = vcombine.low %v1132, %v1139
    %v1141 = vcombine.low %v922, %v924
    %v1143 = vunpack.c.l.s4 1983009808
    %v1144 = vunpack.c.0.s8 %v1143
    %v1145 = vlaneseq
    %v1146 = vshrl.u32 %v1145, 7
    %v1147 = vsub.s32 %v1144, %v1146
    %v1148 = vrot.slane %v1141, %v1147
    %v1150 = vunpack.c.l.s4 1983009808
    %v1151 = vunpack.c.0.s8 %v1150
    %v1152 = vlaneseq
    %v1153 = vshrl.u32 %v1152, 7
    %v1154 = vsub.s32 %v1151, %v1153
    %v1155 = vrot.slane %v794, %v1154
    %v1156 = vcombine.low %v1148, %v1155
    %v1157 = vcombine.low %v923, %v925
    %v1159 = vunpack.c.l.s4 1983009808
    %v1160 = vunpack.c.0.s8 %v1159
    %v1161 = vlaneseq
    %v1162 = vshrl.u32 %v1161, 7
    %v1163 = vsub.s32 %v1160, %v1162
    %v1164 = vrot.slane %v1157, %v1163
    %v1166 = vunpack.c.l.s4 1983009808
    %v1167 = vunpack.c.0.s8 %v1166
    %v1168 = vlaneseq
    %v1169 = vshrl.u32 %v1168, 7
    %v1170 = vsub.s32 %v1167, %v1169
    %v1171 = vrot.slane %v795, %v1170
    %v1172 = vcombine.low %v1164, %v1171
    %v1173 = vcombine.low %v924, %v926
    %v1175 = vunpack.c.l.s4 1983009808
    %v1176 = vunpack.c.0.s8 %v1175
    %v1177 = vlaneseq
    %v1178 = vshrl.u32 %v1177, 7
    %v1179 = vsub.s32 %v1176, %v1178
    %v1180 = vrot.slane %v1173, %v1179
    %v1182 = vunpack.c.l.s4 1983009808
    %v1183 = vunpack.c.0.s8 %v1182
    %v1184 = vlaneseq
    %v1185 = vshrl.u32 %v1184, 7
    %v1186 = vsub.s32 %v1183, %v1185
    %v1187 = vrot.slane %v796, %v1186
    %v1188 = vcombine.low %v1180, %v1187
    %v1189 = vcombine.low %v925, %v927
    %v1191 = vunpack.c.l.s4 1983009808
    %v1192 = vunpack.c.0.s8 %v1191
    %v1193 = vlaneseq
    %v1194 = vshrl.u32 %v1193, 7
    %v1195 = vsub.s32 %v1192, %v1194
    %v1196 = vrot.slane %v1189, %v1195
    %v1198 = vunpack.c.l.s4 1983009808
    %v1199 = vunpack.c.0.s8 %v1198
    %v1200 = vlaneseq
    %v1201 = vshrl.u32 %v1200, 7
    %v1202 = vsub.s32 %v1199, %v1201
    %v1203 = vrot.slane %v797, %v1202
    %v1204 = vcombine.low %v1196, %v1203
    %v1205 = vcombine.low %v926, %v928
    %v1207 = vunpack.c.l.s4 1983009808
    %v1208 = vunpack.c.0.s8 %v1207
    %v1209 = vlaneseq
    %v1210 = vshrl.u32 %v1209, 7
    %v1211 = vsub.s32 %v1208, %v1210
    %v1212 = vrot.slane %v1205, %v1211
    %v1214 = vunpack.c.l.s4 1983009808
    %v1215 = vunpack.c.0.s8 %v1214
    %v1216 = vlaneseq
    %v1217 = vshrl.u32 %v1216, 7
    %v1218 = vsub.s32 %v1215, %v1217
    %v1219 = vrot.slane %v798, %v1218
    %v1220 = vcombine.low %v1212, %v1219
    %v1221 = vcombine.low %v927, %v929
    %v1223 = vunpack.c.l.s4 1983009808
    %v1224 = vunpack.c.0.s8 %v1223
    %v1225 = vlaneseq
    %v1226 = vshrl.u32 %v1225, 7
    %v1227 = vsub.s32 %v1224, %v1226
    %v1228 = vrot.slane %v1221, %v1227
    %v1230 = vunpack.c.l.s4 1983009808
    %v1231 = vunpack.c.0.s8 %v1230
    %v1232 = vlaneseq
    %v1233 = vshrl.u32 %v1232, 7
    %v1234 = vsub.s32 %v1231, %v1233
    %v1235 = vrot.slane %v799, %v1234
    %v1236 = vcombine.low %v1228, %v1235
    %v1237 = vcombine.low %v928, %v930
    %v1239 = vunpack.c.l.s4 1983009808
    %v1240 = vunpack.c.0.s8 %v1239
    %v1241 = vlaneseq
    %v1242 = vshrl.u32 %v1241, 7
    %v1243 = vsub.s32 %v1240, %v1242
    %v1244 = vrot.slane %v1237, %v1243
    %v1246 = vunpack.c.l.s4 1983009808
    %v1247 = vunpack.c.0.s8 %v1246
    %v1248 = vlaneseq
    %v1249 = vshrl.u32 %v1248, 7
    %v1250 = vsub.s32 %v1247, %v1249
    %v1251 = vrot.slane %v800, %v1250
    %v1252 = vcombine.low %v1244, %v1251
    %v1253 = vcombine.low %v929, %v931
    %v1255 = vunpack.c.l.s4 1983009808
    %v1256 = vunpack.c.0.s8 %v1255
    %v1257 = vlaneseq
    %v1258 = vshrl.u32 %v1257, 7
    %v1259 = vsub.s32 %v1256, %v1258
    %v1260 = vrot.slane %v1253, %v1259
    %v1262 = vunpack.c.l.s4 1983009808
    %v1263 = vunpack.c.0.s8 %v1262
    %v1264 = vlaneseq
    %v1265 = vshrl.u32 %v1264, 7
    %v1266 = vsub.s32 %v1263, %v1265
    %v1267 = vrot.slane %v801, %v1266
    %v1268 = vcombine.low %v1260, %v1267
    %v1269 = vcombine.low %v930, %v932
    %v1271 = vunpack.c.l.s4 1983009808
    %v1272 = vunpack.c.0.s8 %v1271
    %v1273 = vlaneseq
    %v1274 = vshrl.u32 %v1273, 7
    %v1275 = vsub.s32 %v1272, %v1274
    %v1276 = vrot.slane %v1269, %v1275
    %v1278 = vunpack.c.l.s4 1983009808
    %v1279 = vunpack.c.0.s8 %v1278
    %v1280 = vlaneseq
    %v1281 = vshrl.u32 %v1280, 7
    %v1282 = vsub.s32 %v1279, %v1281
    %v1283 = vrot.slane %v802, %v1282
    %v1284 = vcombine.low %v1276, %v1283
    %v1285 = vcombine.low %v931, %v933
    %v1287 = vunpack.c.l.s4 1983009808
    %v1288 = vunpack.c.0.s8 %v1287
    %v1289 = vlaneseq
    %v1290 = vshrl.u32 %v1289, 7
    %v1291 = vsub.s32 %v1288, %v1290
    %v1292 = vrot.slane %v1285, %v1291
    %v1294 = vunpack.c.l.s4 1983009808
    %v1295 = vunpack.c.0.s8 %v1294
    %v1296 = vlaneseq
    %v1297 = vshrl.u32 %v1296, 7
    %v1298 = vsub.s32 %v1295, %v1297
    %v1299 = vrot.slane %v803, %v1298
    %v1300 = vcombine.low %v1292, %v1299
    %v1301 = vcombine.low %v932, %v934
    %v1303 = vunpack.c.l.s4 1983009808
    %v1304 = vunpack.c.0.s8 %v1303
    %v1305 = vlaneseq
    %v1306 = vshrl.u32 %v1305, 7
    %v1307 = vsub.s32 %v1304, %v1306
    %v1308 = vrot.slane %v1301, %v1307
    %v1310 = vunpack.c.l.s4 1983009808
    %v1311 = vunpack.c.0.s8 %v1310
    %v1312 = vlaneseq
    %v1313 = vshrl.u32 %v1312, 7
    %v1314 = vsub.s32 %v1311, %v1313
    %v1315 = vrot.slane %v804, %v1314
    %v1316 = vcombine.low %v1308, %v1315
    %v1317 = vcombine.low %v933, %v935
    %v1319 = vunpack.c.l.s4 1983009808
    %v1320 = vunpack.c.0.s8 %v1319
    %v1321 = vlaneseq
    %v1322 = vshrl.u32 %v1321, 7
    %v1323 = vsub.s32 %v1320, %v1322
    %v1324 = vrot.slane %v1317, %v1323
    %v1326 = vunpack.c.l.s4 1983009808
    %v1327 = vunpack.c.0.s8 %v1326
    %v1328 = vlaneseq
    %v1329 = vshrl.u32 %v1328, 7
    %v1330 = vsub.s32 %v1327, %v1329
    %v1331 = vrot.slane %v805, %v1330
    %v1332 = vcombine.low %v1324, %v1331
    %v1333 = vcombine.low %v934, %v936
    %v1335 = vunpack.c.l.s4 1983009808
    %v1336 = vunpack.c.0.s8 %v1335
    %v1337 = vlaneseq
    %v1338 = vshrl.u32 %v1337, 7
    %v1339 = vsub.s32 %v1336, %v1338
    %v1340 = vrot.slane %v1333, %v1339
    %v1342 = vunpack.c.l.s4 1983009808
    %v1343 = vunpack.c.0.s8 %v1342
    %v1344 = vlaneseq
    %v1345 = vshrl.u32 %v1344, 7
    %v1346 = vsub.s32 %v1343, %v1345
    %v1347 = vrot.slane 0.0, %v1346
    %v1348 = vcombine.low %v1340, %v1347
    %v1349 = vcombine.low %v935, %v937
    %v1351 = vunpack.c.l.s4 1983009808
    %v1352 = vunpack.c.0.s8 %v1351
    %v1353 = vlaneseq
    %v1354 = vshrl.u32 %v1353, 7
    %v1355 = vsub.s32 %v1352, %v1354
    %v1356 = vrot.slane %v1349, %v1355
    %v1357 = vcombine.low %v1356, %v1347
    %v1358 = vcombine.low %v980, %v996
    %v1359 = vcombine.high %v980, %v996
    %v1360 = vcombine.low %v1012, %v1028
    %v1361 = vcombine.high %v1012, %v1028
    %v1363 = vunpack.c.l.s4 1983009808
    %v1364 = vunpack.c.0.s8 %v1363
    %v1365 = vlaneseq
    %v1366 = vshrl.u32 %v1365, 7
    %v1367 = vsub.s32 %v1364, %v1366
    %v1368 = vrot.slane %v1358, %v1367
    %v1370 = vunpack.c.l.s4 1983009808
    %v1371 = vunpack.c.0.s8 %v1370
    %v1372 = vlaneseq
    %v1373 = vshrl.u32 %v1372, 7
    %v1374 = vsub.s32 %v1371, %v1373
    %v1375 = vrot.slane %v1359, %v1374
    %v1377 = vunpack.c.l.s4 1983009808
    %v1378 = vunpack.c.0.s8 %v1377
    %v1379 = vlaneseq
    %v1380 = vshrl.u32 %v1379, 7
    %v1381 = vsub.s32 %v1378, %v1380
    %v1382 = vrot.slane %v1360, %v1381
    %v1384 = vunpack.c.l.s4 1983009808
    %v1385 = vunpack.c.0.s8 %v1384
    %v1386 = vlaneseq
    %v1387 = vshrl.u32 %v1386, 7
    %v1388 = vsub.s32 %v1385, %v1387
    %v1389 = vrot.slane %v1361, %v1388
    %v1390 = vcombine.low %v1368, %v1382
    %v1391 = vcombine.high %v1368, %v1382
    %v1392 = vcombine.low %v1375, %v1389
    %v1393 = vcombine.low %v1044, %v1060
    %v1394 = vcombine.high %v1044, %v1060
    %v1395 = vcombine.low %v1076, %v1092
    %v1396 = vcombine.high %v1076, %v1092
    %v1398 = vunpack.c.l.s4 1983009808
    %v1399 = vunpack.c.0.s8 %v1398
    %v1400 = vlaneseq
    %v1401 = vshrl.u32 %v1400, 7
    %v1402 = vsub.s32 %v1399, %v1401
    %v1403 = vrot.slane %v1393, %v1402
    %v1405 = vunpack.c.l.s4 1983009808
    %v1406 = vunpack.c.0.s8 %v1405
    %v1407 = vlaneseq
    %v1408 = vshrl.u32 %v1407, 7
    %v1409 = vsub.s32 %v1406, %v1408
    %v1410 = vrot.slane %v1394, %v1409
    %v1412 = vunpack.c.l.s4 1983009808
    %v1413 = vunpack.c.0.s8 %v1412
    %v1414 = vlaneseq
    %v1415 = vshrl.u32 %v1414, 7
    %v1416 = vsub.s32 %v1413, %v1415
    %v1417 = vrot.slane %v1395, %v1416
    %v1419 = vunpack.c.l.s4 1983009808
    %v1420 = vunpack.c.0.s8 %v1419
    %v1421 = vlaneseq
    %v1422 = vshrl.u32 %v1421, 7
    %v1423 = vsub.s32 %v1420, %v1422
    %v1424 = vrot.slane %v1396, %v1423
    %v1425 = vcombine.low %v1403, %v1417
    %v1426 = vcombine.high %v1403, %v1417
    %v1427 = vcombine.low %v1410, %v1424
    %v1428 = vcombine.low %v1108, %v1124
    %v1429 = vcombine.high %v1108, %v1124
    %v1430 = vcombine.low %v1140, %v1156
    %v1431 = vcombine.high %v1140, %v1156
    %v1433 = vunpack.c.l.s4 1983009808
    %v1434 = vunpack.c.0.s8 %v1433
    %v1435 = vlaneseq
    %v1436 = vshrl.u32 %v1435, 7
    %v1437 = vsub.s32 %v1434, %v1436
    %v1438 = vrot.slane %v1428, %v1437
    %v1440 = vunpack.c.l.s4 1983009808
    %v1441 = vunpack.c.0.s8 %v1440
    %v1442 = vlaneseq
    %v1443 = vshrl.u32 %v1442, 7
    %v1444 = vsub.s32 %v1441, %v1443
    %v1445 = vrot.slane %v1429, %v1444
    %v1447 = vunpack.c.l.s4 1983009808
    %v1448 = vunpack.c.0.s8 %v1447
    %v1449 = vlaneseq
    %v1450 = vshrl.u32 %v1449, 7
    %v1451 = vsub.s32 %v1448, %v1450
    %v1452 = vrot.slane %v1430, %v1451
    %v1454 = vunpack.c.l.s4 1983009808
    %v1455 = vunpack.c.0.s8 %v1454
    %v1456 = vlaneseq
    %v1457 = vshrl.u32 %v1456, 7
    %v1458 = vsub.s32 %v1455, %v1457
    %v1459 = vrot.slane %v1431, %v1458
    %v1460 = vcombine.low %v1438, %v1452
    %v1461 = vcombine.high %v1438, %v1452
    %v1462 = vcombine.low %v1445, %v1459
    %v1463 = vcombine.low %v1172, %v1188
    %v1464 = vcombine.high %v1172, %v1188
    %v1465 = vcombine.low %v1204, %v1220
    %v1466 = vcombine.high %v1204, %v1220
    %v1468 = vunpack.c.l.s4 1983009808
    %v1469 = vunpack.c.0.s8 %v1468
    %v1470 = vlaneseq
    %v1471 = vshrl.u32 %v1470, 7
    %v1472 = vsub.s32 %v1469, %v1471
    %v1473 = vrot.slane %v1463, %v1472
    %v1475 = vunpack.c.l.s4 1983009808
    %v1476 = vunpack.c.0.s8 %v1475
    %v1477 = vlaneseq
    %v1478 = vshrl.u32 %v1477, 7
    %v1479 = vsub.s32 %v1476, %v1478
    %v1480 = vrot.slane %v1464, %v1479
    %v1482 = vunpack.c.l.s4 1983009808
    %v1483 = vunpack.c.0.s8 %v1482
    %v1484 = vlaneseq
    %v1485 = vshrl.u32 %v1484, 7
    %v1486 = vsub.s32 %v1483, %v1485
    %v1487 = vrot.slane %v1465, %v1486
    %v1489 = vunpack.c.l.s4 1983009808
    %v1490 = vunpack.c.0.s8 %v1489
    %v1491 = vlaneseq
    %v1492 = vshrl.u32 %v1491, 7
    %v1493 = vsub.s32 %v1490, %v1492
    %v1494 = vrot.slane %v1466, %v1493
    %v1495 = vcombine.low %v1473, %v1487
    %v1496 = vcombine.high %v1473, %v1487
    %v1497 = vcombine.low %v1480, %v1494
    %v1498 = vcombine.low %v1236, %v1252
    %v1499 = vcombine.high %v1236, %v1252
    %v1500 = vcombine.low %v1268, %v1284
    %v1501 = vcombine.high %v1268, %v1284
    %v1503 = vunpack.c.l.s4 1983009808
    %v1504 = vunpack.c.0.s8 %v1503
    %v1505 = vlaneseq
    %v1506 = vshrl.u32 %v1505, 7
    %v1507 = vsub.s32 %v1504, %v1506
    %v1508 = vrot.slane %v1498, %v1507
    %v1510 = vunpack.c.l.s4 1983009808
    %v1511 = vunpack.c.0.s8 %v1510
    %v1512 = vlaneseq
    %v1513 = vshrl.u32 %v1512, 7
    %v1514 = vsub.s32 %v1511, %v1513
    %v1515 = vrot.slane %v1499, %v1514
    %v1517 = vunpack.c.l.s4 1983009808
    %v1518 = vunpack.c.0.s8 %v1517
    %v1519 = vlaneseq
    %v1520 = vshrl.u32 %v1519, 7
    %v1521 = vsub.s32 %v1518, %v1520
    %v1522 = vrot.slane %v1500, %v1521
    %v1524 = vunpack.c.l.s4 1983009808
    %v1525 = vunpack.c.0.s8 %v1524
    %v1526 = vlaneseq
    %v1527 = vshrl.u32 %v1526, 7
    %v1528 = vsub.s32 %v1525, %v1527
    %v1529 = vrot.slane %v1501, %v1528
    %v1530 = vcombine.low %v1508, %v1522
    %v1531 = vcombine.high %v1508, %v1522
    %v1532 = vcombine.low %v1515, %v1529
    %v1533 = vcombine.low %v1300, %v1316
    %v1534 = vcombine.high %v1300, %v1316
    %v1535 = vcombine.low %v1332, %v1348
    %v1536 = vcombine.high %v1332, %v1348
    %v1538 = vunpack.c.l.s4 1983009808
    %v1539 = vunpack.c.0.s8 %v1538
    %v1540 = vlaneseq
    %v1541 = vshrl.u32 %v1540, 7
    %v1542 = vsub.s32 %v1539, %v1541
    %v1543 = vrot.slane %v1533, %v1542
    %v1545 = vunpack.c.l.s4 1983009808
    %v1546 = vunpack.c.0.s8 %v1545
    %v1547 = vlaneseq
    %v1548 = vshrl.u32 %v1547, 7
    %v1549 = vsub.s32 %v1546, %v1548
    %v1550 = vrot.slane %v1534, %v1549
    %v1552 = vunpack.c.l.s4 1983009808
    %v1553 = vunpack.c.0.s8 %v1552
    %v1554 = vlaneseq
    %v1555 = vshrl.u32 %v1554, 7
    %v1556 = vsub.s32 %v1553, %v1555
    %v1557 = vrot.slane %v1535, %v1556
    %v1559 = vunpack.c.l.s4 1983009808
    %v1560 = vunpack.c.0.s8 %v1559
    %v1561 = vlaneseq
    %v1562 = vshrl.u32 %v1561, 7
    %v1563 = vsub.s32 %v1560, %v1562
    %v1564 = vrot.slane %v1536, %v1563
    %v1565 = vcombine.low %v1543, %v1557
    %v1566 = vcombine.high %v1543, %v1557
    %v1567 = vcombine.low %v1550, %v1564
    %v1568 = vcombine.high %v1357, %v1357
    %v1570 = vunpack.c.l.s4 1983009808
    %v1571 = vunpack.c.0.s8 %v1570
    %v1572 = vlaneseq
    %v1573 = vshrl.u32 %v1572, 7
    %v1574 = vsub.s32 %v1571, %v1573
    %v1575 = vrot.slane %v1357, %v1574
    %v1577 = vunpack.c.l.s4 1983009808
    %v1578 = vunpack.c.0.s8 %v1577
    %v1579 = vlaneseq
    %v1580 = vshrl.u32 %v1579, 7
    %v1581 = vsub.s32 %v1578, %v1580
    %v1582 = vrot.slane %v1568, %v1581
    %v1583 = vcombine.high %v1575, %v1575
    %v1605 = vpack.c.bf16 %v1425, %v1390
    %v1606 = vpack.c.bf16 %v1426, %v1391
    %v1607 = vpack.c.bf16 %v1427, %v1392
    %v1608 = vpack.c.bf16 %v1495, %v1460
    %v1609 = vpack.c.bf16 %v1496, %v1461
    %v1610 = vpack.c.bf16 %v1497, %v1462
    %v1611 = vpack.c.bf16 %v1565, %v1530
    %v1612 = vpack.c.bf16 %v1566, %v1531
    %v1613 = vpack.c.bf16 %v1567, %v1532
    %v1614 = vpack.c.bf16 %v1575, %v1575
    %v1615 = vpack.c.bf16 %v1583, %v1583
    %v1616 = vpack.c.bf16 %v1582, %v1582
    %v1617 = vld [vmem:[%s3] sm:$0xff]
    %v1618 = vld [vmem:[%s3 + $0x8] sm:$0xff]
    %v1619 = vld [vmem:[%s3 + $0x10] sm:$0xff]
    %v1620 = vld [vmem:[%s3 + $0x18] sm:$0xff]
    %v1621 = vld [vmem:[%s3 + $0x20] sm:$0xff]
    %v1622 = vld [vmem:[%s3 + $0x28] sm:$0xff]
    %v1623 = vld [vmem:[%s3 + $0x30] sm:$0xff]
    %v1624 = vld [vmem:[%s3 + $0x38] sm:$0xff]
    %v1625 = vld [vmem:[%s3 + $0x40] sm:$0xff]
    %v1626 = vld [vmem:[%s3 + $0x48] sm:$0xff]
    %v1627 = vld [vmem:[%s3 + $0x50] sm:$0xff]
    %v1628 = vld [vmem:[%s3 + $0x58] sm:$0xff]
    %v1629 = vld [vmem:[%s3 + $0x60] sm:$0xff]
    %v1630 = vld [vmem:[%s3 + $0x68] sm:$0xff]
    %v1631 = vld [vmem:[%s3 + $0x70] sm:$0xff]
    %v1632 = vld [vmem:[%s3 + $0x78] sm:$0xff]
    %v1633 = vld [vmem:[%s3 + $0x80] sm:$0xff]
    %v1634 = vld [vmem:[%s3 + $0x88] sm:$0xff]
    %v1635 = vld [vmem:[%s3 + $0x90] sm:$0xff]
    %v1636 = vld [vmem:[%s3 + $0x98] sm:$0xff]
    %v1637 = vld [vmem:[%s3 + $0xa0] sm:$0xff]
    %v1638 = vld [vmem:[%s3 + $0xa8] sm:$0xff]
    %v1639 = vld [vmem:[%s3 + $0xb0] sm:$0xff]
    %v1640 = vld [vmem:[%s3 + $0xb8] sm:$0xff]
    %v1641 = vld [vmem:[%s3 + $0xc0] sm:$0xff]
    %v1642 = vld [vmem:[%s3 + $0xc8] sm:$0xff]
    %v1643 = vld [vmem:[%s3 + $0xd0] sm:$0xff]
    %v1644 = vld [vmem:[%s3 + $0xd8] sm:$0xff]
    %v1645 = vld [vmem:[%s3 + $0xe0] sm:$0xff]
    %v1646 = vld [vmem:[%s3 + $0xe8] sm:$0xff]
    %v1647 = vld [vmem:[%s3 + $0xf0] sm:$0xff]
    %v1648 = vld [vmem:[%s3 + $0xf8] sm:$0xff]
    %v1649 = vld [vmem:[%s3 + $0x100] sm:$0xff]
    %v1650 = vld [vmem:[%s3 + $0x108] sm:$0xff]
    %v1651 = vld [vmem:[%s3 + $0x110] sm:$0xff]
    %v1652 = vld [vmem:[%s3 + $0x118] sm:$0xff]
    %v1653 = vld [vmem:[%s3 + $0x120] sm:$0xff]
    %v1654 = vld [vmem:[%s3 + $0x128] sm:$0xff]
    %v1655 = vld [vmem:[%s3 + $0x130] sm:$0xff]
    %v1656 = vld [vmem:[%s3 + $0x138] sm:$0xff]
    %v1657 = vpack.c.bf16 %v1618, %v1617
    %v1658 = vpack.c.bf16 %v1620, %v1619
    %v1659 = vpack.c.bf16 %v1622, %v1621
    %v1660 = vpack.c.bf16 %v1624, %v1623
    %v1661 = vpack.c.bf16 %v1626, %v1625
    %v1662 = vpack.c.bf16 %v1628, %v1627
    %v1663 = vpack.c.bf16 %v1630, %v1629
    %v1664 = vpack.c.bf16 %v1632, %v1631
    %v1665 = vpack.c.bf16 %v1634, %v1633
    %v1666 = vpack.c.bf16 %v1636, %v1635
    %v1667 = vpack.c.bf16 %v1638, %v1637
    %v1668 = vpack.c.bf16 %v1640, %v1639
    %v1669 = vpack.c.bf16 %v1642, %v1641
    %v1670 = vpack.c.bf16 %v1644, %v1643
    %v1671 = vpack.c.bf16 %v1646, %v1645
    %v1672 = vpack.c.bf16 %v1648, %v1647
    %v1673 = vpack.c.bf16 %v1650, %v1649
    %v1674 = vpack.c.bf16 %v1652, %v1651
    %v1675 = vpack.c.bf16 %v1654, %v1653
    %v1676 = vpack.c.bf16 %v1656, %v1655
    %v1677 = vld [vmem:[%s4] sm:$0x1]
    %v1679 = vlaneseq
    %v1680 = vshrl.u32 %v1679, 7
    %v1681 = vsub.s32 0, %v1680
    %v1682 = vrot.slane %v1677, %v1681
    %v1685 = vsel %vm910, %v1607, 0
    %v1688 = vsel %vm910, %v1610, 0
    %v1691 = vsel %vm910, %v1613, 0
    %v1694 = vsel %vm910, %v1616, 0
    %1696 = vmatprep.subr.bf16.mxu0 0
    %1697 = vmatpush1.bf16.msra.mxu0 %v1657
    %1698 = vmatprep.subr.bf16.mxu0 0
    %1699 = vmatpush1.bf16.msra.mxu0 %v1658
    %1700 = vmatprep.subr.bf16.mxu0 0
    %1701 = vmatpush1.bf16.msra.mxu0 %v1659
    %1702 = vmatprep.subr.bf16.mxu0 0
    %1703 = vmatpush1.bf16.msra.mxu0 %v1660
    %1704 = vmatprep.subr.bf16.mxu0 0
    %1705 = vmatpush1.bf16.msra.mxu0 %v1661
    %1706 = vmatprep.subr.bf16.mxu0 0
    %1707 = vmatpush1.bf16.msra.mxu0 %v1662
    %1708 = vmatprep.subr.bf16.mxu0 0
    %1709 = vmatpush1.bf16.msra.mxu0 %v1663
    %1710 = vmatprep.subr.bf16.mxu0 0
    %1711 = vmatpush1.bf16.msra.mxu0 %v1664
    %1712 = vmatprep.subr.bf16.mxu0 0
    %1713 = vmatpush1.bf16.msra.mxu0 %v1665
    %1714 = vmatprep.subr.bf16.mxu0 0
    %1715 = vmatpush1.bf16.msra.mxu0 %v1666
    %1716 = vmatprep.subr.bf16.mxu0 0
    %1717 = vmatpush1.bf16.msra.mxu0 %v1667
    %1718 = vmatprep.subr.bf16.mxu0 0
    %1719 = vmatpush1.bf16.msra.mxu0 %v1668
    %1720 = vmatprep.subr.bf16.mxu0 0
    %1721 = vmatpush1.bf16.msra.mxu0 %v1669
    %1722 = vmatprep.subr.bf16.mxu0 0
    %1723 = vmatpush1.bf16.msra.mxu0 %v1670
    %1724 = vmatprep.subr.bf16.mxu0 0
    %1725 = vmatpush1.bf16.msra.mxu0 %v1671
    %1726 = vmatprep.subr.bf16.mxu0 0
    %1727 = vmatpush1.bf16.msra.mxu0 %v1672
    %1728 = vmatprep.mubr.bf16.mxu0 %v1606
    %1729 = vmatmul.mubr.bf16.gmra.mrb[0].mxu0 %v1605
    %v1730 = vpop.f32.mrb[0].mxu0
    %v1731 = vadd.f32 %v1682, %v1730
    %v1732 = vpop.f32.mrb[0].mxu0
    %v1733 = vpop.f32.mrb[0].mxu0
    %v1734 = vadd.f32 %v1682, %v1733
    %v1735 = vpop.f32.mrb[0].mxu0
    %1736 = vmatprep.mubr.bf16.mxu0 %v1609
    %1737 = vmatmul.mubr.bf16.gmra.mrb[0].mxu0 %v1608
    %v1738 = vpop.f32.mrb[0].mxu0
    %v1739 = vadd.f32 %v1682, %v1738
    %v1740 = vpop.f32.mrb[0].mxu0
    %v1741 = vpop.f32.mrb[0].mxu0
    %v1742 = vadd.f32 %v1682, %v1741
    %v1743 = vpop.f32.mrb[0].mxu0
    %1744 = vmatprep.mubr.bf16.mxu0 %v1612
    %1745 = vmatmul.mubr.bf16.gmra.mrb[0].mxu0 %v1611
    %v1746 = vpop.f32.mrb[0].mxu0
    %v1747 = vadd.f32 %v1682, %v1746
    %v1748 = vpop.f32.mrb[0].mxu0
    %v1749 = vpop.f32.mrb[0].mxu0
    %v1750 = vadd.f32 %v1682, %v1749
    %v1751 = vpop.f32.mrb[0].mxu0
    %1752 = vmatprep.mubr.bf16.mxu0 %v1615
    %1753 = vmatmul.mubr.bf16.gmra.mrb[0].mxu0 %v1614
    %v1754 = vpop.f32.mrb[0].mxu0
    %v1755 = vpop.f32.mrb[0].mxu0
    %v1756 = vpop.f32.mrb[0].mxu0
    %v1757 = vpop.f32.mrb[0].mxu0
    %1758 = vdwg.mxu0
    %1759 = vmatprep.subr.bf16.mxu0 0
    %1760 = vmatpush1.bf16.msra.mxu0 %v1673
    %1761 = vmatprep.subr.bf16.mxu0 0
    %1762 = vmatpush1.bf16.msra.mxu0 %v1674
    %1763 = vmatprep.subr.bf16.mxu0 0
    %1764 = vmatpush1.bf16.msra.mxu0 %v1675
    %1765 = vmatprep.subr.bf16.mxu0 0
    %1766 = vmatpush1.bf16.msra.mxu0 %v1676
    %1767 = vmatprep.subr.bf16.mxu0 0
    %1768 = vmatpush1.bf16.msra.mxu0 0
    %1769 = vmatprep.subr.bf16.mxu0 0
    %1770 = vmatpush1.bf16.msra.mxu0 0
    %1771 = vmatprep.subr.bf16.mxu0 0
    %1772 = vmatpush1.bf16.msra.mxu0 0
    %1773 = vmatprep.subr.bf16.mxu0 0
    %1774 = vmatpush1.bf16.msra.mxu0 0
    %1775 = vmatprep.subr.bf16.mxu0 0
    %1776 = vmatpush1.bf16.msra.mxu0 0
    %1777 = vmatprep.subr.bf16.mxu0 0
    %1778 = vmatpush1.bf16.msra.mxu0 0
    %1779 = vmatprep.subr.bf16.mxu0 0
    %1780 = vmatpush1.bf16.msra.mxu0 0
    %1781 = vmatprep.subr.bf16.mxu0 0
    %1782 = vmatpush1.bf16.msra.mxu0 0
    %1783 = vmatprep.subr.bf16.mxu0 0
    %1784 = vmatpush1.bf16.msra.mxu0 0
    %1785 = vmatprep.subr.bf16.mxu0 0
    %1786 = vmatpush1.bf16.msra.mxu0 0
    %1787 = vmatprep.subr.bf16.mxu0 0
    %1788 = vmatpush1.bf16.msra.mxu0 0
    %1789 = vmatprep.subr.bf16.mxu0 0
    %1790 = vmatpush1.bf16.msra.mxu0 0
    %1791 = vmatprep.mubr.bf16.mxu0 0
    %1792 = vmatmul.mubr.bf16.gmra.mrb[0].mxu0 %v1685
    %v1793 = vpop.f32.mrb[0].mxu0
    %v1794 = vadd.f32 %v1731, %v1793
    %v1795 = vpop.f32.mrb[0].mxu0
    %v1796 = vpop.f32.mrb[0].mxu0
    %v1797 = vadd.f32 %v1734, %v1796
    %v1798 = vpop.f32.mrb[0].mxu0
    %1799 = vmatprep.mubr.bf16.mxu0 0
    %1800 = vmatmul.mubr.bf16.gmra.mrb[0].mxu0 %v1688
    %v1801 = vpop.f32.mrb[0].mxu0
    %v1802 = vadd.f32 %v1739, %v1801
    %v1803 = vpop.f32.mrb[0].mxu0
    %v1804 = vpop.f32.mrb[0].mxu0
    %v1805 = vadd.f32 %v1742, %v1804
    %v1806 = vpop.f32.mrb[0].mxu0
    %1807 = vmatprep.mubr.bf16.mxu0 0
    %1808 = vmatmul.mubr.bf16.gmra.mrb[0].mxu0 %v1691
    %v1809 = vpop.f32.mrb[0].mxu0
    %v1810 = vadd.f32 %v1747, %v1809
    %v1811 = vpop.f32.mrb[0].mxu0
    %v1812 = vpop.f32.mrb[0].mxu0
    %v1813 = vadd.f32 %v1750, %v1812
    %v1814 = vpop.f32.mrb[0].mxu0
    %1815 = vmatprep.mubr.bf16.mxu0 0
    %1816 = vmatmul.mubr.bf16.gmra.mrb[0].mxu0 %v1694
    %v1817 = vpop.f32.mrb[0].mxu0
    %v1818 = vpop.f32.mrb[0].mxu0
    %v1819 = vpop.f32.mrb[0].mxu0
    %v1820 = vpop.f32.mrb[0].mxu0
    %1821 = vdwg.mxu0
    %v1822 = vmax.f32 %v1794, 0.0
    %v1823 = vmax.f32 %v1797, 0.0
    %v1824 = vmax.f32 %v1802, 0.0
    %v1825 = vmax.f32 %v1805, 0.0
    %v1826 = vmax.f32 %v1810, 0.0
    %v1827 = vmax.f32 %v1813, 0.0
    %v1834 = vcombine.high %v1822, %v1822
    %v1836 = vunpack.c.l.s4 1983009808
    %v1837 = vunpack.c.0.s8 %v1836
    %v1838 = vlaneseq
    %v1839 = vshrl.u32 %v1838, 7
    %v1840 = vsub.s32 %v1837, %v1839
    %v1841 = vrot.slane %v1822, %v1840
    %v1843 = vunpack.c.l.s4 1983009808
    %v1844 = vunpack.c.0.s8 %v1843
    %v1845 = vlaneseq
    %v1846 = vshrl.u32 %v1845, 7
    %v1847 = vsub.s32 %v1844, %v1846
    %v1848 = vrot.slane %v1834, %v1847
    %v1849 = vcombine.high %v1841, %v1841
    %v1850 = vcombine.high %v1848, %v1848
    %v1851 = vcombine.high %v1823, %v1823
    %v1853 = vunpack.c.l.s4 1983009808
    %v1854 = vunpack.c.0.s8 %v1853
    %v1855 = vlaneseq
    %v1856 = vshrl.u32 %v1855, 7
    %v1857 = vsub.s32 %v1854, %v1856
    %v1858 = vrot.slane %v1823, %v1857
    %v1860 = vunpack.c.l.s4 1983009808
    %v1861 = vunpack.c.0.s8 %v1860
    %v1862 = vlaneseq
    %v1863 = vshrl.u32 %v1862, 7
    %v1864 = vsub.s32 %v1861, %v1863
    %v1865 = vrot.slane %v1851, %v1864
    %v1866 = vcombine.high %v1858, %v1858
    %v1867 = vcombine.high %v1865, %v1865
    %v1868 = vcombine.high %v1824, %v1824
    %v1870 = vunpack.c.l.s4 1983009808
    %v1871 = vunpack.c.0.s8 %v1870
    %v1872 = vlaneseq
    %v1873 = vshrl.u32 %v1872, 7
    %v1874 = vsub.s32 %v1871, %v1873
    %v1875 = vrot.slane %v1824, %v1874
    %v1877 = vunpack.c.l.s4 1983009808
    %v1878 = vunpack.c.0.s8 %v1877
    %v1879 = vlaneseq
    %v1880 = vshrl.u32 %v1879, 7
    %v1881 = vsub.s32 %v1878, %v1880
    %v1882 = vrot.slane %v1868, %v1881
    %v1883 = vcombine.high %v1875, %v1875
    %v1884 = vcombine.high %v1882, %v1882
    %v1885 = vcombine.high %v1825, %v1825
    %v1887 = vunpack.c.l.s4 1983009808
    %v1888 = vunpack.c.0.s8 %v1887
    %v1889 = vlaneseq
    %v1890 = vshrl.u32 %v1889, 7
    %v1891 = vsub.s32 %v1888, %v1890
    %v1892 = vrot.slane %v1825, %v1891
    %v1894 = vunpack.c.l.s4 1983009808
    %v1895 = vunpack.c.0.s8 %v1894
    %v1896 = vlaneseq
    %v1897 = vshrl.u32 %v1896, 7
    %v1898 = vsub.s32 %v1895, %v1897
    %v1899 = vrot.slane %v1885, %v1898
    %v1900 = vcombine.high %v1892, %v1892
    %v1901 = vcombine.high %v1899, %v1899
    %v1902 = vcombine.high %v1826, %v1826
    %v1904 = vunpack.c.l.s4 1983009808
    %v1905 = vunpack.c.0.s8 %v1904
    %v1906 = vlaneseq
    %v1907 = vshrl.u32 %v1906, 7
    %v1908 = vsub.s32 %v1905, %v1907
    %v1909 = vrot.slane %v1826, %v1908
    %v1911 = vunpack.c.l.s4 1983009808
    %v1912 = vunpack.c.0.s8 %v1911
    %v1913 = vlaneseq
    %v1914 = vshrl.u32 %v1913, 7
    %v1915 = vsub.s32 %v1912, %v1914
    %v1916 = vrot.slane %v1902, %v1915
    %v1917 = vcombine.high %v1909, %v1909
    %v1918 = vcombine.high %v1916, %v1916
    %v1919 = vcombine.high %v1827, %v1827
    %v1921 = vunpack.c.l.s4 1983009808
    %v1922 = vunpack.c.0.s8 %v1921
    %v1923 = vlaneseq
    %v1924 = vshrl.u32 %v1923, 7
    %v1925 = vsub.s32 %v1922, %v1924
    %v1926 = vrot.slane %v1827, %v1925
    %v1928 = vunpack.c.l.s4 1983009808
    %v1929 = vunpack.c.0.s8 %v1928
    %v1930 = vlaneseq
    %v1931 = vshrl.u32 %v1930, 7
    %v1932 = vsub.s32 %v1929, %v1931
    %v1933 = vrot.slane %v1919, %v1932
    %v1934 = vcombine.high %v1926, %v1926
    %v1935 = vcombine.high %v1933, %v1933
    %v1960 = vmax.f32 %v1841, %v1849
    %v1961 = vmax.f32 %v1848, %v1850
    %v1962 = vmax.f32 %v1858, %v1866
    %v1963 = vmax.f32 %v1865, %v1867
    %v1964 = vmax.f32 %v1875, %v1883
    %v1965 = vmax.f32 %v1882, %v1884
    %v1966 = vmax.f32 %v1892, %v1900
    %v1967 = vmax.f32 %v1899, %v1901
    %v1968 = vmax.f32 %v1909, %v1917
    %v1969 = vmax.f32 %v1916, %v1918
    %v1970 = vmax.f32 %v1926, %v1934
    %v1971 = vmax.f32 %v1933, %v1935
    %v1984 = vcombine.low %v1960, %v1961
    %v1985 = vcombine.low %v1962, %v1963
    %v1987 = vunpack.c.l.s4 1983009808
    %v1988 = vunpack.c.0.s8 %v1987
    %v1989 = vlaneseq
    %v1990 = vshrl.u32 %v1989, 7
    %v1991 = vsub.s32 %v1988, %v1990
    %v1992 = vrot.slane %v1984, %v1991
    %v1994 = vunpack.c.l.s4 1983009808
    %v1995 = vunpack.c.0.s8 %v1994
    %v1996 = vlaneseq
    %v1997 = vshrl.u32 %v1996, 7
    %v1998 = vsub.s32 %v1995, %v1997
    %v1999 = vrot.slane %v1985, %v1998
    %v2000 = vcombine.low %v1992, %v1999
    %v2001 = vcombine.low %v1964, %v1965
    %v2002 = vcombine.low %v1966, %v1967
    %v2004 = vunpack.c.l.s4 1983009808
    %v2005 = vunpack.c.0.s8 %v2004
    %v2006 = vlaneseq
    %v2007 = vshrl.u32 %v2006, 7
    %v2008 = vsub.s32 %v2005, %v2007
    %v2009 = vrot.slane %v2001, %v2008
    %v2011 = vunpack.c.l.s4 1983009808
    %v2012 = vunpack.c.0.s8 %v2011
    %v2013 = vlaneseq
    %v2014 = vshrl.u32 %v2013, 7
    %v2015 = vsub.s32 %v2012, %v2014
    %v2016 = vrot.slane %v2002, %v2015
    %v2017 = vcombine.low %v2009, %v2016
    %v2018 = vcombine.low %v1968, %v1969
    %v2019 = vcombine.low %v1970, %v1971
    %v2021 = vunpack.c.l.s4 1983009808
    %v2022 = vunpack.c.0.s8 %v2021
    %v2023 = vlaneseq
    %v2024 = vshrl.u32 %v2023, 7
    %v2025 = vsub.s32 %v2022, %v2024
    %v2026 = vrot.slane %v2018, %v2025
    %v2028 = vunpack.c.l.s4 1983009808
    %v2029 = vunpack.c.0.s8 %v2028
    %v2030 = vlaneseq
    %v2031 = vshrl.u32 %v2030, 7
    %v2032 = vsub.s32 %v2029, %v2031
    %v2033 = vrot.slane %v2019, %v2032
    %v2034 = vcombine.low %v2026, %v2033
    %v2038 = vpack.c.bf16 %v2017, %v2000
    %v2039 = vpack.c.bf16 %v2034, %v2034
    %v2040 = vld [vmem:[%s5] sm:$0xff]
    %v2041 = vld [vmem:[%s5 + $0x8] sm:$0xff]
    %v2042 = vld [vmem:[%s5 + $0x10] sm:$0xff]
    %v2043 = vld [vmem:[%s5 + $0x18] sm:$0xff]
    %v2044 = vld [vmem:[%s5 + $0x20] sm:$0xff]
    %v2045 = vld [vmem:[%s5 + $0x28] sm:$0xff]
    %v2046 = vld [vmem:[%s5 + $0x30] sm:$0xff]
    %v2047 = vld [vmem:[%s5 + $0x38] sm:$0xff]
    %v2048 = vld [vmem:[%s5 + $0x40] sm:$0xff]
    %v2049 = vld [vmem:[%s5 + $0x48] sm:$0xff]
    %v2050 = vld [vmem:[%s5 + $0x50] sm:$0xff]
    %v2051 = vld [vmem:[%s5 + $0x58] sm:$0xff]
    %v2052 = vld [vmem:[%s5 + $0x60] sm:$0xff]
    %v2053 = vld [vmem:[%s5 + $0x68] sm:$0xff]
    %v2054 = vld [vmem:[%s5 + $0x70] sm:$0xff]
    %v2055 = vld [vmem:[%s5 + $0x78] sm:$0xff]
    %v2056 = vpack.c.bf16 %v2042, %v2040
    %v2057 = vpack.c.bf16 %v2043, %v2041
    %v2058 = vpack.c.bf16 %v2046, %v2044
    %v2059 = vpack.c.bf16 %v2047, %v2045
    %v2060 = vpack.c.bf16 %v2050, %v2048
    %v2061 = vpack.c.bf16 %v2051, %v2049
    %v2062 = vpack.c.bf16 %v2054, %v2052
    %v2063 = vpack.c.bf16 %v2055, %v2053
    %v2064 = vld [vmem:[%s7] sm:$0x3]
    %v2066 = vlaneseq
    %v2067 = vshrl.u32 %v2066, 7
    %v2068 = vsub.s32 0, %v2067
    %v2069 = vrot.slane %v2064, %v2068
    %v2070 = vlaneseq
    %v2071 = vshrl.u32 %v2070, 7
    %v2072 = vsub.s32 1, %v2071
    %v2073 = vrot.slane %v2064, %v2072
    %v2077 = vsel %vm910, %v2038, 0
    %v2080 = vsel %vm910, %v2039, 0
    %2082 = vmatprep.subr.bf16.mxu0 %v2057
    %2083 = vmatpush1.bf16.msra.mxu0 %v2056
    %2084 = vmatprep.subr.bf16.mxu0 %v2059
    %2085 = vmatpush1.bf16.msra.mxu0 %v2058
    %2086 = vmatprep.subr.bf16.mxu0 %v2061
    %2087 = vmatpush1.bf16.msra.mxu0 %v2060
    %2088 = vmatprep.subr.bf16.mxu0 %v2063
    %2089 = vmatpush1.bf16.msra.mxu0 %v2062
    %2090 = vmatprep.subr.bf16.mxu0 0
    %2091 = vmatpush1.bf16.msra.mxu0 0
    %2092 = vmatprep.subr.bf16.mxu0 0
    %2093 = vmatpush1.bf16.msra.mxu0 0
    %2094 = vmatprep.subr.bf16.mxu0 0
    %2095 = vmatpush1.bf16.msra.mxu0 0
    %2096 = vmatprep.subr.bf16.mxu0 0
    %2097 = vmatpush1.bf16.msra.mxu0 0
    %2098 = vmatprep.subr.bf16.mxu0 0
    %2099 = vmatpush1.bf16.msra.mxu0 0
    %2100 = vmatprep.subr.bf16.mxu0 0
    %2101 = vmatpush1.bf16.msra.mxu0 0
    %2102 = vmatprep.subr.bf16.mxu0 0
    %2103 = vmatpush1.bf16.msra.mxu0 0
    %2104 = vmatprep.subr.bf16.mxu0 0
    %2105 = vmatpush1.bf16.msra.mxu0 0
    %2106 = vmatprep.subr.bf16.mxu0 0
    %2107 = vmatpush1.bf16.msra.mxu0 0
    %2108 = vmatprep.subr.bf16.mxu0 0
    %2109 = vmatpush1.bf16.msra.mxu0 0
    %2110 = vmatprep.subr.bf16.mxu0 0
    %2111 = vmatpush1.bf16.msra.mxu0 0
    %2112 = vmatprep.subr.bf16.mxu0 0
    %2113 = vmatpush1.bf16.msra.mxu0 0
    %2114 = vmatprep.mubr.bf16.mxu0 0
    %2115 = vmatmul.mubr.bf16.gmra.mrb[0].mxu0 %v2077
    %v2116 = vpop.f32.mrb[0].mxu0
    %v2117 = vadd.f32 %v2069, %v2116
    %v2118 = vpop.f32.mrb[0].mxu0
    %v2119 = vadd.f32 %v2073, %v2118
    %v2120 = vpop.f32.mrb[0].mxu0
    %v2121 = vadd.f32 %v2069, %v2120
    %v2122 = vpop.f32.mrb[0].mxu0
    %v2123 = vadd.f32 %v2073, %v2122
    %2124 = vmatprep.mubr.bf16.mxu0 0
    %2125 = vmatmul.mubr.bf16.gmra.mrb[0].mxu0 %v2080
    %v2126 = vpop.f32.mrb[0].mxu0
    %v2127 = vadd.f32 %v2069, %v2126
    %v2128 = vpop.f32.mrb[0].mxu0
    %v2129 = vadd.f32 %v2073, %v2128
    %v2130 = vpop.f32.mrb[0].mxu0
    %v2131 = vpop.f32.mrb[0].mxu0
    %2132 = vdwg.mxu0
    %v2139 = vcombine.low %v2117, %v2119
    %v2140 = vcombine.high %v2117, %v2119
    %v2142 = vunpack.c.l.s4 1983009808
    %v2143 = vunpack.c.0.s8 %v2142
    %v2144 = vlaneseq
    %v2145 = vshrl.u32 %v2144, 7
    %v2146 = vsub.s32 %v2143, %v2145
    %v2147 = vrot.slane %v2139, %v2146
    %v2149 = vunpack.c.l.s4 1983009808
    %v2150 = vunpack.c.0.s8 %v2149
    %v2151 = vlaneseq
    %v2152 = vshrl.u32 %v2151, 7
    %v2153 = vsub.s32 %v2150, %v2152
    %v2154 = vrot.slane %v2140, %v2153
    %v2155 = vcombine.high %v2147, %v2147
    %v2156 = vcombine.high %v2154, %v2154
    %v2157 = vcombine.low %v2121, %v2123
    %v2158 = vcombine.high %v2121, %v2123
    %v2160 = vunpack.c.l.s4 1983009808
    %v2161 = vunpack.c.0.s8 %v2160
    %v2162 = vlaneseq
    %v2163 = vshrl.u32 %v2162, 7
    %v2164 = vsub.s32 %v2161, %v2163
    %v2165 = vrot.slane %v2157, %v2164
    %v2167 = vunpack.c.l.s4 1983009808
    %v2168 = vunpack.c.0.s8 %v2167
    %v2169 = vlaneseq
    %v2170 = vshrl.u32 %v2169, 7
    %v2171 = vsub.s32 %v2168, %v2170
    %v2172 = vrot.slane %v2158, %v2171
    %v2173 = vcombine.high %v2165, %v2165
    %v2174 = vcombine.high %v2172, %v2172
    %v2175 = vcombine.low %v2127, %v2129
    %v2176 = vcombine.high %v2127, %v2129
    %v2178 = vunpack.c.l.s4 1983009808
    %v2179 = vunpack.c.0.s8 %v2178
    %v2180 = vlaneseq
    %v2181 = vshrl.u32 %v2180, 7
    %v2182 = vsub.s32 %v2179, %v2181
    %v2183 = vrot.slane %v2175, %v2182
    %v2185 = vunpack.c.l.s4 1983009808
    %v2186 = vunpack.c.0.s8 %v2185
    %v2187 = vlaneseq
    %v2188 = vshrl.u32 %v2187, 7
    %v2189 = vsub.s32 %v2186, %v2188
    %v2190 = vrot.slane %v2176, %v2189
    %v2191 = vcombine.high %v2183, %v2183
    %v2192 = vcombine.high %v2190, %v2190
    %2205 = vst [vmem:[#allocation2] sm:$0xf] %v2147
    %2206 = vst [vmem:[#allocation2 + $0x4] sm:$0xf] %v2155
    %2207 = vst [vmem:[#allocation2 + $0x8] sm:$0xf] %v2154
    %2208 = vst [vmem:[#allocation2 + $0xc] sm:$0xf] %v2156
    %2209 = vst [vmem:[#allocation2 + $0x10] sm:$0xf] %v2165
    %2210 = vst [vmem:[#allocation2 + $0x14] sm:$0xf] %v2173
    %2211 = vst [vmem:[#allocation2 + $0x18] sm:$0xf] %v2172
    %2212 = vst [vmem:[#allocation2 + $0x1c] sm:$0xf] %v2174
    %2213 = vst [vmem:[#allocation2 + $0x20] sm:$0xf] %v2183
    %2214 = vst [vmem:[#allocation2 + $0x24] sm:$0xf] %v2191
    %2215 = vst [vmem:[#allocation2 + $0x28] sm:$0xf] %v2190
    %2216 = vst [vmem:[#allocation2 + $0x2c] sm:$0xf] %v2192
    %v2217 = vld [vmem:[%s6] sm:$0xff]
    %v2218 = vld [vmem:[%s6 + $0x8] sm:$0xff]
    %v2219 = vld [vmem:[%s6 + $0x10] sm:$0xff]
    %v2220 = vld [vmem:[%s6 + $0x18] sm:$0xff]
    %v2221 = vld [vmem:[%s6 + $0x20] sm:$0xff]
    %v2222 = vld [vmem:[%s6 + $0x28] sm:$0xff]
    %v2223 = vld [vmem:[%s6 + $0x30] sm:$0xff]
    %v2224 = vld [vmem:[%s6 + $0x38] sm:$0xff]
    %v2225 = vld [vmem:[%s6 + $0x40] sm:$0xff]
    %v2226 = vld [vmem:[%s6 + $0x48] sm:$0xff]
    %v2227 = vld [vmem:[%s6 + $0x50] sm:$0xff]
    %v2228 = vld [vmem:[%s6 + $0x58] sm:$0xff]
    %v2229 = vld [vmem:[%s6 + $0x60] sm:$0xff]
    %v2230 = vld [vmem:[%s6 + $0x68] sm:$0xff]
    %v2231 = vld [vmem:[%s6 + $0x70] sm:$0xff]
    %v2232 = vld [vmem:[%s6 + $0x78] sm:$0xff]
    %v2233 = vpack.c.bf16 %v2219, %v2217
    %v2234 = vpack.c.bf16 %v2220, %v2218
    %v2235 = vpack.c.bf16 %v2223, %v2221
    %v2236 = vpack.c.bf16 %v2224, %v2222
    %v2237 = vpack.c.bf16 %v2227, %v2225
    %v2238 = vpack.c.bf16 %v2228, %v2226
    %v2239 = vpack.c.bf16 %v2231, %v2229
    %v2240 = vpack.c.bf16 %v2232, %v2230
    %v2241 = vld [vmem:[#allocation2] sm:$0xf]
    %v2243 = vsel %vm910, 0, 0
    %2245 = vmatprep.subr.bf16.mxu0 %v2234
    %2246 = vmatpush1.bf16.msra.mxu0 %v2233
    %2247 = vmatprep.subr.bf16.mxu0 %v2236
    %2248 = vmatpush1.bf16.msra.mxu0 %v2235
    %2249 = vmatprep.subr.bf16.mxu0 %v2238
    %2250 = vmatpush1.bf16.msra.mxu0 %v2237
    %2251 = vmatprep.subr.bf16.mxu0 %v2240
    %2252 = vmatpush1.bf16.msra.mxu0 %v2239
    %2253 = vmatprep.subr.bf16.mxu0 0
    %2254 = vmatpush1.bf16.msra.mxu0 0
    %2255 = vmatprep.subr.bf16.mxu0 0
    %2256 = vmatpush1.bf16.msra.mxu0 0
    %2257 = vmatprep.subr.bf16.mxu0 0
    %2258 = vmatpush1.bf16.msra.mxu0 0
    %2259 = vmatprep.subr.bf16.mxu0 0
    %2260 = vmatpush1.bf16.msra.mxu0 0
    %2261 = vmatprep.subr.bf16.mxu0 0
    %2262 = vmatpush1.bf16.msra.mxu0 0
    %2263 = vmatprep.subr.bf16.mxu0 0
    %2264 = vmatpush1.bf16.msra.mxu0 0
    %2265 = vmatprep.subr.bf16.mxu0 0
    %2266 = vmatpush1.bf16.msra.mxu0 0
    %2267 = vmatprep.subr.bf16.mxu0 0
    %2268 = vmatpush1.bf16.msra.mxu0 0
    %2269 = vmatprep.subr.bf16.mxu0 0
    %2270 = vmatpush1.bf16.msra.mxu0 0
    %2271 = vmatprep.subr.bf16.mxu0 0
    %2272 = vmatpush1.bf16.msra.mxu0 0
    %2273 = vmatprep.subr.bf16.mxu0 0
    %2274 = vmatpush1.bf16.msra.mxu0 0
    %2275 = vmatprep.subr.bf16.mxu0 0
    %2276 = vmatpush1.bf16.msra.mxu0 0
    %2277 = vmatprep.mubr.bf16.mxu0 0
    %2278 = vmatmul.mubr.bf16.gmra.mrb[0].mxu0 %v2243
    %v2279 = vpop.f32.mrb[0].mxu0
    %v2280 = vadd.f32 0.0, %v2279
    %v2281 = vpop.f32.mrb[0].mxu0
    %v2282 = vadd.f32 0.0, %v2281
    %v2283 = vpop.f32.mrb[0].mxu0
    %v2284 = vpop.f32.mrb[0].mxu0
    %2285 = vdwg.mxu0
    %v2288 = vcombine.low %v2280, %v2282
    %v2290 = vunpack.c.l.s4 1983009808
    %v2291 = vunpack.c.0.s8 %v2290
    %v2292 = vlaneseq
    %v2293 = vshrl.u32 %v2292, 7
    %v2294 = vsub.s32 %v2291, %v2293
    %v2295 = vrot.slane %v2288, %v2294
    %v2297 = vadd.f32 %v2241, %v2295
    %v2298 = vxor.u32 %v2297, 2147483648
    %v2299 = vmul.f32 %v2298, 1.442695
    %v2300 = vpow.pop %v2299
    %v2301 = vadd.f32 %v2300, 1.0
    %v2302 = vrcp.pop %v2301
    %v2303 = vmul.f32 1.0, %v2302
    %v2305 = vrot.slane %v2297, 2
    %v2307 = vtanh.pop %v2305
    %v2308 = vmul.f32 %v2303, 0.0
    %2310 = vrot.lane.b32.xlu0 %v2307, 64
    %v2311 = vpop.permute.xlu0 %2310
    %v2313 = vmul.f32 %v2303, %v2311
    %2315 = vrot.lane.b32.xlu0 %v2313, 64
    %v2316 = vpop.permute.xlu0 %2315
    %v2318 = vadd.f32 %v2308, %v2316
    %v2319 = vtanh.pop %v2318
    %v2321 = vrot.slane %v2303, 2
    %2324 = vrot.lane.b32.xlu0 %v2319, 64
    %v2325 = vpop.permute.xlu0 %2324
    %v2327 = vmul.f32 %v2321, %v2325
    %s2328 = scalar_lea.vmem [#allocation2], 4
    %v2329 = vld [vmem:[%s2328] sm:$0xf]
    %v2330 = vpack.c.bf16 %v2327, %v2327
    %v2332 = vsel %vm910, %v2330, 0
    %2334 = vmatprep.subr.bf16.mxu0 %v2234
    %2335 = vmatpush1.bf16.msra.mxu0 %v2233
    %2336 = vmatprep.subr.bf16.mxu0 %v2236
    %2337 = vmatpush1.bf16.msra.mxu0 %v2235
    %2338 = vmatprep.subr.bf16.mxu0 %v2238
    %2339 = vmatpush1.bf16.msra.mxu0 %v2237
    %2340 = vmatprep.subr.bf16.mxu0 %v2240
    %2341 = vmatpush1.bf16.msra.mxu0 %v2239
    %2342 = vmatprep.subr.bf16.mxu0 0
    %2343 = vmatpush1.bf16.msra.mxu0 0
    %2344 = vmatprep.subr.bf16.mxu0 0
    %2345 = vmatpush1.bf16.msra.mxu0 0
    %2346 = vmatprep.subr.bf16.mxu0 0
    %2347 = vmatpush1.bf16.msra.mxu0 0
    %2348 = vmatprep.subr.bf16.mxu0 0
    %2349 = vmatpush1.bf16.msra.mxu0 0
    %2350 = vmatprep.subr.bf16.mxu0 0
    %2351 = vmatpush1.bf16.msra.mxu0 0
    %2352 = vmatprep.subr.bf16.mxu0 0
    %2353 = vmatpush1.bf16.msra.mxu0 0
    %2354 = vmatprep.subr.bf16.mxu0 0
    %2355 = vmatpush1.bf16.msra.mxu0 0
    %2356 = vmatprep.subr.bf16.mxu0 0
    %2357 = vmatpush1.bf16.msra.mxu0 0
    %2358 = vmatprep.subr.bf16.mxu0 0
    %2359 = vmatpush1.bf16.msra.mxu0 0
    %2360 = vmatprep.subr.bf16.mxu0 0
    %2361 = vmatpush1.bf16.msra.mxu0 0
    %2362 = vmatprep.subr.bf16.mxu0 0
    %2363 = vmatpush1.bf16.msra.mxu0 0
    %2364 = vmatprep.subr.bf16.mxu0 0
    %2365 = vmatpush1.bf16.msra.mxu0 0
    %2366 = vmatprep.mubr.bf16.mxu0 0
    %2367 = vmatmul.mubr.bf16.gmra.mrb[0].mxu0 %v2332
    %v2368 = vpop.f32.mrb[0].mxu0
    %v2369 = vadd.f32 0.0, %v2368
    %v2370 = vpop.f32.mrb[0].mxu0
    %v2371 = vadd.f32 0.0, %v2370
    %v2372 = vpop.f32.mrb[0].mxu0
    %v2373 = vpop.f32.mrb[0].mxu0
    %2374 = vdwg.mxu0
    %v2377 = vcombine.low %v2369, %v2371
    %v2379 = vunpack.c.l.s4 1983009808
    %v2380 = vunpack.c.0.s8 %v2379
    %v2381 = vlaneseq
    %v2382 = vshrl.u32 %v2381, 7
    %v2383 = vsub.s32 %v2380, %v2382
    %v2384 = vrot.slane %v2377, %v2383
    %v2386 = vadd.f32 %v2329, %v2384
    %v2387 = vxor.u32 %v2386, 2147483648
    %v2388 = vmul.f32 %v2387, 1.442695
    %v2389 = vpow.pop %v2388
    %v2390 = vadd.f32 %v2389, 1.0
    %v2391 = vrcp.pop %v2390
    %v2392 = vmul.f32 1.0, %v2391
    %v2394 = vrot.slane %v2386, 2
    %v2396 = vtanh.pop %v2394
    %v2397 = vmul.f32 %v2392, %v2318
    %2399 = vrot.lane.b32.xlu0 %v2396, 64
    %v2400 = vpop.permute.xlu0 %2399
    %v2402 = vmul.f32 %v2392, %v2400
    %2404 = vrot.lane.b32.xlu0 %v2402, 64
    %v2405 = vpop.permute.xlu0 %2404
    %v2407 = vadd.f32 %v2397, %v2405
    %v2408 = vtanh.pop %v2407
    %v2410 = vrot.slane %v2392, 2
    %2413 = vrot.lane.b32.xlu0 %v2408, 64
    %v2414 = vpop.permute.xlu0 %2413
    %v2416 = vmul.f32 %v2410, %v2414
    %s2417 = scalar_lea.vmem [#allocation2], 8
    %v2418 = vld [vmem:[%s2417] sm:$0xf]
    %v2419 = vpack.c.bf16 %v2416, %v2416
    %v2421 = vsel %vm910, %v2419, 0
    %2423 = vmatprep.subr.bf16.mxu0 %v2234
    %2424 = vmatpush1.bf16.msra.mxu0 %v2233
    %2425 = vmatprep.subr.bf16.mxu0 %v2236
    %2426 = vmatpush1.bf16.msra.mxu0 %v2235
    %2427 = vmatprep.subr.bf16.mxu0 %v2238
    %2428 = vmatpush1.bf16.msra.mxu0 %v2237
    %2429 = vmatprep.subr.bf16.mxu0 %v2240
    %2430 = vmatpush1.bf16.msra.mxu0 %v2239
    %2431 = vmatprep.subr.bf16.mxu0 0
    %2432 = vmatpush1.bf16.msra.mxu0 0
    %2433 = vmatprep.subr.bf16.mxu0 0
    %2434 = vmatpush1.bf16.msra.mxu0 0
    %2435 = vmatprep.subr.bf16.mxu0 0
    %2436 = vmatpush1.bf16.msra.mxu0 0
    %2437 = vmatprep.subr.bf16.mxu0 0
    %2438 = vmatpush1.bf16.msra.mxu0 0
    %2439 = vmatprep.subr.bf16.mxu0 0
    %2440 = vmatpush1.bf16.msra.mxu0 0
    %2441 = vmatprep.subr.bf16.mxu0 0
    %2442 = vmatpush1.bf16.msra.mxu0 0
    %2443 = vmatprep.subr.bf16.mxu0 0
    %2444 = vmatpush1.bf16.msra.mxu0 0
    %2445 = vmatprep.subr.bf16.mxu0 0
    %2446 = vmatpush1.bf16.msra.mxu0 0
    %2447 = vmatprep.subr.bf16.mxu0 0
    %2448 = vmatpush1.bf16.msra.mxu0 0
    %2449 = vmatprep.subr.bf16.mxu0 0
    %2450 = vmatpush1.bf16.msra.mxu0 0
    %2451 = vmatprep.subr.bf16.mxu0 0
    %2452 = vmatpush1.bf16.msra.mxu0 0
    %2453 = vmatprep.subr.bf16.mxu0 0
    %2454 = vmatpush1.bf16.msra.mxu0 0
    %2455 = vmatprep.mubr.bf16.mxu0 0
    %2456 = vmatmul.mubr.bf16.gmra.mrb[0].mxu0 %v2421
    %v2457 = vpop.f32.mrb[0].mxu0
    %v2458 = vadd.f32 0.0, %v2457
    %v2459 = vpop.f32.mrb[0].mxu0
    %v2460 = vadd.f32 0.0, %v2459
    %v2461 = vpop.f32.mrb[0].mxu0
    %v2462 = vpop.f32.mrb[0].mxu0
    %2463 = vdwg.mxu0
    %v2466 = vcombine.low %v2458, %v2460
    %v2468 = vunpack.c.l.s4 1983009808
    %v2469 = vunpack.c.0.s8 %v2468
    %v2470 = vlaneseq
    %v2471 = vshrl.u32 %v2470, 7
    %v2472 = vsub.s32 %v2469, %v2471
    %v2473 = vrot.slane %v2466, %v2472
    %v2475 = vadd.f32 %v2418, %v2473
    %v2476 = vxor.u32 %v2475, 2147483648
    %v2477 = vmul.f32 %v2476, 1.442695
    %v2478 = vpow.pop %v2477
    %v2479 = vadd.f32 %v2478, 1.0
    %v2480 = vrcp.pop %v2479
    %v2481 = vmul.f32 1.0, %v2480
    %v2483 = vrot.slane %v2475, 2
    %v2485 = vtanh.pop %v2483
    %v2486 = vmul.f32 %v2481, %v2407
    %2488 = vrot.lane.b32.xlu0 %v2485, 64
    %v2489 = vpop.permute.xlu0 %2488
    %v2491 = vmul.f32 %v2481, %v2489
    %2493 = vrot.lane.b32.xlu0 %v2491, 64
    %v2494 = vpop.permute.xlu0 %2493
    %v2496 = vadd.f32 %v2486, %v2494
    %v2497 = vtanh.pop %v2496
    %v2499 = vrot.slane %v2481, 2
    %2502 = vrot.lane.b32.xlu0 %v2497, 64
    %v2503 = vpop.permute.xlu0 %2502
    %v2505 = vmul.f32 %v2499, %v2503
    %s2506 = scalar_lea.vmem [#allocation2], 12
    %v2507 = vld [vmem:[%s2506] sm:$0xf]
    %v2508 = vpack.c.bf16 %v2505, %v2505
    %v2510 = vsel %vm910, %v2508, 0
    %2512 = vmatprep.subr.bf16.mxu0 %v2234
    %2513 = vmatpush1.bf16.msra.mxu0 %v2233
    %2514 = vmatprep.subr.bf16.mxu0 %v2236
    %2515 = vmatpush1.bf16.msra.mxu0 %v2235
    %2516 = vmatprep.subr.bf16.mxu0 %v2238
    %2517 = vmatpush1.bf16.msra.mxu0 %v2237
    %2518 = vmatprep.subr.bf16.mxu0 %v2240
    %2519 = vmatpush1.bf16.msra.mxu0 %v2239
    %2520 = vmatprep.subr.bf16.mxu0 0
    %2521 = vmatpush1.bf16.msra.mxu0 0
    %2522 = vmatprep.subr.bf16.mxu0 0
    %2523 = vmatpush1.bf16.msra.mxu0 0
    %2524 = vmatprep.subr.bf16.mxu0 0
    %2525 = vmatpush1.bf16.msra.mxu0 0
    %2526 = vmatprep.subr.bf16.mxu0 0
    %2527 = vmatpush1.bf16.msra.mxu0 0
    %2528 = vmatprep.subr.bf16.mxu0 0
    %2529 = vmatpush1.bf16.msra.mxu0 0
    %2530 = vmatprep.subr.bf16.mxu0 0
    %2531 = vmatpush1.bf16.msra.mxu0 0
    %2532 = vmatprep.subr.bf16.mxu0 0
    %2533 = vmatpush1.bf16.msra.mxu0 0
    %2534 = vmatprep.subr.bf16.mxu0 0
    %2535 = vmatpush1.bf16.msra.mxu0 0
    %2536 = vmatprep.subr.bf16.mxu0 0
    %2537 = vmatpush1.bf16.msra.mxu0 0
    %2538 = vmatprep.subr.bf16.mxu0 0
    %2539 = vmatpush1.bf16.msra.mxu0 0
    %2540 = vmatprep.subr.bf16.mxu0 0
    %2541 = vmatpush1.bf16.msra.mxu0 0
    %2542 = vmatprep.subr.bf16.mxu0 0
    %2543 = vmatpush1.bf16.msra.mxu0 0
    %2544 = vmatprep.mubr.bf16.mxu0 0
    %2545 = vmatmul.mubr.bf16.gmra.mrb[0].mxu0 %v2510
    %v2546 = vpop.f32.mrb[0].mxu0
    %v2547 = vadd.f32 0.0, %v2546
    %v2548 = vpop.f32.mrb[0].mxu0
    %v2549 = vadd.f32 0.0, %v2548
    %v2550 = vpop.f32.mrb[0].mxu0
    %v2551 = vpop.f32.mrb[0].mxu0
    %2552 = vdwg.mxu0
    %v2555 = vcombine.low %v2547, %v2549
    %v2557 = vunpack.c.l.s4 1983009808
    %v2558 = vunpack.c.0.s8 %v2557
    %v2559 = vlaneseq
    %v2560 = vshrl.u32 %v2559, 7
    %v2561 = vsub.s32 %v2558, %v2560
    %v2562 = vrot.slane %v2555, %v2561
    %v2564 = vadd.f32 %v2507, %v2562
    %v2565 = vxor.u32 %v2564, 2147483648
    %v2566 = vmul.f32 %v2565, 1.442695
    %v2567 = vpow.pop %v2566
    %v2568 = vadd.f32 %v2567, 1.0
    %v2569 = vrcp.pop %v2568
    %v2570 = vmul.f32 1.0, %v2569
    %v2572 = vrot.slane %v2564, 2
    %v2574 = vtanh.pop %v2572
    %v2575 = vmul.f32 %v2570, %v2496
    %2577 = vrot.lane.b32.xlu0 %v2574, 64
    %v2578 = vpop.permute.xlu0 %2577
    %v2580 = vmul.f32 %v2570, %v2578
    %2582 = vrot.lane.b32.xlu0 %v2580, 64
    %v2583 = vpop.permute.xlu0 %2582
    %v2585 = vadd.f32 %v2575, %v2583
    %v2586 = vtanh.pop %v2585
    %v2588 = vrot.slane %v2570, 2
    %2591 = vrot.lane.b32.xlu0 %v2586, 64
    %v2592 = vpop.permute.xlu0 %2591
    %v2594 = vmul.f32 %v2588, %v2592
    %s2595 = scalar_lea.vmem [#allocation2], 16
    %v2596 = vld [vmem:[%s2595] sm:$0xf]
    %v2597 = vpack.c.bf16 %v2594, %v2594
    %v2599 = vsel %vm910, %v2597, 0
    %2601 = vmatprep.subr.bf16.mxu0 %v2234
    %2602 = vmatpush1.bf16.msra.mxu0 %v2233
    %2603 = vmatprep.subr.bf16.mxu0 %v2236
    %2604 = vmatpush1.bf16.msra.mxu0 %v2235
    %2605 = vmatprep.subr.bf16.mxu0 %v2238
    %2606 = vmatpush1.bf16.msra.mxu0 %v2237
    %2607 = vmatprep.subr.bf16.mxu0 %v2240
    %2608 = vmatpush1.bf16.msra.mxu0 %v2239
    %2609 = vmatprep.subr.bf16.mxu0 0
    %2610 = vmatpush1.bf16.msra.mxu0 0
    %2611 = vmatprep.subr.bf16.mxu0 0
    %2612 = vmatpush1.bf16.msra.mxu0 0
    %2613 = vmatprep.subr.bf16.mxu0 0
    %2614 = vmatpush1.bf16.msra.mxu0 0
    %2615 = vmatprep.subr.bf16.mxu0 0
    %2616 = vmatpush1.bf16.msra.mxu0 0
    %2617 = vmatprep.subr.bf16.mxu0 0
    %2618 = vmatpush1.bf16.msra.mxu0 0
    %2619 = vmatprep.subr.bf16.mxu0 0
    %2620 = vmatpush1.bf16.msra.mxu0 0
    %2621 = vmatprep.subr.bf16.mxu0 0
    %2622 = vmatpush1.bf16.msra.mxu0 0
    %2623 = vmatprep.subr.bf16.mxu0 0
    %2624 = vmatpush1.bf16.msra.mxu0 0
    %2625 = vmatprep.subr.bf16.mxu0 0
    %2626 = vmatpush1.bf16.msra.mxu0 0
    %2627 = vmatprep.subr.bf16.mxu0 0
    %2628 = vmatpush1.bf16.msra.mxu0 0
    %2629 = vmatprep.subr.bf16.mxu0 0
    %2630 = vmatpush1.bf16.msra.mxu0 0
    %2631 = vmatprep.subr.bf16.mxu0 0
    %2632 = vmatpush1.bf16.msra.mxu0 0
    %2633 = vmatprep.mubr.bf16.mxu0 0
    %2634 = vmatmul.mubr.bf16.gmra.mrb[0].mxu0 %v2599
    %v2635 = vpop.f32.mrb[0].mxu0
    %v2636 = vadd.f32 0.0, %v2635
    %v2637 = vpop.f32.mrb[0].mxu0
    %v2638 = vadd.f32 0.0, %v2637
    %v2639 = vpop.f32.mrb[0].mxu0
    %v2640 = vpop.f32.mrb[0].mxu0
    %2641 = vdwg.mxu0
    %v2644 = vcombine.low %v2636, %v2638
    %v2646 = vunpack.c.l.s4 1983009808
    %v2647 = vunpack.c.0.s8 %v2646
    %v2648 = vlaneseq
    %v2649 = vshrl.u32 %v2648, 7
    %v2650 = vsub.s32 %v2647, %v2649
    %v2651 = vrot.slane %v2644, %v2650
    %v2653 = vadd.f32 %v2596, %v2651
    %v2654 = vxor.u32 %v2653, 2147483648
    %v2655 = vmul.f32 %v2654, 1.442695
    %v2656 = vpow.pop %v2655
    %v2657 = vadd.f32 %v2656, 1.0
    %v2658 = vrcp.pop %v2657
    %v2659 = vmul.f32 1.0, %v2658
    %v2661 = vrot.slane %v2653, 2
    %v2663 = vtanh.pop %v2661
    %v2664 = vmul.f32 %v2659, %v2585
    %2666 = vrot.lane.b32.xlu0 %v2663, 64
    %v2667 = vpop.permute.xlu0 %2666
    %v2669 = vmul.f32 %v2659, %v2667
    %2671 = vrot.lane.b32.xlu0 %v2669, 64
    %v2672 = vpop.permute.xlu0 %2671
    %v2674 = vadd.f32 %v2664, %v2672
    %v2675 = vtanh.pop %v2674
    %v2677 = vrot.slane %v2659, 2
    %2680 = vrot.lane.b32.xlu0 %v2675, 64
    %v2681 = vpop.permute.xlu0 %2680
    %v2683 = vmul.f32 %v2677, %v2681
    %s2684 = scalar_lea.vmem [#allocation2], 20
    %v2685 = vld [vmem:[%s2684] sm:$0xf]
    %v2686 = vpack.c.bf16 %v2683, %v2683
    %v2688 = vsel %vm910, %v2686, 0
    %2690 = vmatprep.subr.bf16.mxu0 %v2234
    %2691 = vmatpush1.bf16.msra.mxu0 %v2233
    %2692 = vmatprep.subr.bf16.mxu0 %v2236
    %2693 = vmatpush1.bf16.msra.mxu0 %v2235
    %2694 = vmatprep.subr.bf16.mxu0 %v2238
    %2695 = vmatpush1.bf16.msra.mxu0 %v2237
    %2696 = vmatprep.subr.bf16.mxu0 %v2240
    %2697 = vmatpush1.bf16.msra.mxu0 %v2239
    %2698 = vmatprep.subr.bf16.mxu0 0
    %2699 = vmatpush1.bf16.msra.mxu0 0
    %2700 = vmatprep.subr.bf16.mxu0 0
    %2701 = vmatpush1.bf16.msra.mxu0 0
    %2702 = vmatprep.subr.bf16.mxu0 0
    %2703 = vmatpush1.bf16.msra.mxu0 0
    %2704 = vmatprep.subr.bf16.mxu0 0
    %2705 = vmatpush1.bf16.msra.mxu0 0
    %2706 = vmatprep.subr.bf16.mxu0 0
    %2707 = vmatpush1.bf16.msra.mxu0 0
    %2708 = vmatprep.subr.bf16.mxu0 0
    %2709 = vmatpush1.bf16.msra.mxu0 0
    %2710 = vmatprep.subr.bf16.mxu0 0
    %2711 = vmatpush1.bf16.msra.mxu0 0
    %2712 = vmatprep.subr.bf16.mxu0 0
    %2713 = vmatpush1.bf16.msra.mxu0 0
    %2714 = vmatprep.subr.bf16.mxu0 0
    %2715 = vmatpush1.bf16.msra.mxu0 0
    %2716 = vmatprep.subr.bf16.mxu0 0
    %2717 = vmatpush1.bf16.msra.mxu0 0
    %2718 = vmatprep.subr.bf16.mxu0 0
    %2719 = vmatpush1.bf16.msra.mxu0 0
    %2720 = vmatprep.subr.bf16.mxu0 0
    %2721 = vmatpush1.bf16.msra.mxu0 0
    %2722 = vmatprep.mubr.bf16.mxu0 0
    %2723 = vmatmul.mubr.bf16.gmra.mrb[0].mxu0 %v2688
    %v2724 = vpop.f32.mrb[0].mxu0
    %v2725 = vadd.f32 0.0, %v2724
    %v2726 = vpop.f32.mrb[0].mxu0
    %v2727 = vadd.f32 0.0, %v2726
    %v2728 = vpop.f32.mrb[0].mxu0
    %v2729 = vpop.f32.mrb[0].mxu0
    %2730 = vdwg.mxu0
    %v2733 = vcombine.low %v2725, %v2727
    %v2735 = vunpack.c.l.s4 1983009808
    %v2736 = vunpack.c.0.s8 %v2735
    %v2737 = vlaneseq
    %v2738 = vshrl.u32 %v2737, 7
    %v2739 = vsub.s32 %v2736, %v2738
    %v2740 = vrot.slane %v2733, %v2739
    %v2742 = vadd.f32 %v2685, %v2740
    %v2743 = vxor.u32 %v2742, 2147483648
    %v2744 = vmul.f32 %v2743, 1.442695
    %v2745 = vpow.pop %v2744
    %v2746 = vadd.f32 %v2745, 1.0
    %v2747 = vrcp.pop %v2746
    %v2748 = vmul.f32 1.0, %v2747
    %v2750 = vrot.slane %v2742, 2
    %v2752 = vtanh.pop %v2750
    %v2753 = vmul.f32 %v2748, %v2674
    %2755 = vrot.lane.b32.xlu0 %v2752, 64
    %v2756 = vpop.permute.xlu0 %2755
    %v2758 = vmul.f32 %v2748, %v2756
    %2760 = vrot.lane.b32.xlu0 %v2758, 64
    %v2761 = vpop.permute.xlu0 %2760
    %v2763 = vadd.f32 %v2753, %v2761
    %v2764 = vtanh.pop %v2763
    %v2766 = vrot.slane %v2748, 2
    %2769 = vrot.lane.b32.xlu0 %v2764, 64
    %v2770 = vpop.permute.xlu0 %2769
    %v2772 = vmul.f32 %v2766, %v2770
    %s2773 = scalar_lea.vmem [#allocation2], 24
    %v2774 = vld [vmem:[%s2773] sm:$0xf]
    %v2775 = vpack.c.bf16 %v2772, %v2772
    %v2777 = vsel %vm910, %v2775, 0
    %2779 = vmatprep.subr.bf16.mxu0 %v2234
    %2780 = vmatpush1.bf16.msra.mxu0 %v2233
    %2781 = vmatprep.subr.bf16.mxu0 %v2236
    %2782 = vmatpush1.bf16.msra.mxu0 %v2235
    %2783 = vmatprep.subr.bf16.mxu0 %v2238
    %2784 = vmatpush1.bf16.msra.mxu0 %v2237
    %2785 = vmatprep.subr.bf16.mxu0 %v2240
    %2786 = vmatpush1.bf16.msra.mxu0 %v2239
    %2787 = vmatprep.subr.bf16.mxu0 0
    %2788 = vmatpush1.bf16.msra.mxu0 0
    %2789 = vmatprep.subr.bf16.mxu0 0
    %2790 = vmatpush1.bf16.msra.mxu0 0
    %2791 = vmatprep.subr.bf16.mxu0 0
    %2792 = vmatpush1.bf16.msra.mxu0 0
    %2793 = vmatprep.subr.bf16.mxu0 0
    %2794 = vmatpush1.bf16.msra.mxu0 0
    %2795 = vmatprep.subr.bf16.mxu0 0
    %2796 = vmatpush1.bf16.msra.mxu0 0
    %2797 = vmatprep.subr.bf16.mxu0 0
    %2798 = vmatpush1.bf16.msra.mxu0 0
    %2799 = vmatprep.subr.bf16.mxu0 0
    %2800 = vmatpush1.bf16.msra.mxu0 0
    %2801 = vmatprep.subr.bf16.mxu0 0
    %2802 = vmatpush1.bf16.msra.mxu0 0
    %2803 = vmatprep.subr.bf16.mxu0 0
    %2804 = vmatpush1.bf16.msra.mxu0 0
    %2805 = vmatprep.subr.bf16.mxu0 0
    %2806 = vmatpush1.bf16.msra.mxu0 0
    %2807 = vmatprep.subr.bf16.mxu0 0
    %2808 = vmatpush1.bf16.msra.mxu0 0
    %2809 = vmatprep.subr.bf16.mxu0 0
    %2810 = vmatpush1.bf16.msra.mxu0 0
    %2811 = vmatprep.mubr.bf16.mxu0 0
    %2812 = vmatmul.mubr.bf16.gmra.mrb[0].mxu0 %v2777
    %v2813 = vpop.f32.mrb[0].mxu0
    %v2814 = vadd.f32 0.0, %v2813
    %v2815 = vpop.f32.mrb[0].mxu0
    %v2816 = vadd.f32 0.0, %v2815
    %v2817 = vpop.f32.mrb[0].mxu0
    %v2818 = vpop.f32.mrb[0].mxu0
    %2819 = vdwg.mxu0
    %v2822 = vcombine.low %v2814, %v2816
    %v2824 = vunpack.c.l.s4 1983009808
    %v2825 = vunpack.c.0.s8 %v2824
    %v2826 = vlaneseq
    %v2827 = vshrl.u32 %v2826, 7
    %v2828 = vsub.s32 %v2825, %v2827
    %v2829 = vrot.slane %v2822, %v2828
    %v2831 = vadd.f32 %v2774, %v2829
    %v2832 = vxor.u32 %v2831, 2147483648
    %v2833 = vmul.f32 %v2832, 1.442695
    %v2834 = vpow.pop %v2833
    %v2835 = vadd.f32 %v2834, 1.0
    %v2836 = vrcp.pop %v2835
    %v2837 = vmul.f32 1.0, %v2836
    %v2839 = vrot.slane %v2831, 2
    %v2841 = vtanh.pop %v2839
    %v2842 = vmul.f32 %v2837, %v2763
    %2844 = vrot.lane.b32.xlu0 %v2841, 64
    %v2845 = vpop.permute.xlu0 %2844
    %v2847 = vmul.f32 %v2837, %v2845
    %2849 = vrot.lane.b32.xlu0 %v2847, 64
    %v2850 = vpop.permute.xlu0 %2849
    %v2852 = vadd.f32 %v2842, %v2850
    %v2853 = vtanh.pop %v2852
    %v2855 = vrot.slane %v2837, 2
    %2858 = vrot.lane.b32.xlu0 %v2853, 64
    %v2859 = vpop.permute.xlu0 %2858
    %v2861 = vmul.f32 %v2855, %v2859
    %s2862 = scalar_lea.vmem [#allocation2], 28
    %v2863 = vld [vmem:[%s2862] sm:$0xf]
    %v2864 = vpack.c.bf16 %v2861, %v2861
    %v2866 = vsel %vm910, %v2864, 0
    %2868 = vmatprep.subr.bf16.mxu0 %v2234
    %2869 = vmatpush1.bf16.msra.mxu0 %v2233
    %2870 = vmatprep.subr.bf16.mxu0 %v2236
    %2871 = vmatpush1.bf16.msra.mxu0 %v2235
    %2872 = vmatprep.subr.bf16.mxu0 %v2238
    %2873 = vmatpush1.bf16.msra.mxu0 %v2237
    %2874 = vmatprep.subr.bf16.mxu0 %v2240
    %2875 = vmatpush1.bf16.msra.mxu0 %v2239
    %2876 = vmatprep.subr.bf16.mxu0 0
    %2877 = vmatpush1.bf16.msra.mxu0 0
    %2878 = vmatprep.subr.bf16.mxu0 0
    %2879 = vmatpush1.bf16.msra.mxu0 0
    %2880 = vmatprep.subr.bf16.mxu0 0
    %2881 = vmatpush1.bf16.msra.mxu0 0
    %2882 = vmatprep.subr.bf16.mxu0 0
    %2883 = vmatpush1.bf16.msra.mxu0 0
    %2884 = vmatprep.subr.bf16.mxu0 0
    %2885 = vmatpush1.bf16.msra.mxu0 0
    %2886 = vmatprep.subr.bf16.mxu0 0
    %2887 = vmatpush1.bf16.msra.mxu0 0
    %2888 = vmatprep.subr.bf16.mxu0 0
    %2889 = vmatpush1.bf16.msra.mxu0 0
    %2890 = vmatprep.subr.bf16.mxu0 0
    %2891 = vmatpush1.bf16.msra.mxu0 0
    %2892 = vmatprep.subr.bf16.mxu0 0
    %2893 = vmatpush1.bf16.msra.mxu0 0
    %2894 = vmatprep.subr.bf16.mxu0 0
    %2895 = vmatpush1.bf16.msra.mxu0 0
    %2896 = vmatprep.subr.bf16.mxu0 0
    %2897 = vmatpush1.bf16.msra.mxu0 0
    %2898 = vmatprep.subr.bf16.mxu0 0
    %2899 = vmatpush1.bf16.msra.mxu0 0
    %2900 = vmatprep.mubr.bf16.mxu0 0
    %2901 = vmatmul.mubr.bf16.gmra.mrb[0].mxu0 %v2866
    %v2902 = vpop.f32.mrb[0].mxu0
    %v2903 = vadd.f32 0.0, %v2902
    %v2904 = vpop.f32.mrb[0].mxu0
    %v2905 = vadd.f32 0.0, %v2904
    %v2906 = vpop.f32.mrb[0].mxu0
    %v2907 = vpop.f32.mrb[0].mxu0
    %2908 = vdwg.mxu0
    %v2911 = vcombine.low %v2903, %v2905
    %v2913 = vunpack.c.l.s4 1983009808
    %v2914 = vunpack.c.0.s8 %v2913
    %v2915 = vlaneseq
    %v2916 = vshrl.u32 %v2915, 7
    %v2917 = vsub.s32 %v2914, %v2916
    %v2918 = vrot.slane %v2911, %v2917
    %v2920 = vadd.f32 %v2863, %v2918
    %v2921 = vxor.u32 %v2920, 2147483648
    %v2922 = vmul.f32 %v2921, 1.442695
    %v2923 = vpow.pop %v2922
    %v2924 = vadd.f32 %v2923, 1.0
    %v2925 = vrcp.pop %v2924
    %v2926 = vmul.f32 1.0, %v2925
    %v2928 = vrot.slane %v2920, 2
    %v2930 = vtanh.pop %v2928
    %v2931 = vmul.f32 %v2926, %v2852
    %2933 = vrot.lane.b32.xlu0 %v2930, 64
    %v2934 = vpop.permute.xlu0 %2933
    %v2936 = vmul.f32 %v2926, %v2934
    %2938 = vrot.lane.b32.xlu0 %v2936, 64
    %v2939 = vpop.permute.xlu0 %2938
    %v2941 = vadd.f32 %v2931, %v2939
    %v2942 = vtanh.pop %v2941
    %v2944 = vrot.slane %v2926, 2
    %2947 = vrot.lane.b32.xlu0 %v2942, 64
    %v2948 = vpop.permute.xlu0 %2947
    %v2950 = vmul.f32 %v2944, %v2948
    %s2951 = scalar_lea.vmem [#allocation2], 32
    %v2952 = vld [vmem:[%s2951] sm:$0xf]
    %v2953 = vpack.c.bf16 %v2950, %v2950
    %v2955 = vsel %vm910, %v2953, 0
    %2957 = vmatprep.subr.bf16.mxu0 %v2234
    %2958 = vmatpush1.bf16.msra.mxu0 %v2233
    %2959 = vmatprep.subr.bf16.mxu0 %v2236
    %2960 = vmatpush1.bf16.msra.mxu0 %v2235
    %2961 = vmatprep.subr.bf16.mxu0 %v2238
    %2962 = vmatpush1.bf16.msra.mxu0 %v2237
    %2963 = vmatprep.subr.bf16.mxu0 %v2240
    %2964 = vmatpush1.bf16.msra.mxu0 %v2239
    %2965 = vmatprep.subr.bf16.mxu0 0
    %2966 = vmatpush1.bf16.msra.mxu0 0
    %2967 = vmatprep.subr.bf16.mxu0 0
    %2968 = vmatpush1.bf16.msra.mxu0 0
    %2969 = vmatprep.subr.bf16.mxu0 0
    %2970 = vmatpush1.bf16.msra.mxu0 0
    %2971 = vmatprep.subr.bf16.mxu0 0
    %2972 = vmatpush1.bf16.msra.mxu0 0
    %2973 = vmatprep.subr.bf16.mxu0 0
    %2974 = vmatpush1.bf16.msra.mxu0 0
    %2975 = vmatprep.subr.bf16.mxu0 0
    %2976 = vmatpush1.bf16.msra.mxu0 0
    %2977 = vmatprep.subr.bf16.mxu0 0
    %2978 = vmatpush1.bf16.msra.mxu0 0
    %2979 = vmatprep.subr.bf16.mxu0 0
    %2980 = vmatpush1.bf16.msra.mxu0 0
    %2981 = vmatprep.subr.bf16.mxu0 0
    %2982 = vmatpush1.bf16.msra.mxu0 0
    %2983 = vmatprep.subr.bf16.mxu0 0
    %2984 = vmatpush1.bf16.msra.mxu0 0
    %2985 = vmatprep.subr.bf16.mxu0 0
    %2986 = vmatpush1.bf16.msra.mxu0 0
    %2987 = vmatprep.subr.bf16.mxu0 0
    %2988 = vmatpush1.bf16.msra.mxu0 0
    %2989 = vmatprep.mubr.bf16.mxu0 0
    %2990 = vmatmul.mubr.bf16.gmra.mrb[0].mxu0 %v2955
    %v2991 = vpop.f32.mrb[0].mxu0
    %v2992 = vadd.f32 0.0, %v2991
    %v2993 = vpop.f32.mrb[0].mxu0
    %v2994 = vadd.f32 0.0, %v2993
    %v2995 = vpop.f32.mrb[0].mxu0
    %v2996 = vpop.f32.mrb[0].mxu0
    %2997 = vdwg.mxu0
    %v3000 = vcombine.low %v2992, %v2994
    %v3002 = vunpack.c.l.s4 1983009808
    %v3003 = vunpack.c.0.s8 %v3002
    %v3004 = vlaneseq
    %v3005 = vshrl.u32 %v3004, 7
    %v3006 = vsub.s32 %v3003, %v3005
    %v3007 = vrot.slane %v3000, %v3006
    %v3009 = vadd.f32 %v2952, %v3007
    %v3010 = vxor.u32 %v3009, 2147483648
    %v3011 = vmul.f32 %v3010, 1.442695
    %v3012 = vpow.pop %v3011
    %v3013 = vadd.f32 %v3012, 1.0
    %v3014 = vrcp.pop %v3013
    %v3015 = vmul.f32 1.0, %v3014
    %v3017 = vrot.slane %v3009, 2
    %v3019 = vtanh.pop %v3017
    %v3020 = vmul.f32 %v3015, %v2941
    %3022 = vrot.lane.b32.xlu0 %v3019, 64
    %v3023 = vpop.permute.xlu0 %3022
    %v3025 = vmul.f32 %v3015, %v3023
    %3027 = vrot.lane.b32.xlu0 %v3025, 64
    %v3028 = vpop.permute.xlu0 %3027
    %v3030 = vadd.f32 %v3020, %v3028
    %v3031 = vtanh.pop %v3030
    %v3033 = vrot.slane %v3015, 2
    %3036 = vrot.lane.b32.xlu0 %v3031, 64
    %v3037 = vpop.permute.xlu0 %3036
    %v3039 = vmul.f32 %v3033, %v3037
    %s3040 = scalar_lea.vmem [#allocation2], 36
    %v3041 = vld [vmem:[%s3040] sm:$0xf]
    %v3042 = vpack.c.bf16 %v3039, %v3039
    %v3044 = vsel %vm910, %v3042, 0
    %3046 = vmatprep.subr.bf16.mxu0 %v2234
    %3047 = vmatpush1.bf16.msra.mxu0 %v2233
    %3048 = vmatprep.subr.bf16.mxu0 %v2236
    %3049 = vmatpush1.bf16.msra.mxu0 %v2235
    %3050 = vmatprep.subr.bf16.mxu0 %v2238
    %3051 = vmatpush1.bf16.msra.mxu0 %v2237
    %3052 = vmatprep.subr.bf16.mxu0 %v2240
    %3053 = vmatpush1.bf16.msra.mxu0 %v2239
    %3054 = vmatprep.subr.bf16.mxu0 0
    %3055 = vmatpush1.bf16.msra.mxu0 0
    %3056 = vmatprep.subr.bf16.mxu0 0
    %3057 = vmatpush1.bf16.msra.mxu0 0
    %3058 = vmatprep.subr.bf16.mxu0 0
    %3059 = vmatpush1.bf16.msra.mxu0 0
    %3060 = vmatprep.subr.bf16.mxu0 0
    %3061 = vmatpush1.bf16.msra.mxu0 0
    %3062 = vmatprep.subr.bf16.mxu0 0
    %3063 = vmatpush1.bf16.msra.mxu0 0
    %3064 = vmatprep.subr.bf16.mxu0 0
    %3065 = vmatpush1.bf16.msra.mxu0 0
    %3066 = vmatprep.subr.bf16.mxu0 0
    %3067 = vmatpush1.bf16.msra.mxu0 0
    %3068 = vmatprep.subr.bf16.mxu0 0
    %3069 = vmatpush1.bf16.msra.mxu0 0
    %3070 = vmatprep.subr.bf16.mxu0 0
    %3071 = vmatpush1.bf16.msra.mxu0 0
    %3072 = vmatprep.subr.bf16.mxu0 0
    %3073 = vmatpush1.bf16.msra.mxu0 0
    %3074 = vmatprep.subr.bf16.mxu0 0
    %3075 = vmatpush1.bf16.msra.mxu0 0
    %3076 = vmatprep.subr.bf16.mxu0 0
    %3077 = vmatpush1.bf16.msra.mxu0 0
    %3078 = vmatprep.mubr.bf16.mxu0 0
    %3079 = vmatmul.mubr.bf16.gmra.mrb[0].mxu0 %v3044
    %v3080 = vpop.f32.mrb[0].mxu0
    %v3081 = vadd.f32 0.0, %v3080
    %v3082 = vpop.f32.mrb[0].mxu0
    %v3083 = vadd.f32 0.0, %v3082
    %v3084 = vpop.f32.mrb[0].mxu0
    %v3085 = vpop.f32.mrb[0].mxu0
    %3086 = vdwg.mxu0
    %v3089 = vcombine.low %v3081, %v3083
    %v3091 = vunpack.c.l.s4 1983009808
    %v3092 = vunpack.c.0.s8 %v3091
    %v3093 = vlaneseq
    %v3094 = vshrl.u32 %v3093, 7
    %v3095 = vsub.s32 %v3092, %v3094
    %v3096 = vrot.slane %v3089, %v3095
    %v3098 = vadd.f32 %v3041, %v3096
    %v3099 = vxor.u32 %v3098, 2147483648
    %v3100 = vmul.f32 %v3099, 1.442695
    %v3101 = vpow.pop %v3100
    %v3102 = vadd.f32 %v3101, 1.0
    %v3103 = vrcp.pop %v3102
    %v3104 = vmul.f32 1.0, %v3103
    %v3106 = vrot.slane %v3098, 2
    %v3108 = vtanh.pop %v3106
    %v3109 = vmul.f32 %v3104, %v3030
    %3111 = vrot.lane.b32.xlu0 %v3108, 64
    %v3112 = vpop.permute.xlu0 %3111
    %v3114 = vmul.f32 %v3104, %v3112
    %3116 = vrot.lane.b32.xlu0 %v3114, 64
    %v3117 = vpop.permute.xlu0 %3116
    %v3119 = vadd.f32 %v3109, %v3117
    %v3120 = vtanh.pop %v3119
    %v3122 = vrot.slane %v3104, 2
    %3125 = vrot.lane.b32.xlu0 %v3120, 64
    %v3126 = vpop.permute.xlu0 %3125
    %v3128 = vmul.f32 %v3122, %v3126
    %s3129 = scalar_lea.vmem [#allocation2], 40
    %v3130 = vld [vmem:[%s3129] sm:$0xf]
    %v3131 = vpack.c.bf16 %v3128, %v3128
    %v3133 = vsel %vm910, %v3131, 0
    %3135 = vmatprep.subr.bf16.mxu0 %v2234
    %3136 = vmatpush1.bf16.msra.mxu0 %v2233
    %3137 = vmatprep.subr.bf16.mxu0 %v2236
    %3138 = vmatpush1.bf16.msra.mxu0 %v2235
    %3139 = vmatprep.subr.bf16.mxu0 %v2238
    %3140 = vmatpush1.bf16.msra.mxu0 %v2237
    %3141 = vmatprep.subr.bf16.mxu0 %v2240
    %3142 = vmatpush1.bf16.msra.mxu0 %v2239
    %3143 = vmatprep.subr.bf16.mxu0 0
    %3144 = vmatpush1.bf16.msra.mxu0 0
    %3145 = vmatprep.subr.bf16.mxu0 0
    %3146 = vmatpush1.bf16.msra.mxu0 0
    %3147 = vmatprep.subr.bf16.mxu0 0
    %3148 = vmatpush1.bf16.msra.mxu0 0
    %3149 = vmatprep.subr.bf16.mxu0 0
    %3150 = vmatpush1.bf16.msra.mxu0 0
    %3151 = vmatprep.subr.bf16.mxu0 0
    %3152 = vmatpush1.bf16.msra.mxu0 0
    %3153 = vmatprep.subr.bf16.mxu0 0
    %3154 = vmatpush1.bf16.msra.mxu0 0
    %3155 = vmatprep.subr.bf16.mxu0 0
    %3156 = vmatpush1.bf16.msra.mxu0 0
    %3157 = vmatprep.subr.bf16.mxu0 0
    %3158 = vmatpush1.bf16.msra.mxu0 0
    %3159 = vmatprep.subr.bf16.mxu0 0
    %3160 = vmatpush1.bf16.msra.mxu0 0
    %3161 = vmatprep.subr.bf16.mxu0 0
    %3162 = vmatpush1.bf16.msra.mxu0 0
    %3163 = vmatprep.subr.bf16.mxu0 0
    %3164 = vmatpush1.bf16.msra.mxu0 0
    %3165 = vmatprep.subr.bf16.mxu0 0
    %3166 = vmatpush1.bf16.msra.mxu0 0
    %3167 = vmatprep.mubr.bf16.mxu0 0
    %3168 = vmatmul.mubr.bf16.gmra.mrb[0].mxu0 %v3133
    %v3169 = vpop.f32.mrb[0].mxu0
    %v3170 = vadd.f32 0.0, %v3169
    %v3171 = vpop.f32.mrb[0].mxu0
    %v3172 = vadd.f32 0.0, %v3171
    %v3173 = vpop.f32.mrb[0].mxu0
    %v3174 = vpop.f32.mrb[0].mxu0
    %3175 = vdwg.mxu0
    %v3178 = vcombine.low %v3170, %v3172
    %v3180 = vunpack.c.l.s4 1983009808
    %v3181 = vunpack.c.0.s8 %v3180
    %v3182 = vlaneseq
    %v3183 = vshrl.u32 %v3182, 7
    %v3184 = vsub.s32 %v3181, %v3183
    %v3185 = vrot.slane %v3178, %v3184
    %v3187 = vadd.f32 %v3130, %v3185
    %v3188 = vxor.u32 %v3187, 2147483648
    %v3189 = vmul.f32 %v3188, 1.442695
    %v3190 = vpow.pop %v3189
    %v3191 = vadd.f32 %v3190, 1.0
    %v3192 = vrcp.pop %v3191
    %v3193 = vmul.f32 1.0, %v3192
    %v3195 = vrot.slane %v3187, 2
    %v3197 = vtanh.pop %v3195
    %v3198 = vmul.f32 %v3193, %v3119
    %3200 = vrot.lane.b32.xlu0 %v3197, 64
    %v3201 = vpop.permute.xlu0 %3200
    %v3203 = vmul.f32 %v3193, %v3201
    %3205 = vrot.lane.b32.xlu0 %v3203, 64
    %v3206 = vpop.permute.xlu0 %3205
    %v3208 = vadd.f32 %v3198, %v3206
    %v3209 = vtanh.pop %v3208
    %v3211 = vrot.slane %v3193, 2
    %3214 = vrot.lane.b32.xlu0 %v3209, 64
    %v3215 = vpop.permute.xlu0 %3214
    %v3217 = vmul.f32 %v3211, %v3215
    %s3218 = scalar_lea.vmem [#allocation2], 44
    %v3219 = vld [vmem:[%s3218] sm:$0xf]
    %v3220 = vpack.c.bf16 %v3217, %v3217
    %v3222 = vsel %vm910, %v3220, 0
    %3224 = vmatprep.subr.bf16.mxu0 %v2234
    %3225 = vmatpush1.bf16.msra.mxu0 %v2233
    %3226 = vmatprep.subr.bf16.mxu0 %v2236
    %3227 = vmatpush1.bf16.msra.mxu0 %v2235
    %3228 = vmatprep.subr.bf16.mxu0 %v2238
    %3229 = vmatpush1.bf16.msra.mxu0 %v2237
    %3230 = vmatprep.subr.bf16.mxu0 %v2240
    %3231 = vmatpush1.bf16.msra.mxu0 %v2239
    %3232 = vmatprep.subr.bf16.mxu0 0
    %3233 = vmatpush1.bf16.msra.mxu0 0
    %3234 = vmatprep.subr.bf16.mxu0 0
    %3235 = vmatpush1.bf16.msra.mxu0 0
    %3236 = vmatprep.subr.bf16.mxu0 0
    %3237 = vmatpush1.bf16.msra.mxu0 0
    %3238 = vmatprep.subr.bf16.mxu0 0
    %3239 = vmatpush1.bf16.msra.mxu0 0
    %3240 = vmatprep.subr.bf16.mxu0 0
    %3241 = vmatpush1.bf16.msra.mxu0 0
    %3242 = vmatprep.subr.bf16.mxu0 0
    %3243 = vmatpush1.bf16.msra.mxu0 0
    %3244 = vmatprep.subr.bf16.mxu0 0
    %3245 = vmatpush1.bf16.msra.mxu0 0
    %3246 = vmatprep.subr.bf16.mxu0 0
    %3247 = vmatpush1.bf16.msra.mxu0 0
    %3248 = vmatprep.subr.bf16.mxu0 0
    %3249 = vmatpush1.bf16.msra.mxu0 0
    %3250 = vmatprep.subr.bf16.mxu0 0
    %3251 = vmatpush1.bf16.msra.mxu0 0
    %3252 = vmatprep.subr.bf16.mxu0 0
    %3253 = vmatpush1.bf16.msra.mxu0 0
    %3254 = vmatprep.subr.bf16.mxu0 0
    %3255 = vmatpush1.bf16.msra.mxu0 0
    %3256 = vmatprep.mubr.bf16.mxu0 0
    %3257 = vmatmul.mubr.bf16.gmra.mrb[0].mxu0 %v3222
    %v3258 = vpop.f32.mrb[0].mxu0
    %v3259 = vadd.f32 0.0, %v3258
    %v3260 = vpop.f32.mrb[0].mxu0
    %v3261 = vadd.f32 0.0, %v3260
    %v3262 = vpop.f32.mrb[0].mxu0
    %v3263 = vpop.f32.mrb[0].mxu0
    %3264 = vdwg.mxu0
    %v3267 = vcombine.low %v3259, %v3261
    %v3269 = vunpack.c.l.s4 1983009808
    %v3270 = vunpack.c.0.s8 %v3269
    %v3271 = vlaneseq
    %v3272 = vshrl.u32 %v3271, 7
    %v3273 = vsub.s32 %v3270, %v3272
    %v3274 = vrot.slane %v3267, %v3273
    %v3276 = vadd.f32 %v3219, %v3274
    %v3277 = vxor.u32 %v3276, 2147483648
    %v3278 = vmul.f32 %v3277, 1.442695
    %v3279 = vpow.pop %v3278
    %v3280 = vadd.f32 %v3279, 1.0
    %v3281 = vrcp.pop %v3280
    %v3282 = vmul.f32 1.0, %v3281
    %v3284 = vrot.slane %v3276, 2
    %v3286 = vtanh.pop %v3284
    %v3287 = vmul.f32 %v3282, %v3208
    %3289 = vrot.lane.b32.xlu0 %v3286, 64
    %v3290 = vpop.permute.xlu0 %3289
    %v3292 = vmul.f32 %v3282, %v3290
    %3294 = vrot.lane.b32.xlu0 %v3292, 64
    %v3295 = vpop.permute.xlu0 %3294
    %v3297 = vadd.f32 %v3287, %v3295
    %v3298 = vtanh.pop %v3297
    %v3300 = vrot.slane %v3282, 2
    %3303 = vrot.lane.b32.xlu0 %v3298, 64
    %v3304 = vpop.permute.xlu0 %3303
    %v3306 = vmul.f32 %v3300, %v3304
    %v3307 = vpack.c.bf16 %v3306, %v3306
    %v3308 = vld [vmem:[%s8] sm:$0xff]
    %v3309 = vld [vmem:[%s8 + $0x8] sm:$0xff]
    %v3310 = vld [vmem:[%s8 + $0x10] sm:$0xff]
    %v3311 = vld [vmem:[%s8 + $0x18] sm:$0xff]
    %v3312 = vld [vmem:[%s8 + $0x20] sm:$0xff]
    %v3313 = vld [vmem:[%s8 + $0x28] sm:$0xff]
    %v3314 = vld [vmem:[%s8 + $0x30] sm:$0xff]
    %v3315 = vld [vmem:[%s8 + $0x38] sm:$0xff]
    %v3316 = vpack.c.bf16 %v3309, %v3308
    %v3317 = vpack.c.bf16 %v3311, %v3310
    %v3318 = vpack.c.bf16 %v3313, %v3312
    %v3319 = vpack.c.bf16 %v3315, %v3314
    %v3320 = vld [vmem:[%s9] sm:$0x1]
    %v3322 = vlaneseq
    %v3323 = vshrl.u32 %v3322, 7
    %v3324 = vsub.s32 0, %v3323
    %v3325 = vrot.slane %v3320, %v3324
    %v3328 = vsel %vm910, %v3307, 0
    %3330 = vmatprep.subr.bf16.mxu0 0
    %3331 = vmatpush1.bf16.msra.mxu0 %v3316
    %3332 = vmatprep.subr.bf16.mxu0 0
    %3333 = vmatpush1.bf16.msra.mxu0 %v3317
    %3334 = vmatprep.subr.bf16.mxu0 0
    %3335 = vmatpush1.bf16.msra.mxu0 %v3318
    %3336 = vmatprep.subr.bf16.mxu0 0
    %3337 = vmatpush1.bf16.msra.mxu0 %v3319
    %3338 = vmatprep.subr.bf16.mxu0 0
    %3339 = vmatpush1.bf16.msra.mxu0 0
    %3340 = vmatprep.subr.bf16.mxu0 0
    %3341 = vmatpush1.bf16.msra.mxu0 0
    %3342 = vmatprep.subr.bf16.mxu0 0
    %3343 = vmatpush1.bf16.msra.mxu0 0
    %3344 = vmatprep.subr.bf16.mxu0 0
    %3345 = vmatpush1.bf16.msra.mxu0 0
    %3346 = vmatprep.subr.bf16.mxu0 0
    %3347 = vmatpush1.bf16.msra.mxu0 0
    %3348 = vmatprep.subr.bf16.mxu0 0
    %3349 = vmatpush1.bf16.msra.mxu0 0
    %3350 = vmatprep.subr.bf16.mxu0 0
    %3351 = vmatpush1.bf16.msra.mxu0 0
    %3352 = vmatprep.subr.bf16.mxu0 0
    %3353 = vmatpush1.bf16.msra.mxu0 0
    %3354 = vmatprep.subr.bf16.mxu0 0
    %3355 = vmatpush1.bf16.msra.mxu0 0
    %3356 = vmatprep.subr.bf16.mxu0 0
    %3357 = vmatpush1.bf16.msra.mxu0 0
    %3358 = vmatprep.subr.bf16.mxu0 0
    %3359 = vmatpush1.bf16.msra.mxu0 0
    %3360 = vmatprep.subr.bf16.mxu0 0
    %3361 = vmatpush1.bf16.msra.mxu0 0
    %3362 = vmatprep.mubr.bf16.mxu0 0
    %3363 = vmatmul.mubr.bf16.gmra.mrb[0].mxu0 %v3328
    %v3364 = vpop.f32.mrb[0].mxu0
    %v3365 = vadd.f32 %v3325, %v3364
    %v3366 = vpop.f32.mrb[0].mxu0
    %v3367 = vpop.f32.mrb[0].mxu0
    %v3368 = vpop.f32.mrb[0].mxu0
    %3369 = vdwg.mxu0
    %vm3370 = vcmask 517120
    %3371 = vst.msk [vmem:[#allocation3] sm:$0x3] %vm3370, %v3365
    // Predicated region
    $region42: #{_lambda_.1} parent=1 // pred_check
      _
    $region43: #{_lambda_.1} parent=1 // pred_check_branch
      %3373 = sbr.rel (0) target = $region45
    $region44: #{_lambda_.1} parent=1 // pred_region
      %s3375 = ssub.s32 32, 32
      %3376 = vsyncadd [#allocation4], %s3375
      %s3378 = sshll.u32 [#allocation3], 4
      %s3379 = int_to_ptr.vmem [resolvable:$true] %s3378
      %3381 = dma.vmem_to_hbm [thread:$0]  %s3379, 32, %s10, [#allocation4]
    $region45: #{_lambda_.1} parent=1 // pred_fallthru
      _
    // Predicated region
    $region46: #{_lambda_.1} parent=1 // pred_check
      _
    $region47: #{_lambda_.1} parent=1 // pred_check_branch
      %3383 = sbr.rel (0) target = $region49
    $region48: #{_lambda_.1} parent=1 // pred_region
      %3384 = dma.done [#allocation4], 32
    $region49: #{_lambda_.1} parent=1 // pred_fallthru
      _
    %3385 = vsyncpa [#allocation4], 1

</llo_original>
